<compile_context>
chip_gen: v6e
topology: v6e:2x2x1
jax: 0.10.0
libtpu: 0.0.40
codegen_flags: <defaults>
</compile_context>

<pallas_src>
import math

import jax
import jax.numpy as jnp
from jax import lax
from jax.experimental import pallas as pl
from jax.experimental.pallas import tpu as pltpu

# Small model hyper-parameters (consistent with Aggregator defaults, scaled down)
D_MODEL = 32
D_FF = 64
HEADS = 4
N_LAYERS = 2
D_HEAD = D_MODEL // HEADS
LN_EPS = 1e-5
NEG_INF = -1e30


def _round_up(x, m):
    return (x + m - 1) // m * m


def _ln_rows(y, gamma, beta):
    """LayerNorm over the feature axis (rows) of a (D, TB) batch-in-lanes tile."""
    mu = jnp.mean(y, axis=0, keepdims=True)
    var = jnp.mean((y - mu) ** 2, axis=0, keepdims=True)
    return (y - mu) * lax.rsqrt(var + LN_EPS) * gamma + beta


def _ln_last(x, gamma, beta):
    """LayerNorm over the last axis (reference / batch-major layout)."""
    mu = jnp.mean(x, axis=-1, keepdims=True)
    var = jnp.mean((x - mu) ** 2, axis=-1, keepdims=True)
    return (x - mu) * lax.rsqrt(var + LN_EPS) * gamma + beta


def aggregator_kernel(x_ref, bias_ref, emb_ref, wkv_ref, bkv_ref, bh_ref,
                      wq_ref, bq_ref, wo_ref, bo_ref,
                      g1_ref, be1_ref, w1_ref, bf1_ref, w2_ref, bf2_ref,
                      g2_ref, be2_ref, out_ref):
    SD, TB = x_ref.shape             # S*D source rows, TB batch columns (lane dim)
    L, D, _ = wq_ref.shape           # layers, d_model
    S = SD // D                      # source sequence length
    f32 = jnp.float32

    # streamed source block: bf16 in HBM/VMEM, upcast once so all math stays f32
    xf = x_ref[...].astype(f32)                                    # (S*D, TB)

    # hoisted small constants
    wkv = wkv_ref[...]                                             # (2*D*L, D)
    bkv = bkv_ref[...]                                             # (2*D*L, 1)
    bh = bh_ref[...]                                               # (D, D) scaled block-diag head matrix

    # additive key-padding bias per source position, broadcast once (hoisted out of loops)
    bias_rows = [jnp.broadcast_to(bias_ref[s], (D, TB)) for s in range(S)]

    # ---- layer-invariant K/V projection, hoisted out of the layer loop and fused
    #      across layers: one (2*D*L, TB) slab per source position ----
    kv = [jnp.dot(wkv, xf[s * D:(s + 1) * D, :],
                  preferred_element_type=f32) + bkv
          for s in range(S)]

    # learned query token broadcast across the batch lanes
    z = jnp.broadcast_to(emb_ref[...], (D, TB))                    # (D, TB)

    for l in range(L):                                             # static unroll over layers
        # ---- Q projection (weights pre-transposed: (out,in) @ (in,TB)) ----
        q = jnp.dot(wq_ref[l], z, preferred_element_type=f32) + bq_ref[l]     # (D, TB)

        ko = 2 * l * D            # layer-l K rows inside each kv slab (sublane-aligned)
        vo = ko + D               # layer-l V rows

        # ---- per-head scores, replicated over each head's channels via the
        #      block-diagonal head matrix (one 32x32 matmul per source position) ----
        sc = [jnp.dot(bh, q * kv[s][ko:ko + D, :], preferred_element_type=f32)
              + bias_rows[s]
              for s in range(S)]                                   # each (D, TB)

        # ---- softmax over source positions; everything stays lane-dense (D, TB) ----
        m = sc[0]
        for t in sc[1:]:
            m = jnp.maximum(m, t)
        p = [jnp.exp(t - m) for t in sc]
        denom = p[0]
        for t in p[1:]:
            denom = denom + t

        ctx = p[0] * kv[0][vo:vo + D, :]
        for s in range(1, S):
            ctx = ctx + p[s] * kv[s][vo:vo + D, :]
        ctx = ctx * pl.reciprocal(denom, approx=True)              # EUP slot

        attn = jnp.dot(wo_ref[l], ctx, preferred_element_type=f32) + bo_ref[l]

        # ---- residual + post-norm; ReLU FFN + residual + post-norm ----
        z = _ln_rows(z + attn, g1_ref[l], be1_ref[l])
        ff = jnp.dot(w1_ref[l], z, preferred_element_type=f32) + bf1_ref[l]
        ff = jnp.maximum(ff, 0.0)
        ff = jnp.dot(w2_ref[l], ff, preferred_element_type=f32) + bf2_ref[l]
        z = _ln_rows(z + ff, g2_ref[l], be2_ref[l])

    out_ref[...] = z                                               # (D, TB) lane-dense store


def aggregator_forward(x_snd, mask_ns, params, max_tb=512):
    """x_snd: (S, N, D) float32 (seq-first, like torch); mask_ns: (N, S) bool (True = keep)."""
    S, N, D = x_snd.shape
    assert D == D_MODEL
    L = params["wq"].shape[0]

    # ---- batch tiling: the batch lives in the LANE dimension (multiples of 128) ----
    N_pad = _round_up(N, 128)
    TB = 128 * math.gcd(N_pad // 128, max(max_tb, 128) // 128)     # divides N_pad exactly
    # keep the grid >= 2 steps when the batch allows it (v7x has 2 TensorCores)
    if TB == N_pad and N_pad >= 256 and (TB // 2) % 128 == 0:
        TB //= 2
    grid = (N_pad // TB,)

    # ---- activations: batch-in-lanes, lane-dense ----
    # x: (S, N, D) -> (S*D, N_pad); streamed as bf16 (halves HBM traffic), math stays f32
    xt = jnp.transpose(x_snd, (0, 2, 1)).reshape(S * D, N)
    xt = jnp.pad(xt, ((0, 0), (0, N_pad - N))).astype(jnp.bfloat16)

    # additive key-padding bias (0 keep / -1e30 drop), lane-dense: (S, 1, N_pad)
    bias = jnp.where(mask_ns, 0.0, NEG_INF).astype(jnp.float32).T          # (S, N)
    bias = jnp.pad(bias, ((0, 0), (0, N_pad - N)))[:, None, :]             # padded batch = valid

    # ---- weights, pre-transposed so every matmul is (out, in) @ (in, TB) ----
    tW = lambda w: jnp.transpose(w, (0, 2, 1))
    wqT, woT = tW(params["wq"]), tW(params["wo"])
    w1T, w2T = tW(params["w1"]), tW(params["w2"])
    bqT, boT = tW(params["bq"]), tW(params["bo"])
    bf1T, bf2T = tW(params["bf1"]), tW(params["bf2"])
    g1T, be1T = tW(params["g1"]), tW(params["be1"])
    g2T, be2T = tW(params["g2"]), tW(params["be2"])
    embT = params["emb"].reshape(D, 1)

    # K and V projections fused across layers: rows [K_0; V_0; K_1; V_1; ...]
    wkvT = jnp.concatenate(
        [jnp.concatenate([params["wk"][l].T, params["wv"][l].T], axis=0) for l in range(L)],
        axis=0)                                                            # (2*D*L, D)
    bkvT = jnp.concatenate(
        [jnp.concatenate([params["bk"][l].T, params["bv"][l].T], axis=0) for l in range(L)],
        axis=0)                                                            # (2*D*L, 1)

    # block-diagonal per-head matrix with the 1/sqrt(d_head) scale folded in:
    # replaces per-head lane slicing / 4-wide selector matmuls with one (D, D) matmul
    bh = jnp.kron(jnp.eye(HEADS, dtype=jnp.float32),
                  jnp.ones((D_HEAD, D_HEAD), jnp.float32)) * (D_HEAD ** -0.5)

    consts = [embT, wkvT, bkvT, bh, wqT, bqT, woT, boT,
              g1T, be1T, w1T, bf1T, w2T, bf2T, g2T, be2T]

    def const_spec(a):
        nd = a.ndim
        # constant index_map -> fetched once; single-buffer to halve their VMEM footprint
        return pl.BlockSpec(a.shape, lambda b, _nd=nd: (0,) * _nd,
                            pipeline_mode=pl.Buffered(1))

    out = pl.pallas_call(
        aggregator_kernel,
        out_shape=jax.ShapeDtypeStruct((D, N_pad), jnp.float32),
        grid=grid,
        in_specs=[pl.BlockSpec((S * D, TB), lambda b: (0, b)),      # source activations (bf16)
                  pl.BlockSpec((S, 1, TB), lambda b: (0, 0, b))]    # key-padding bias (f32)
                 + [const_spec(a) for a in consts],                 # resident weights
        out_specs=pl.BlockSpec((D, TB), lambda b: (0, b)),          # lane-dense output tile
        compiler_params=pltpu.CompilerParams(
            dimension_semantics=("parallel",)),                     # batch axis independent
    )(xt, bias, *consts)
    return out[:, :N].T                                             # (N, D)


def aggregator_reference(x_snd, mask_ns, params):
    """Pure-JAX f32 reference with identical math (unfused weights, exact softmax)."""
    S, N, D = x_snd.shape
    x = jnp.transpose(x_snd, (1, 0, 2)).astype(jnp.float32)         # (N, S, D)
    z = jnp.broadcast_to(params["emb"].reshape(1, 1, D), (N, 1, D))
    scale = 1.0 / (D_HEAD ** 0.5)
    L = params["wq"].shape[0]
    for l in range(L):
        q = z @ params["wq"][l] + params["bq"][l]                   # (N, 1, D)
        k = x @ params["wk"][l] + params["bk"][l]                   # (N, S, D)
        v = x @ params["wv"][l] + params["bv"][l]
        qh = q.reshape(N, 1, HEADS, D_HEAD).transpose(0, 2, 1, 3)
        kh = k.reshape(N, S, HEADS, D_HEAD).transpose(0, 2, 1, 3)
        vh = v.reshape(N, S, HEADS, D_HEAD).transpose(0, 2, 1, 3)
        s = jnp.einsum('nhqd,nhkd->nhqk', qh, kh) * scale
        s = jnp.where(mask_ns[:, None, None, :], s, NEG_INF)
        p = jax.nn.softmax(s, axis=-1)
        o = jnp.einsum('nhqk,nhkd->nhqd', p, vh)
        o = o.transpose(0, 2, 1, 3).reshape(N, 1, D)
        attn = o @ params["wo"][l] + params["bo"][l]
        z = _ln_last(z + attn, params["g1"][l], params["be1"][l])
        ff = jax.nn.relu(z @ params["w1"][l] + params["bf1"][l]) @ params["w2"][l] \
            + params["bf2"][l]
        z = _ln_last(z + ff, params["g2"][l], params["be2"][l])
    return z[:, 0, :]


def init_params(key):
    L, D, F = N_LAYERS, D_MODEL, D_FF
    ks = jax.random.split(key, 7)

    def rnd(k, shape, scale):
        return jax.random.normal(k, shape, jnp.float32) * scale

    return {
        "emb": rnd(ks[0], (1, 1, D), 1.0),          # Parameter(torch.randn(1,1,d_model))
        "wq": rnd(ks[1], (L, D, D), D ** -0.5),
        "wk": rnd(ks[2], (L, D, D), D ** -0.5),
        "wv": rnd(ks[3], (L, D, D), D ** -0.5),
        "wo": rnd(ks[4], (L, D, D), D ** -0.5),
        "bq": jnp.zeros((L, 1, D), jnp.float32),
        "bk": jnp.zeros((L, 1, D), jnp.float32),
        "bv": jnp.zeros((L, 1, D), jnp.float32),
        "bo": jnp.zeros((L, 1, D), jnp.float32),
        "g1": jnp.ones((L, 1, D), jnp.float32),
        "be1": jnp.zeros((L, 1, D), jnp.float32),
        "w1": rnd(ks[5], (L, D, F), D ** -0.5),
        "bf1": jnp.zeros((L, 1, F), jnp.float32),
        "w2": rnd(ks[6], (L, F, D), F ** -0.5),
        "bf2": jnp.zeros((L, 1, D), jnp.float32),
        "g2": jnp.ones((L, 1, D), jnp.float32),
        "be2": jnp.zeros((L, 1, D), jnp.float32),
    }


if __name__ == "__main__":
    key = jax.random.PRNGKey(0)
    kx, kp = jax.random.split(key, 2)
    S, N = 8, 2
    x = jax.random.normal(kx, (S, N, D_MODEL), jnp.float32)      # (seq, batch, d_model)
    mask = jnp.array([[True] * 8,
                      [True] * 5 + [False] * 3])                  # (batch, seq), True = keep
    params = init_params(kp)

    out = aggregator_forward(x, mask, params)
    out = jax.block_until_ready(out)

    ref = aggregator_reference(x, mask, params)
    assert out.shape == (N, D_MODEL)
    # tolerance covers bf16 streaming of the source x and the approx softmax reciprocal;
    # streaming x as f32 recovers <5e-3 agreement with the f32 reference.
    assert jnp.allclose(out, ref, atol=1e-2, rtol=1e-2), (out, ref)
    print("KERNEL_OK")
</pallas_src>

<mosaic_0001>
module attributes {stable_mosaic.version = 11 : i64} {
  func.func @aggregator_kernel(%arg0: i32, %arg1: memref<256x128xbf16, #tpu.memory_space<vmem>>, %arg2: memref<8x1x128xf32, #tpu.memory_space<vmem>>, %arg3: memref<32x1xf32, #tpu.memory_space<vmem>>, %arg4: memref<128x32xf32, #tpu.memory_space<vmem>>, %arg5: memref<128x1xf32, #tpu.memory_space<vmem>>, %arg6: memref<32x32xf32, #tpu.memory_space<vmem>>, %arg7: memref<2x32x32xf32, #tpu.memory_space<vmem>>, %arg8: memref<2x32x1xf32, #tpu.memory_space<vmem>>, %arg9: memref<2x32x32xf32, #tpu.memory_space<vmem>>, %arg10: memref<2x32x1xf32, #tpu.memory_space<vmem>>, %arg11: memref<2x32x1xf32, #tpu.memory_space<vmem>>, %arg12: memref<2x32x1xf32, #tpu.memory_space<vmem>>, %arg13: memref<2x64x32xf32, #tpu.memory_space<vmem>>, %arg14: memref<2x64x1xf32, #tpu.memory_space<vmem>>, %arg15: memref<2x32x64xf32, #tpu.memory_space<vmem>>, %arg16: memref<2x32x1xf32, #tpu.memory_space<vmem>>, %arg17: memref<2x32x1xf32, #tpu.memory_space<vmem>>, %arg18: memref<2x32x1xf32, #tpu.memory_space<vmem>>, %arg19: memref<32x128xf32, #tpu.memory_space<vmem>>) attributes {dimension_semantics = [#tpu.dimension_semantics<parallel>], iteration_bounds = array<i64: 1>, scalar_prefetch = 0 : i64, scratch_operands = 0 : i64, tpu.core_type = #tpu.core_type<tc>, window_params = [{transform_indices = @transform_0, window_bounds = array<i64: 256, 128>}, {transform_indices = @transform_1, window_bounds = array<i64: 8, 1, 128>}, {pipeline_mode = #tpu.pipeline_mode<synchronous>, transform_indices = @transform_2, window_bounds = array<i64: 32, 1>}, {pipeline_mode = #tpu.pipeline_mode<synchronous>, transform_indices = @transform_3, window_bounds = array<i64: 128, 32>}, {pipeline_mode = #tpu.pipeline_mode<synchronous>, transform_indices = @transform_4, window_bounds = array<i64: 128, 1>}, {pipeline_mode = #tpu.pipeline_mode<synchronous>, transform_indices = @transform_5, window_bounds = array<i64: 32, 32>}, {pipeline_mode = #tpu.pipeline_mode<synchronous>, transform_indices = @transform_6, window_bounds = array<i64: 2, 32, 32>}, {pipeline_mode = #tpu.pipeline_mode<synchronous>, transform_indices = @transform_7, window_bounds = array<i64: 2, 32, 1>}, {pipeline_mode = #tpu.pipeline_mode<synchronous>, transform_indices = @transform_8, window_bounds = array<i64: 2, 32, 32>}, {pipeline_mode = #tpu.pipeline_mode<synchronous>, transform_indices = @transform_9, window_bounds = array<i64: 2, 32, 1>}, {pipeline_mode = #tpu.pipeline_mode<synchronous>, transform_indices = @transform_10, window_bounds = array<i64: 2, 32, 1>}, {pipeline_mode = #tpu.pipeline_mode<synchronous>, transform_indices = @transform_11, window_bounds = array<i64: 2, 32, 1>}, {pipeline_mode = #tpu.pipeline_mode<synchronous>, transform_indices = @transform_12, window_bounds = array<i64: 2, 64, 32>}, {pipeline_mode = #tpu.pipeline_mode<synchronous>, transform_indices = @transform_13, window_bounds = array<i64: 2, 64, 1>}, {pipeline_mode = #tpu.pipeline_mode<synchronous>, transform_indices = @transform_14, window_bounds = array<i64: 2, 32, 64>}, {pipeline_mode = #tpu.pipeline_mode<synchronous>, transform_indices = @transform_15, window_bounds = array<i64: 2, 32, 1>}, {pipeline_mode = #tpu.pipeline_mode<synchronous>, transform_indices = @transform_16, window_bounds = array<i64: 2, 32, 1>}, {pipeline_mode = #tpu.pipeline_mode<synchronous>, transform_indices = @transform_17, window_bounds = array<i64: 2, 32, 1>}, {transform_indices = @transform_18, window_bounds = array<i64: 32, 128>}]} {
    %c0 = arith.constant 0 : index
    %c0_0 = arith.constant 0 : index
    %0 = vector.load %arg1[%c0, %c0_0] : memref<256x128xbf16, #tpu.memory_space<vmem>>, vector<256x128xbf16>
    %1 = arith.extf %0 : vector<256x128xbf16> to vector<256x128xf32>
    %c0_1 = arith.constant 0 : index
    %c0_2 = arith.constant 0 : index
    %2 = vector.load %arg4[%c0_1, %c0_2] : memref<128x32xf32, #tpu.memory_space<vmem>>, vector<128x32xf32>
    %c0_3 = arith.constant 0 : index
    %c0_4 = arith.constant 0 : index
    %3 = vector.load %arg5[%c0_3, %c0_4] : memref<128x1xf32, #tpu.memory_space<vmem>>, vector<128x1xf32>
    %c0_5 = arith.constant 0 : index
    %c0_6 = arith.constant 0 : index
    %4 = vector.load %arg6[%c0_5, %c0_6] : memref<32x32xf32, #tpu.memory_space<vmem>>, vector<32x32xf32>
    %c0_7 = arith.constant 0 : index
    %c0_8 = arith.constant 0 : index
    %c0_9 = arith.constant 0 : index
    %5 = vector.load %arg2[%c0_7, %c0_8, %c0_9] : memref<8x1x128xf32, #tpu.memory_space<vmem>>, vector<1x1x128xf32>
    %6 = vector.shape_cast %5 : vector<1x1x128xf32> to vector<1x128xf32>
    %7 = vector.shape_cast %6 : vector<1x128xf32> to vector<1x128xf32>
    %8 = vector.broadcast %7 : vector<1x128xf32> to vector<32x128xf32>
    %c1 = arith.constant 1 : index
    %c0_10 = arith.constant 0 : index
    %c0_11 = arith.constant 0 : index
    %9 = vector.load %arg2[%c1, %c0_10, %c0_11] : memref<8x1x128xf32, #tpu.memory_space<vmem>>, vector<1x1x128xf32>
    %10 = vector.shape_cast %9 : vector<1x1x128xf32> to vector<1x128xf32>
    %11 = vector.shape_cast %10 : vector<1x128xf32> to vector<1x128xf32>
    %12 = vector.broadcast %11 : vector<1x128xf32> to vector<32x128xf32>
    %c2 = arith.constant 2 : index
    %c0_12 = arith.constant 0 : index
    %c0_13 = arith.constant 0 : index
    %13 = vector.load %arg2[%c2, %c0_12, %c0_13] : memref<8x1x128xf32, #tpu.memory_space<vmem>>, vector<1x1x128xf32>
    %14 = vector.shape_cast %13 : vector<1x1x128xf32> to vector<1x128xf32>
    %15 = vector.shape_cast %14 : vector<1x128xf32> to vector<1x128xf32>
    %16 = vector.broadcast %15 : vector<1x128xf32> to vector<32x128xf32>
    %c3 = arith.constant 3 : index
    %c0_14 = arith.constant 0 : index
    %c0_15 = arith.constant 0 : index
    %17 = vector.load %arg2[%c3, %c0_14, %c0_15] : memref<8x1x128xf32, #tpu.memory_space<vmem>>, vector<1x1x128xf32>
    %18 = vector.shape_cast %17 : vector<1x1x128xf32> to vector<1x128xf32>
    %19 = vector.shape_cast %18 : vector<1x128xf32> to vector<1x128xf32>
    %20 = vector.broadcast %19 : vector<1x128xf32> to vector<32x128xf32>
    %c4 = arith.constant 4 : index
    %c0_16 = arith.constant 0 : index
    %c0_17 = arith.constant 0 : index
    %21 = vector.load %arg2[%c4, %c0_16, %c0_17] : memref<8x1x128xf32, #tpu.memory_space<vmem>>, vector<1x1x128xf32>
    %22 = vector.shape_cast %21 : vector<1x1x128xf32> to vector<1x128xf32>
    %23 = vector.shape_cast %22 : vector<1x128xf32> to vector<1x128xf32>
    %24 = vector.broadcast %23 : vector<1x128xf32> to vector<32x128xf32>
    %c5 = arith.constant 5 : index
    %c0_18 = arith.constant 0 : index
    %c0_19 = arith.constant 0 : index
    %25 = vector.load %arg2[%c5, %c0_18, %c0_19] : memref<8x1x128xf32, #tpu.memory_space<vmem>>, vector<1x1x128xf32>
    %26 = vector.shape_cast %25 : vector<1x1x128xf32> to vector<1x128xf32>
    %27 = vector.shape_cast %26 : vector<1x128xf32> to vector<1x128xf32>
    %28 = vector.broadcast %27 : vector<1x128xf32> to vector<32x128xf32>
    %c6 = arith.constant 6 : index
    %c0_20 = arith.constant 0 : index
    %c0_21 = arith.constant 0 : index
    %29 = vector.load %arg2[%c6, %c0_20, %c0_21] : memref<8x1x128xf32, #tpu.memory_space<vmem>>, vector<1x1x128xf32>
    %30 = vector.shape_cast %29 : vector<1x1x128xf32> to vector<1x128xf32>
    %31 = vector.shape_cast %30 : vector<1x128xf32> to vector<1x128xf32>
    %32 = vector.broadcast %31 : vector<1x128xf32> to vector<32x128xf32>
    %c7 = arith.constant 7 : index
    %c0_22 = arith.constant 0 : index
    %c0_23 = arith.constant 0 : index
    %33 = vector.load %arg2[%c7, %c0_22, %c0_23] : memref<8x1x128xf32, #tpu.memory_space<vmem>>, vector<1x1x128xf32>
    %34 = vector.shape_cast %33 : vector<1x1x128xf32> to vector<1x128xf32>
    %35 = vector.shape_cast %34 : vector<1x128xf32> to vector<1x128xf32>
    %36 = vector.broadcast %35 : vector<1x128xf32> to vector<32x128xf32>
    %37 = vector.extract_strided_slice %1 {offsets = [0, 0], sizes = [32, 128], strides = [1, 1]} : vector<256x128xf32> to vector<32x128xf32>
    %cst = arith.constant dense<0.000000e+00> : vector<128x128xf32>
    %38 = tpu.matmul %2, %37, %cst {dimension_numbers = #tpu.dot_dimension_numbers<[1], [0], [0], [1], [0, 0, 1, 1], [], []>} : vector<128x32xf32>, vector<32x128xf32>, vector<128x128xf32> -> vector<128x128xf32>
    %39 = vector.broadcast %3 : vector<128x1xf32> to vector<128x128xf32>
    %40 = arith.addf %38, %39 : vector<128x128xf32>
    %41 = vector.extract_strided_slice %1 {offsets = [32, 0], sizes = [32, 128], strides = [1, 1]} : vector<256x128xf32> to vector<32x128xf32>
    %cst_24 = arith.constant dense<0.000000e+00> : vector<128x128xf32>
    %42 = tpu.matmul %2, %41, %cst_24 {dimension_numbers = #tpu.dot_dimension_numbers<[1], [0], [0], [1], [0, 0, 1, 1], [], []>} : vector<128x32xf32>, vector<32x128xf32>, vector<128x128xf32> -> vector<128x128xf32>
    %43 = vector.broadcast %3 : vector<128x1xf32> to vector<128x128xf32>
    %44 = arith.addf %42, %43 : vector<128x128xf32>
    %45 = vector.extract_strided_slice %1 {offsets = [64, 0], sizes = [32, 128], strides = [1, 1]} : vector<256x128xf32> to vector<32x128xf32>
    %cst_25 = arith.constant dense<0.000000e+00> : vector<128x128xf32>
    %46 = tpu.matmul %2, %45, %cst_25 {dimension_numbers = #tpu.dot_dimension_numbers<[1], [0], [0], [1], [0, 0, 1, 1], [], []>} : vector<128x32xf32>, vector<32x128xf32>, vector<128x128xf32> -> vector<128x128xf32>
    %47 = vector.broadcast %3 : vector<128x1xf32> to vector<128x128xf32>
    %48 = arith.addf %46, %47 : vector<128x128xf32>
    %49 = vector.extract_strided_slice %1 {offsets = [96, 0], sizes = [32, 128], strides = [1, 1]} : vector<256x128xf32> to vector<32x128xf32>
    %cst_26 = arith.constant dense<0.000000e+00> : vector<128x128xf32>
    %50 = tpu.matmul %2, %49, %cst_26 {dimension_numbers = #tpu.dot_dimension_numbers<[1], [0], [0], [1], [0, 0, 1, 1], [], []>} : vector<128x32xf32>, vector<32x128xf32>, vector<128x128xf32> -> vector<128x128xf32>
    %51 = vector.broadcast %3 : vector<128x1xf32> to vector<128x128xf32>
    %52 = arith.addf %50, %51 : vector<128x128xf32>
    %53 = vector.extract_strided_slice %1 {offsets = [128, 0], sizes = [32, 128], strides = [1, 1]} : vector<256x128xf32> to vector<32x128xf32>
    %cst_27 = arith.constant dense<0.000000e+00> : vector<128x128xf32>
    %54 = tpu.matmul %2, %53, %cst_27 {dimension_numbers = #tpu.dot_dimension_numbers<[1], [0], [0], [1], [0, 0, 1, 1], [], []>} : vector<128x32xf32>, vector<32x128xf32>, vector<128x128xf32> -> vector<128x128xf32>
    %55 = vector.broadcast %3 : vector<128x1xf32> to vector<128x128xf32>
    %56 = arith.addf %54, %55 : vector<128x128xf32>
    %57 = vector.extract_strided_slice %1 {offsets = [160, 0], sizes = [32, 128], strides = [1, 1]} : vector<256x128xf32> to vector<32x128xf32>
    %cst_28 = arith.constant dense<0.000000e+00> : vector<128x128xf32>
    %58 = tpu.matmul %2, %57, %cst_28 {dimension_numbers = #tpu.dot_dimension_numbers<[1], [0], [0], [1], [0, 0, 1, 1], [], []>} : vector<128x32xf32>, vector<32x128xf32>, vector<128x128xf32> -> vector<128x128xf32>
    %59 = vector.broadcast %3 : vector<128x1xf32> to vector<128x128xf32>
    %60 = arith.addf %58, %59 : vector<128x128xf32>
    %61 = vector.extract_strided_slice %1 {offsets = [192, 0], sizes = [32, 128], strides = [1, 1]} : vector<256x128xf32> to vector<32x128xf32>
    %cst_29 = arith.constant dense<0.000000e+00> : vector<128x128xf32>
    %62 = tpu.matmul %2, %61, %cst_29 {dimension_numbers = #tpu.dot_dimension_numbers<[1], [0], [0], [1], [0, 0, 1, 1], [], []>} : vector<128x32xf32>, vector<32x128xf32>, vector<128x128xf32> -> vector<128x128xf32>
    %63 = vector.broadcast %3 : vector<128x1xf32> to vector<128x128xf32>
    %64 = arith.addf %62, %63 : vector<128x128xf32>
    %65 = vector.extract_strided_slice %1 {offsets = [224, 0], sizes = [32, 128], strides = [1, 1]} : vector<256x128xf32> to vector<32x128xf32>
    %cst_30 = arith.constant dense<0.000000e+00> : vector<128x128xf32>
    %66 = tpu.matmul %2, %65, %cst_30 {dimension_numbers = #tpu.dot_dimension_numbers<[1], [0], [0], [1], [0, 0, 1, 1], [], []>} : vector<128x32xf32>, vector<32x128xf32>, vector<128x128xf32> -> vector<128x128xf32>
    %67 = vector.broadcast %3 : vector<128x1xf32> to vector<128x128xf32>
    %68 = arith.addf %66, %67 : vector<128x128xf32>
    %c0_31 = arith.constant 0 : index
    %c0_32 = arith.constant 0 : index
    %69 = vector.load %arg3[%c0_31, %c0_32] : memref<32x1xf32, #tpu.memory_space<vmem>>, vector<32x1xf32>
    %70 = vector.shape_cast %69 : vector<32x1xf32> to vector<32x1xf32>
    %71 = vector.broadcast %70 : vector<32x1xf32> to vector<32x128xf32>
    %c0_33 = arith.constant 0 : index
    %c0_34 = arith.constant 0 : index
    %c0_35 = arith.constant 0 : index
    %72 = vector.load %arg7[%c0_33, %c0_34, %c0_35] : memref<2x32x32xf32, #tpu.memory_space<vmem>>, vector<1x32x32xf32>
    %73 = vector.shape_cast %72 : vector<1x32x32xf32> to vector<32x32xf32>
    %cst_36 = arith.constant dense<0.000000e+00> : vector<32x128xf32>
    %74 = tpu.matmul %73, %71, %cst_36 {dimension_numbers = #tpu.dot_dimension_numbers<[1], [0], [0], [1], [0, 0, 1, 1], [], []>} : vector<32x32xf32>, vector<32x128xf32>, vector<32x128xf32> -> vector<32x128xf32>
    %c0_37 = arith.constant 0 : index
    %c0_38 = arith.constant 0 : index
    %c0_39 = arith.constant 0 : index
    %75 = vector.load %arg8[%c0_37, %c0_38, %c0_39] : memref<2x32x1xf32, #tpu.memory_space<vmem>>, vector<1x32x1xf32>
    %76 = vector.shape_cast %75 : vector<1x32x1xf32> to vector<32x1xf32>
    %77 = vector.broadcast %76 : vector<32x1xf32> to vector<32x128xf32>
    %78 = arith.addf %74, %77 : vector<32x128xf32>
    %79 = vector.extract_strided_slice %40 {offsets = [0, 0], sizes = [32, 128], strides = [1, 1]} : vector<128x128xf32> to vector<32x128xf32>
    %80 = arith.mulf %78, %79 : vector<32x128xf32>
    %cst_40 = arith.constant dense<0.000000e+00> : vector<32x128xf32>
    %81 = tpu.matmul %4, %80, %cst_40 {dimension_numbers = #tpu.dot_dimension_numbers<[1], [0], [0], [1], [0, 0, 1, 1], [], []>} : vector<32x32xf32>, vector<32x128xf32>, vector<32x128xf32> -> vector<32x128xf32>
    %82 = arith.addf %81, %8 : vector<32x128xf32>
    %83 = vector.extract_strided_slice %44 {offsets = [0, 0], sizes = [32, 128], strides = [1, 1]} : vector<128x128xf32> to vector<32x128xf32>
    %84 = arith.mulf %78, %83 : vector<32x128xf32>
    %cst_41 = arith.constant dense<0.000000e+00> : vector<32x128xf32>
    %85 = tpu.matmul %4, %84, %cst_41 {dimension_numbers = #tpu.dot_dimension_numbers<[1], [0], [0], [1], [0, 0, 1, 1], [], []>} : vector<32x32xf32>, vector<32x128xf32>, vector<32x128xf32> -> vector<32x128xf32>
    %86 = arith.addf %85, %12 : vector<32x128xf32>
    %87 = vector.extract_strided_slice %48 {offsets = [0, 0], sizes = [32, 128], strides = [1, 1]} : vector<128x128xf32> to vector<32x128xf32>
    %88 = arith.mulf %78, %87 : vector<32x128xf32>
    %cst_42 = arith.constant dense<0.000000e+00> : vector<32x128xf32>
    %89 = tpu.matmul %4, %88, %cst_42 {dimension_numbers = #tpu.dot_dimension_numbers<[1], [0], [0], [1], [0, 0, 1, 1], [], []>} : vector<32x32xf32>, vector<32x128xf32>, vector<32x128xf32> -> vector<32x128xf32>
    %90 = arith.addf %89, %16 : vector<32x128xf32>
    %91 = vector.extract_strided_slice %52 {offsets = [0, 0], sizes = [32, 128], strides = [1, 1]} : vector<128x128xf32> to vector<32x128xf32>
    %92 = arith.mulf %78, %91 : vector<32x128xf32>
    %cst_43 = arith.constant dense<0.000000e+00> : vector<32x128xf32>
    %93 = tpu.matmul %4, %92, %cst_43 {dimension_numbers = #tpu.dot_dimension_numbers<[1], [0], [0], [1], [0, 0, 1, 1], [], []>} : vector<32x32xf32>, vector<32x128xf32>, vector<32x128xf32> -> vector<32x128xf32>
    %94 = arith.addf %93, %20 : vector<32x128xf32>
    %95 = vector.extract_strided_slice %56 {offsets = [0, 0], sizes = [32, 128], strides = [1, 1]} : vector<128x128xf32> to vector<32x128xf32>
    %96 = arith.mulf %78, %95 : vector<32x128xf32>
    %cst_44 = arith.constant dense<0.000000e+00> : vector<32x128xf32>
    %97 = tpu.matmul %4, %96, %cst_44 {dimension_numbers = #tpu.dot_dimension_numbers<[1], [0], [0], [1], [0, 0, 1, 1], [], []>} : vector<32x32xf32>, vector<32x128xf32>, vector<32x128xf32> -> vector<32x128xf32>
    %98 = arith.addf %97, %24 : vector<32x128xf32>
    %99 = vector.extract_strided_slice %60 {offsets = [0, 0], sizes = [32, 128], strides = [1, 1]} : vector<128x128xf32> to vector<32x128xf32>
    %100 = arith.mulf %78, %99 : vector<32x128xf32>
    %cst_45 = arith.constant dense<0.000000e+00> : vector<32x128xf32>
    %101 = tpu.matmul %4, %100, %cst_45 {dimension_numbers = #tpu.dot_dimension_numbers<[1], [0], [0], [1], [0, 0, 1, 1], [], []>} : vector<32x32xf32>, vector<32x128xf32>, vector<32x128xf32> -> vector<32x128xf32>
    %102 = arith.addf %101, %28 : vector<32x128xf32>
    %103 = vector.extract_strided_slice %64 {offsets = [0, 0], sizes = [32, 128], strides = [1, 1]} : vector<128x128xf32> to vector<32x128xf32>
    %104 = arith.mulf %78, %103 : vector<32x128xf32>
    %cst_46 = arith.constant dense<0.000000e+00> : vector<32x128xf32>
    %105 = tpu.matmul %4, %104, %cst_46 {dimension_numbers = #tpu.dot_dimension_numbers<[1], [0], [0], [1], [0, 0, 1, 1], [], []>} : vector<32x32xf32>, vector<32x128xf32>, vector<32x128xf32> -> vector<32x128xf32>
    %106 = arith.addf %105, %32 : vector<32x128xf32>
    %107 = vector.extract_strided_slice %68 {offsets = [0, 0], sizes = [32, 128], strides = [1, 1]} : vector<128x128xf32> to vector<32x128xf32>
    %108 = arith.mulf %78, %107 : vector<32x128xf32>
    %cst_47 = arith.constant dense<0.000000e+00> : vector<32x128xf32>
    %109 = tpu.matmul %4, %108, %cst_47 {dimension_numbers = #tpu.dot_dimension_numbers<[1], [0], [0], [1], [0, 0, 1, 1], [], []>} : vector<32x32xf32>, vector<32x128xf32>, vector<32x128xf32> -> vector<32x128xf32>
    %110 = arith.addf %109, %36 : vector<32x128xf32>
    %111 = arith.maximumf %82, %86 : vector<32x128xf32>
    %112 = arith.maximumf %111, %90 : vector<32x128xf32>
    %113 = arith.maximumf %112, %94 : vector<32x128xf32>
    %114 = arith.maximumf %113, %98 : vector<32x128xf32>
    %115 = arith.maximumf %114, %102 : vector<32x128xf32>
    %116 = arith.maximumf %115, %106 : vector<32x128xf32>
    %117 = arith.maximumf %116, %110 : vector<32x128xf32>
    %118 = arith.subf %82, %117 : vector<32x128xf32>
    %119 = math.exp %118 : vector<32x128xf32>
    %120 = arith.subf %86, %117 : vector<32x128xf32>
    %121 = math.exp %120 : vector<32x128xf32>
    %122 = arith.subf %90, %117 : vector<32x128xf32>
    %123 = math.exp %122 : vector<32x128xf32>
    %124 = arith.subf %94, %117 : vector<32x128xf32>
    %125 = math.exp %124 : vector<32x128xf32>
    %126 = arith.subf %98, %117 : vector<32x128xf32>
    %127 = math.exp %126 : vector<32x128xf32>
    %128 = arith.subf %102, %117 : vector<32x128xf32>
    %129 = math.exp %128 : vector<32x128xf32>
    %130 = arith.subf %106, %117 : vector<32x128xf32>
    %131 = math.exp %130 : vector<32x128xf32>
    %132 = arith.subf %110, %117 : vector<32x128xf32>
    %133 = math.exp %132 : vector<32x128xf32>
    %134 = arith.addf %119, %121 : vector<32x128xf32>
    %135 = arith.addf %134, %123 : vector<32x128xf32>
    %136 = arith.addf %135, %125 : vector<32x128xf32>
    %137 = arith.addf %136, %127 : vector<32x128xf32>
    %138 = arith.addf %137, %129 : vector<32x128xf32>
    %139 = arith.addf %138, %131 : vector<32x128xf32>
    %140 = arith.addf %139, %133 : vector<32x128xf32>
    %141 = vector.extract_strided_slice %40 {offsets = [32, 0], sizes = [32, 128], strides = [1, 1]} : vector<128x128xf32> to vector<32x128xf32>
    %142 = arith.mulf %119, %141 : vector<32x128xf32>
    %143 = vector.extract_strided_slice %44 {offsets = [32, 0], sizes = [32, 128], strides = [1, 1]} : vector<128x128xf32> to vector<32x128xf32>
    %144 = arith.mulf %121, %143 : vector<32x128xf32>
    %145 = arith.addf %142, %144 : vector<32x128xf32>
    %146 = vector.extract_strided_slice %48 {offsets = [32, 0], sizes = [32, 128], strides = [1, 1]} : vector<128x128xf32> to vector<32x128xf32>
    %147 = arith.mulf %123, %146 : vector<32x128xf32>
    %148 = arith.addf %145, %147 : vector<32x128xf32>
    %149 = vector.extract_strided_slice %52 {offsets = [32, 0], sizes = [32, 128], strides = [1, 1]} : vector<128x128xf32> to vector<32x128xf32>
    %150 = arith.mulf %125, %149 : vector<32x128xf32>
    %151 = arith.addf %148, %150 : vector<32x128xf32>
    %152 = vector.extract_strided_slice %56 {offsets = [32, 0], sizes = [32, 128], strides = [1, 1]} : vector<128x128xf32> to vector<32x128xf32>
    %153 = arith.mulf %127, %152 : vector<32x128xf32>
    %154 = arith.addf %151, %153 : vector<32x128xf32>
    %155 = vector.extract_strided_slice %60 {offsets = [32, 0], sizes = [32, 128], strides = [1, 1]} : vector<128x128xf32> to vector<32x128xf32>
    %156 = arith.mulf %129, %155 : vector<32x128xf32>
    %157 = arith.addf %154, %156 : vector<32x128xf32>
    %158 = vector.extract_strided_slice %64 {offsets = [32, 0], sizes = [32, 128], strides = [1, 1]} : vector<128x128xf32> to vector<32x128xf32>
    %159 = arith.mulf %131, %158 : vector<32x128xf32>
    %160 = arith.addf %157, %159 : vector<32x128xf32>
    %161 = vector.extract_strided_slice %68 {offsets = [32, 0], sizes = [32, 128], strides = [1, 1]} : vector<128x128xf32> to vector<32x128xf32>
    %162 = arith.mulf %133, %161 : vector<32x128xf32>
    %163 = arith.addf %160, %162 : vector<32x128xf32>
    %164 = tpu.reciprocal %140 {approx = true} : vector<32x128xf32> -> vector<32x128xf32>
    %165 = arith.mulf %163, %164 : vector<32x128xf32>
    %c0_48 = arith.constant 0 : index
    %c0_49 = arith.constant 0 : index
    %c0_50 = arith.constant 0 : index
    %166 = vector.load %arg9[%c0_48, %c0_49, %c0_50] : memref<2x32x32xf32, #tpu.memory_space<vmem>>, vector<1x32x32xf32>
    %167 = vector.shape_cast %166 : vector<1x32x32xf32> to vector<32x32xf32>
    %cst_51 = arith.constant dense<0.000000e+00> : vector<32x128xf32>
    %168 = tpu.matmul %167, %165, %cst_51 {dimension_numbers = #tpu.dot_dimension_numbers<[1], [0], [0], [1], [0, 0, 1, 1], [], []>} : vector<32x32xf32>, vector<32x128xf32>, vector<32x128xf32> -> vector<32x128xf32>
    %c0_52 = arith.constant 0 : index
    %c0_53 = arith.constant 0 : index
    %c0_54 = arith.constant 0 : index
    %169 = vector.load %arg10[%c0_52, %c0_53, %c0_54] : memref<2x32x1xf32, #tpu.memory_space<vmem>>, vector<1x32x1xf32>
    %170 = vector.shape_cast %169 : vector<1x32x1xf32> to vector<32x1xf32>
    %171 = vector.broadcast %170 : vector<32x1xf32> to vector<32x128xf32>
    %172 = arith.addf %168, %171 : vector<32x128xf32>
    %173 = arith.addf %71, %172 : vector<32x128xf32>
    %c0_55 = arith.constant 0 : index
    %c0_56 = arith.constant 0 : index
    %c0_57 = arith.constant 0 : index
    %174 = vector.load %arg11[%c0_55, %c0_56, %c0_57] : memref<2x32x1xf32, #tpu.memory_space<vmem>>, vector<1x32x1xf32>
    %175 = vector.shape_cast %174 : vector<1x32x1xf32> to vector<32x1xf32>
    %c0_58 = arith.constant 0 : index
    %c0_59 = arith.constant 0 : index
    %c0_60 = arith.constant 0 : index
    %176 = vector.load %arg12[%c0_58, %c0_59, %c0_60] : memref<2x32x1xf32, #tpu.memory_space<vmem>>, vector<1x32x1xf32>
    %177 = vector.shape_cast %176 : vector<1x32x1xf32> to vector<32x1xf32>
    %cst_61 = arith.constant dense<0.000000e+00> : vector<128xf32>
    %178 = vector.multi_reduction <add>, %173, %cst_61 [0] : vector<32x128xf32> to vector<128xf32>
    %179 = vector.shape_cast %178 : vector<128xf32> to vector<1x128xf32>
    %cst_62 = arith.constant 3.200000e+01 : f32
    %180 = vector.broadcast %cst_62 : f32 to vector<1x128xf32>
    %181 = arith.divf %179, %180 : vector<1x128xf32>
    %182 = vector.broadcast %181 : vector<1x128xf32> to vector<32x128xf32>
    %183 = arith.subf %173, %182 : vector<32x128xf32>
    %184 = arith.mulf %183, %183 : vector<32x128xf32>
    %cst_63 = arith.constant dense<0.000000e+00> : vector<128xf32>
    %185 = vector.multi_reduction <add>, %184, %cst_63 [0] : vector<32x128xf32> to vector<128xf32>
    %186 = vector.shape_cast %185 : vector<128xf32> to vector<1x128xf32>
    %cst_64 = arith.constant 3.200000e+01 : f32
    %187 = vector.broadcast %cst_64 : f32 to vector<1x128xf32>
    %188 = arith.divf %186, %187 : vector<1x128xf32>
    %189 = vector.broadcast %181 : vector<1x128xf32> to vector<32x128xf32>
    %190 = arith.subf %173, %189 : vector<32x128xf32>
    %cst_65 = arith.constant 9.99999974E-6 : f32
    %191 = vector.broadcast %cst_65 : f32 to vector<1x128xf32>
    %192 = arith.addf %188, %191 : vector<1x128xf32>
    %193 = math.rsqrt %192 : vector<1x128xf32>
    %194 = vector.broadcast %193 : vector<1x128xf32> to vector<32x128xf32>
    %195 = arith.mulf %190, %194 : vector<32x128xf32>
    %196 = vector.broadcast %175 : vector<32x1xf32> to vector<32x128xf32>
    %197 = arith.mulf %195, %196 : vector<32x128xf32>
    %198 = vector.broadcast %177 : vector<32x1xf32> to vector<32x128xf32>
    %199 = arith.addf %197, %198 : vector<32x128xf32>
    %c0_66 = arith.constant 0 : index
    %c0_67 = arith.constant 0 : index
    %c0_68 = arith.constant 0 : index
    %200 = vector.load %arg13[%c0_66, %c0_67, %c0_68] : memref<2x64x32xf32, #tpu.memory_space<vmem>>, vector<1x64x32xf32>
    %201 = vector.shape_cast %200 : vector<1x64x32xf32> to vector<64x32xf32>
    %cst_69 = arith.constant dense<0.000000e+00> : vector<64x128xf32>
    %202 = tpu.matmul %201, %199, %cst_69 {dimension_numbers = #tpu.dot_dimension_numbers<[1], [0], [0], [1], [0, 0, 1, 1], [], []>} : vector<64x32xf32>, vector<32x128xf32>, vector<64x128xf32> -> vector<64x128xf32>
    %c0_70 = arith.constant 0 : index
    %c0_71 = arith.constant 0 : index
    %c0_72 = arith.constant 0 : index
    %203 = vector.load %arg14[%c0_70, %c0_71, %c0_72] : memref<2x64x1xf32, #tpu.memory_space<vmem>>, vector<1x64x1xf32>
    %204 = vector.shape_cast %203 : vector<1x64x1xf32> to vector<64x1xf32>
    %205 = vector.broadcast %204 : vector<64x1xf32> to vector<64x128xf32>
    %206 = arith.addf %202, %205 : vector<64x128xf32>
    %cst_73 = arith.constant 0.000000e+00 : f32
    %207 = vector.broadcast %cst_73 : f32 to vector<64x128xf32>
    %208 = arith.maximumf %206, %207 : vector<64x128xf32>
    %c0_74 = arith.constant 0 : index
    %c0_75 = arith.constant 0 : index
    %c0_76 = arith.constant 0 : index
    %209 = vector.load %arg15[%c0_74, %c0_75, %c0_76] : memref<2x32x64xf32, #tpu.memory_space<vmem>>, vector<1x32x64xf32>
    %210 = vector.shape_cast %209 : vector<1x32x64xf32> to vector<32x64xf32>
    %cst_77 = arith.constant dense<0.000000e+00> : vector<32x128xf32>
    %211 = tpu.matmul %210, %208, %cst_77 {dimension_numbers = #tpu.dot_dimension_numbers<[1], [0], [0], [1], [0, 0, 1, 1], [], []>} : vector<32x64xf32>, vector<64x128xf32>, vector<32x128xf32> -> vector<32x128xf32>
    %c0_78 = arith.constant 0 : index
    %c0_79 = arith.constant 0 : index
    %c0_80 = arith.constant 0 : index
    %212 = vector.load %arg16[%c0_78, %c0_79, %c0_80] : memref<2x32x1xf32, #tpu.memory_space<vmem>>, vector<1x32x1xf32>
    %213 = vector.shape_cast %212 : vector<1x32x1xf32> to vector<32x1xf32>
    %214 = vector.broadcast %213 : vector<32x1xf32> to vector<32x128xf32>
    %215 = arith.addf %211, %214 : vector<32x128xf32>
    %216 = arith.addf %199, %215 : vector<32x128xf32>
    %c0_81 = arith.constant 0 : index
    %c0_82 = arith.constant 0 : index
    %c0_83 = arith.constant 0 : index
    %217 = vector.load %arg17[%c0_81, %c0_82, %c0_83] : memref<2x32x1xf32, #tpu.memory_space<vmem>>, vector<1x32x1xf32>
    %218 = vector.shape_cast %217 : vector<1x32x1xf32> to vector<32x1xf32>
    %c0_84 = arith.constant 0 : index
    %c0_85 = arith.constant 0 : index
    %c0_86 = arith.constant 0 : index
    %219 = vector.load %arg18[%c0_84, %c0_85, %c0_86] : memref<2x32x1xf32, #tpu.memory_space<vmem>>, vector<1x32x1xf32>
    %220 = vector.shape_cast %219 : vector<1x32x1xf32> to vector<32x1xf32>
    %cst_87 = arith.constant dense<0.000000e+00> : vector<128xf32>
    %221 = vector.multi_reduction <add>, %216, %cst_87 [0] : vector<32x128xf32> to vector<128xf32>
    %222 = vector.shape_cast %221 : vector<128xf32> to vector<1x128xf32>
    %cst_88 = arith.constant 3.200000e+01 : f32
    %223 = vector.broadcast %cst_88 : f32 to vector<1x128xf32>
    %224 = arith.divf %222, %223 : vector<1x128xf32>
    %225 = vector.broadcast %224 : vector<1x128xf32> to vector<32x128xf32>
    %226 = arith.subf %216, %225 : vector<32x128xf32>
    %227 = arith.mulf %226, %226 : vector<32x128xf32>
    %cst_89 = arith.constant dense<0.000000e+00> : vector<128xf32>
    %228 = vector.multi_reduction <add>, %227, %cst_89 [0] : vector<32x128xf32> to vector<128xf32>
    %229 = vector.shape_cast %228 : vector<128xf32> to vector<1x128xf32>
    %cst_90 = arith.constant 3.200000e+01 : f32
    %230 = vector.broadcast %cst_90 : f32 to vector<1x128xf32>
    %231 = arith.divf %229, %230 : vector<1x128xf32>
    %232 = vector.broadcast %224 : vector<1x128xf32> to vector<32x128xf32>
    %233 = arith.subf %216, %232 : vector<32x128xf32>
    %cst_91 = arith.constant 9.99999974E-6 : f32
    %234 = vector.broadcast %cst_91 : f32 to vector<1x128xf32>
    %235 = arith.addf %231, %234 : vector<1x128xf32>
    %236 = math.rsqrt %235 : vector<1x128xf32>
    %237 = vector.broadcast %236 : vector<1x128xf32> to vector<32x128xf32>
    %238 = arith.mulf %233, %237 : vector<32x128xf32>
    %239 = vector.broadcast %218 : vector<32x1xf32> to vector<32x128xf32>
    %240 = arith.mulf %238, %239 : vector<32x128xf32>
    %241 = vector.broadcast %220 : vector<32x1xf32> to vector<32x128xf32>
    %242 = arith.addf %240, %241 : vector<32x128xf32>
    %c1_92 = arith.constant 1 : index
    %c0_93 = arith.constant 0 : index
    %c0_94 = arith.constant 0 : index
    %243 = vector.load %arg7[%c1_92, %c0_93, %c0_94] : memref<2x32x32xf32, #tpu.memory_space<vmem>>, vector<1x32x32xf32>
    %244 = vector.shape_cast %243 : vector<1x32x32xf32> to vector<32x32xf32>
    %cst_95 = arith.constant dense<0.000000e+00> : vector<32x128xf32>
    %245 = tpu.matmul %244, %242, %cst_95 {dimension_numbers = #tpu.dot_dimension_numbers<[1], [0], [0], [1], [0, 0, 1, 1], [], []>} : vector<32x32xf32>, vector<32x128xf32>, vector<32x128xf32> -> vector<32x128xf32>
    %c1_96 = arith.constant 1 : index
    %c0_97 = arith.constant 0 : index
    %c0_98 = arith.constant 0 : index
    %246 = vector.load %arg8[%c1_96, %c0_97, %c0_98] : memref<2x32x1xf32, #tpu.memory_space<vmem>>, vector<1x32x1xf32>
    %247 = vector.shape_cast %246 : vector<1x32x1xf32> to vector<32x1xf32>
    %248 = vector.broadcast %247 : vector<32x1xf32> to vector<32x128xf32>
    %249 = arith.addf %245, %248 : vector<32x128xf32>
    %250 = vector.extract_strided_slice %40 {offsets = [64, 0], sizes = [32, 128], strides = [1, 1]} : vector<128x128xf32> to vector<32x128xf32>
    %251 = arith.mulf %249, %250 : vector<32x128xf32>
    %cst_99 = arith.constant dense<0.000000e+00> : vector<32x128xf32>
    %252 = tpu.matmul %4, %251, %cst_99 {dimension_numbers = #tpu.dot_dimension_numbers<[1], [0], [0], [1], [0, 0, 1, 1], [], []>} : vector<32x32xf32>, vector<32x128xf32>, vector<32x128xf32> -> vector<32x128xf32>
    %253 = arith.addf %252, %8 : vector<32x128xf32>
    %254 = vector.extract_strided_slice %44 {offsets = [64, 0], sizes = [32, 128], strides = [1, 1]} : vector<128x128xf32> to vector<32x128xf32>
    %255 = arith.mulf %249, %254 : vector<32x128xf32>
    %cst_100 = arith.constant dense<0.000000e+00> : vector<32x128xf32>
    %256 = tpu.matmul %4, %255, %cst_100 {dimension_numbers = #tpu.dot_dimension_numbers<[1], [0], [0], [1], [0, 0, 1, 1], [], []>} : vector<32x32xf32>, vector<32x128xf32>, vector<32x128xf32> -> vector<32x128xf32>
    %257 = arith.addf %256, %12 : vector<32x128xf32>
    %258 = vector.extract_strided_slice %48 {offsets = [64, 0], sizes = [32, 128], strides = [1, 1]} : vector<128x128xf32> to vector<32x128xf32>
    %259 = arith.mulf %249, %258 : vector<32x128xf32>
    %cst_101 = arith.constant dense<0.000000e+00> : vector<32x128xf32>
    %260 = tpu.matmul %4, %259, %cst_101 {dimension_numbers = #tpu.dot_dimension_numbers<[1], [0], [0], [1], [0, 0, 1, 1], [], []>} : vector<32x32xf32>, vector<32x128xf32>, vector<32x128xf32> -> vector<32x128xf32>
    %261 = arith.addf %260, %16 : vector<32x128xf32>
    %262 = vector.extract_strided_slice %52 {offsets = [64, 0], sizes = [32, 128], strides = [1, 1]} : vector<128x128xf32> to vector<32x128xf32>
    %263 = arith.mulf %249, %262 : vector<32x128xf32>
    %cst_102 = arith.constant dense<0.000000e+00> : vector<32x128xf32>
    %264 = tpu.matmul %4, %263, %cst_102 {dimension_numbers = #tpu.dot_dimension_numbers<[1], [0], [0], [1], [0, 0, 1, 1], [], []>} : vector<32x32xf32>, vector<32x128xf32>, vector<32x128xf32> -> vector<32x128xf32>
    %265 = arith.addf %264, %20 : vector<32x128xf32>
    %266 = vector.extract_strided_slice %56 {offsets = [64, 0], sizes = [32, 128], strides = [1, 1]} : vector<128x128xf32> to vector<32x128xf32>
    %267 = arith.mulf %249, %266 : vector<32x128xf32>
    %cst_103 = arith.constant dense<0.000000e+00> : vector<32x128xf32>
    %268 = tpu.matmul %4, %267, %cst_103 {dimension_numbers = #tpu.dot_dimension_numbers<[1], [0], [0], [1], [0, 0, 1, 1], [], []>} : vector<32x32xf32>, vector<32x128xf32>, vector<32x128xf32> -> vector<32x128xf32>
    %269 = arith.addf %268, %24 : vector<32x128xf32>
    %270 = vector.extract_strided_slice %60 {offsets = [64, 0], sizes = [32, 128], strides = [1, 1]} : vector<128x128xf32> to vector<32x128xf32>
    %271 = arith.mulf %249, %270 : vector<32x128xf32>
    %cst_104 = arith.constant dense<0.000000e+00> : vector<32x128xf32>
    %272 = tpu.matmul %4, %271, %cst_104 {dimension_numbers = #tpu.dot_dimension_numbers<[1], [0], [0], [1], [0, 0, 1, 1], [], []>} : vector<32x32xf32>, vector<32x128xf32>, vector<32x128xf32> -> vector<32x128xf32>
    %273 = arith.addf %272, %28 : vector<32x128xf32>
    %274 = vector.extract_strided_slice %64 {offsets = [64, 0], sizes = [32, 128], strides = [1, 1]} : vector<128x128xf32> to vector<32x128xf32>
    %275 = arith.mulf %249, %274 : vector<32x128xf32>
    %cst_105 = arith.constant dense<0.000000e+00> : vector<32x128xf32>
    %276 = tpu.matmul %4, %275, %cst_105 {dimension_numbers = #tpu.dot_dimension_numbers<[1], [0], [0], [1], [0, 0, 1, 1], [], []>} : vector<32x32xf32>, vector<32x128xf32>, vector<32x128xf32> -> vector<32x128xf32>
    %277 = arith.addf %276, %32 : vector<32x128xf32>
    %278 = vector.extract_strided_slice %68 {offsets = [64, 0], sizes = [32, 128], strides = [1, 1]} : vector<128x128xf32> to vector<32x128xf32>
    %279 = arith.mulf %249, %278 : vector<32x128xf32>
    %cst_106 = arith.constant dense<0.000000e+00> : vector<32x128xf32>
    %280 = tpu.matmul %4, %279, %cst_106 {dimension_numbers = #tpu.dot_dimension_numbers<[1], [0], [0], [1], [0, 0, 1, 1], [], []>} : vector<32x32xf32>, vector<32x128xf32>, vector<32x128xf32> -> vector<32x128xf32>
    %281 = arith.addf %280, %36 : vector<32x128xf32>
    %282 = arith.maximumf %253, %257 : vector<32x128xf32>
    %283 = arith.maximumf %282, %261 : vector<32x128xf32>
    %284 = arith.maximumf %283, %265 : vector<32x128xf32>
    %285 = arith.maximumf %284, %269 : vector<32x128xf32>
    %286 = arith.maximumf %285, %273 : vector<32x128xf32>
    %287 = arith.maximumf %286, %277 : vector<32x128xf32>
    %288 = arith.maximumf %287, %281 : vector<32x128xf32>
    %289 = arith.subf %253, %288 : vector<32x128xf32>
    %290 = math.exp %289 : vector<32x128xf32>
    %291 = arith.subf %257, %288 : vector<32x128xf32>
    %292 = math.exp %291 : vector<32x128xf32>
    %293 = arith.subf %261, %288 : vector<32x128xf32>
    %294 = math.exp %293 : vector<32x128xf32>
    %295 = arith.subf %265, %288 : vector<32x128xf32>
    %296 = math.exp %295 : vector<32x128xf32>
    %297 = arith.subf %269, %288 : vector<32x128xf32>
    %298 = math.exp %297 : vector<32x128xf32>
    %299 = arith.subf %273, %288 : vector<32x128xf32>
    %300 = math.exp %299 : vector<32x128xf32>
    %301 = arith.subf %277, %288 : vector<32x128xf32>
    %302 = math.exp %301 : vector<32x128xf32>
    %303 = arith.subf %281, %288 : vector<32x128xf32>
    %304 = math.exp %303 : vector<32x128xf32>
    %305 = arith.addf %290, %292 : vector<32x128xf32>
    %306 = arith.addf %305, %294 : vector<32x128xf32>
    %307 = arith.addf %306, %296 : vector<32x128xf32>
    %308 = arith.addf %307, %298 : vector<32x128xf32>
    %309 = arith.addf %308, %300 : vector<32x128xf32>
    %310 = arith.addf %309, %302 : vector<32x128xf32>
    %311 = arith.addf %310, %304 : vector<32x128xf32>
    %312 = vector.extract_strided_slice %40 {offsets = [96, 0], sizes = [32, 128], strides = [1, 1]} : vector<128x128xf32> to vector<32x128xf32>
    %313 = arith.mulf %290, %312 : vector<32x128xf32>
    %314 = vector.extract_strided_slice %44 {offsets = [96, 0], sizes = [32, 128], strides = [1, 1]} : vector<128x128xf32> to vector<32x128xf32>
    %315 = arith.mulf %292, %314 : vector<32x128xf32>
    %316 = arith.addf %313, %315 : vector<32x128xf32>
    %317 = vector.extract_strided_slice %48 {offsets = [96, 0], sizes = [32, 128], strides = [1, 1]} : vector<128x128xf32> to vector<32x128xf32>
    %318 = arith.mulf %294, %317 : vector<32x128xf32>
    %319 = arith.addf %316, %318 : vector<32x128xf32>
    %320 = vector.extract_strided_slice %52 {offsets = [96, 0], sizes = [32, 128], strides = [1, 1]} : vector<128x128xf32> to vector<32x128xf32>
    %321 = arith.mulf %296, %320 : vector<32x128xf32>
    %322 = arith.addf %319, %321 : vector<32x128xf32>
    %323 = vector.extract_strided_slice %56 {offsets = [96, 0], sizes = [32, 128], strides = [1, 1]} : vector<128x128xf32> to vector<32x128xf32>
    %324 = arith.mulf %298, %323 : vector<32x128xf32>
    %325 = arith.addf %322, %324 : vector<32x128xf32>
    %326 = vector.extract_strided_slice %60 {offsets = [96, 0], sizes = [32, 128], strides = [1, 1]} : vector<128x128xf32> to vector<32x128xf32>
    %327 = arith.mulf %300, %326 : vector<32x128xf32>
    %328 = arith.addf %325, %327 : vector<32x128xf32>
    %329 = vector.extract_strided_slice %64 {offsets = [96, 0], sizes = [32, 128], strides = [1, 1]} : vector<128x128xf32> to vector<32x128xf32>
    %330 = arith.mulf %302, %329 : vector<32x128xf32>
    %331 = arith.addf %328, %330 : vector<32x128xf32>
    %332 = vector.extract_strided_slice %68 {offsets = [96, 0], sizes = [32, 128], strides = [1, 1]} : vector<128x128xf32> to vector<32x128xf32>
    %333 = arith.mulf %304, %332 : vector<32x128xf32>
    %334 = arith.addf %331, %333 : vector<32x128xf32>
    %335 = tpu.reciprocal %311 {approx = true} : vector<32x128xf32> -> vector<32x128xf32>
    %336 = arith.mulf %334, %335 : vector<32x128xf32>
    %c1_107 = arith.constant 1 : index
    %c0_108 = arith.constant 0 : index
    %c0_109 = arith.constant 0 : index
    %337 = vector.load %arg9[%c1_107, %c0_108, %c0_109] : memref<2x32x32xf32, #tpu.memory_space<vmem>>, vector<1x32x32xf32>
    %338 = vector.shape_cast %337 : vector<1x32x32xf32> to vector<32x32xf32>
    %cst_110 = arith.constant dense<0.000000e+00> : vector<32x128xf32>
    %339 = tpu.matmul %338, %336, %cst_110 {dimension_numbers = #tpu.dot_dimension_numbers<[1], [0], [0], [1], [0, 0, 1, 1], [], []>} : vector<32x32xf32>, vector<32x128xf32>, vector<32x128xf32> -> vector<32x128xf32>
    %c1_111 = arith.constant 1 : index
    %c0_112 = arith.constant 0 : index
    %c0_113 = arith.constant 0 : index
    %340 = vector.load %arg10[%c1_111, %c0_112, %c0_113] : memref<2x32x1xf32, #tpu.memory_space<vmem>>, vector<1x32x1xf32>
    %341 = vector.shape_cast %340 : vector<1x32x1xf32> to vector<32x1xf32>
    %342 = vector.broadcast %341 : vector<32x1xf32> to vector<32x128xf32>
    %343 = arith.addf %339, %342 : vector<32x128xf32>
    %344 = arith.addf %242, %343 : vector<32x128xf32>
    %c1_114 = arith.constant 1 : index
    %c0_115 = arith.constant 0 : index
    %c0_116 = arith.constant 0 : index
    %345 = vector.load %arg11[%c1_114, %c0_115, %c0_116] : memref<2x32x1xf32, #tpu.memory_space<vmem>>, vector<1x32x1xf32>
    %346 = vector.shape_cast %345 : vector<1x32x1xf32> to vector<32x1xf32>
    %c1_117 = arith.constant 1 : index
    %c0_118 = arith.constant 0 : index
    %c0_119 = arith.constant 0 : index
    %347 = vector.load %arg12[%c1_117, %c0_118, %c0_119] : memref<2x32x1xf32, #tpu.memory_space<vmem>>, vector<1x32x1xf32>
    %348 = vector.shape_cast %347 : vector<1x32x1xf32> to vector<32x1xf32>
    %cst_120 = arith.constant dense<0.000000e+00> : vector<128xf32>
    %349 = vector.multi_reduction <add>, %344, %cst_120 [0] : vector<32x128xf32> to vector<128xf32>
    %350 = vector.shape_cast %349 : vector<128xf32> to vector<1x128xf32>
    %cst_121 = arith.constant 3.200000e+01 : f32
    %351 = vector.broadcast %cst_121 : f32 to vector<1x128xf32>
    %352 = arith.divf %350, %351 : vector<1x128xf32>
    %353 = vector.broadcast %352 : vector<1x128xf32> to vector<32x128xf32>
    %354 = arith.subf %344, %353 : vector<32x128xf32>
    %355 = arith.mulf %354, %354 : vector<32x128xf32>
    %cst_122 = arith.constant dense<0.000000e+00> : vector<128xf32>
    %356 = vector.multi_reduction <add>, %355, %cst_122 [0] : vector<32x128xf32> to vector<128xf32>
    %357 = vector.shape_cast %356 : vector<128xf32> to vector<1x128xf32>
    %cst_123 = arith.constant 3.200000e+01 : f32
    %358 = vector.broadcast %cst_123 : f32 to vector<1x128xf32>
    %359 = arith.divf %357, %358 : vector<1x128xf32>
    %360 = vector.broadcast %352 : vector<1x128xf32> to vector<32x128xf32>
    %361 = arith.subf %344, %360 : vector<32x128xf32>
    %cst_124 = arith.constant 9.99999974E-6 : f32
    %362 = vector.broadcast %cst_124 : f32 to vector<1x128xf32>
    %363 = arith.addf %359, %362 : vector<1x128xf32>
    %364 = math.rsqrt %363 : vector<1x128xf32>
    %365 = vector.broadcast %364 : vector<1x128xf32> to vector<32x128xf32>
    %366 = arith.mulf %361, %365 : vector<32x128xf32>
    %367 = vector.broadcast %346 : vector<32x1xf32> to vector<32x128xf32>
    %368 = arith.mulf %366, %367 : vector<32x128xf32>
    %369 = vector.broadcast %348 : vector<32x1xf32> to vector<32x128xf32>
    %370 = arith.addf %368, %369 : vector<32x128xf32>
    %c1_125 = arith.constant 1 : index
    %c0_126 = arith.constant 0 : index
    %c0_127 = arith.constant 0 : index
    %371 = vector.load %arg13[%c1_125, %c0_126, %c0_127] : memref<2x64x32xf32, #tpu.memory_space<vmem>>, vector<1x64x32xf32>
    %372 = vector.shape_cast %371 : vector<1x64x32xf32> to vector<64x32xf32>
    %cst_128 = arith.constant dense<0.000000e+00> : vector<64x128xf32>
    %373 = tpu.matmul %372, %370, %cst_128 {dimension_numbers = #tpu.dot_dimension_numbers<[1], [0], [0], [1], [0, 0, 1, 1], [], []>} : vector<64x32xf32>, vector<32x128xf32>, vector<64x128xf32> -> vector<64x128xf32>
    %c1_129 = arith.constant 1 : index
    %c0_130 = arith.constant 0 : index
    %c0_131 = arith.constant 0 : index
    %374 = vector.load %arg14[%c1_129, %c0_130, %c0_131] : memref<2x64x1xf32, #tpu.memory_space<vmem>>, vector<1x64x1xf32>
    %375 = vector.shape_cast %374 : vector<1x64x1xf32> to vector<64x1xf32>
    %376 = vector.broadcast %375 : vector<64x1xf32> to vector<64x128xf32>
    %377 = arith.addf %373, %376 : vector<64x128xf32>
    %cst_132 = arith.constant 0.000000e+00 : f32
    %378 = vector.broadcast %cst_132 : f32 to vector<64x128xf32>
    %379 = arith.maximumf %377, %378 : vector<64x128xf32>
    %c1_133 = arith.constant 1 : index
    %c0_134 = arith.constant 0 : index
    %c0_135 = arith.constant 0 : index
    %380 = vector.load %arg15[%c1_133, %c0_134, %c0_135] : memref<2x32x64xf32, #tpu.memory_space<vmem>>, vector<1x32x64xf32>
    %381 = vector.shape_cast %380 : vector<1x32x64xf32> to vector<32x64xf32>
    %cst_136 = arith.constant dense<0.000000e+00> : vector<32x128xf32>
    %382 = tpu.matmul %381, %379, %cst_136 {dimension_numbers = #tpu.dot_dimension_numbers<[1], [0], [0], [1], [0, 0, 1, 1], [], []>} : vector<32x64xf32>, vector<64x128xf32>, vector<32x128xf32> -> vector<32x128xf32>
    %c1_137 = arith.constant 1 : index
    %c0_138 = arith.constant 0 : index
    %c0_139 = arith.constant 0 : index
    %383 = vector.load %arg16[%c1_137, %c0_138, %c0_139] : memref<2x32x1xf32, #tpu.memory_space<vmem>>, vector<1x32x1xf32>
    %384 = vector.shape_cast %383 : vector<1x32x1xf32> to vector<32x1xf32>
    %385 = vector.broadcast %384 : vector<32x1xf32> to vector<32x128xf32>
    %386 = arith.addf %382, %385 : vector<32x128xf32>
    %387 = arith.addf %370, %386 : vector<32x128xf32>
    %c1_140 = arith.constant 1 : index
    %c0_141 = arith.constant 0 : index
    %c0_142 = arith.constant 0 : index
    %388 = vector.load %arg17[%c1_140, %c0_141, %c0_142] : memref<2x32x1xf32, #tpu.memory_space<vmem>>, vector<1x32x1xf32>
    %389 = vector.shape_cast %388 : vector<1x32x1xf32> to vector<32x1xf32>
    %c1_143 = arith.constant 1 : index
    %c0_144 = arith.constant 0 : index
    %c0_145 = arith.constant 0 : index
    %390 = vector.load %arg18[%c1_143, %c0_144, %c0_145] : memref<2x32x1xf32, #tpu.memory_space<vmem>>, vector<1x32x1xf32>
    %391 = vector.shape_cast %390 : vector<1x32x1xf32> to vector<32x1xf32>
    %cst_146 = arith.constant dense<0.000000e+00> : vector<128xf32>
    %392 = vector.multi_reduction <add>, %387, %cst_146 [0] : vector<32x128xf32> to vector<128xf32>
    %393 = vector.shape_cast %392 : vector<128xf32> to vector<1x128xf32>
    %cst_147 = arith.constant 3.200000e+01 : f32
    %394 = vector.broadcast %cst_147 : f32 to vector<1x128xf32>
    %395 = arith.divf %393, %394 : vector<1x128xf32>
    %396 = vector.broadcast %395 : vector<1x128xf32> to vector<32x128xf32>
    %397 = arith.subf %387, %396 : vector<32x128xf32>
    %398 = arith.mulf %397, %397 : vector<32x128xf32>
    %cst_148 = arith.constant dense<0.000000e+00> : vector<128xf32>
    %399 = vector.multi_reduction <add>, %398, %cst_148 [0] : vector<32x128xf32> to vector<128xf32>
    %400 = vector.shape_cast %399 : vector<128xf32> to vector<1x128xf32>
    %cst_149 = arith.constant 3.200000e+01 : f32
    %401 = vector.broadcast %cst_149 : f32 to vector<1x128xf32>
    %402 = arith.divf %400, %401 : vector<1x128xf32>
    %403 = vector.broadcast %395 : vector<1x128xf32> to vector<32x128xf32>
    %404 = arith.subf %387, %403 : vector<32x128xf32>
    %cst_150 = arith.constant 9.99999974E-6 : f32
    %405 = vector.broadcast %cst_150 : f32 to vector<1x128xf32>
    %406 = arith.addf %402, %405 : vector<1x128xf32>
    %407 = math.rsqrt %406 : vector<1x128xf32>
    %408 = vector.broadcast %407 : vector<1x128xf32> to vector<32x128xf32>
    %409 = arith.mulf %404, %408 : vector<32x128xf32>
    %410 = vector.broadcast %389 : vector<32x1xf32> to vector<32x128xf32>
    %411 = arith.mulf %409, %410 : vector<32x128xf32>
    %412 = vector.broadcast %391 : vector<32x1xf32> to vector<32x128xf32>
    %413 = arith.addf %411, %412 : vector<32x128xf32>
    %c0_151 = arith.constant 0 : index
    %c0_152 = arith.constant 0 : index
    %414 = vector.load %arg19[%c0_151, %c0_152] : memref<32x128xf32, #tpu.memory_space<vmem>>, vector<32x128xf32>
    tpu.vector_store %arg19[%c0_151, %c0_152], %413 {strides = array<i32>} : memref<32x128xf32, #tpu.memory_space<vmem>>, vector<32x128xf32>,
    return
  }
  func.func @transform_0(%arg0: i32) -> (i32, i32) {
    %c0_i32 = arith.constant 0 : i32
    %c0_i32_0 = arith.constant 0 : i32
    return %c0_i32, %arg0 : i32, i32
  }
  func.func @transform_1(%arg0: i32) -> (i32, i32, i32) {
    %c0_i32 = arith.constant 0 : i32
    %c0_i32_0 = arith.constant 0 : i32
    %c0_i32_1 = arith.constant 0 : i32
    return %c0_i32, %c0_i32_0, %arg0 : i32, i32, i32
  }
  func.func @transform_2(%arg0: i32) -> (i32, i32) {
    %c0_i32 = arith.constant 0 : i32
    %c0_i32_0 = arith.constant 0 : i32
    %c0_i32_1 = arith.constant 0 : i32
    return %c0_i32, %c0_i32_0 : i32, i32
  }
  func.func @transform_3(%arg0: i32) -> (i32, i32) {
    %c0_i32 = arith.constant 0 : i32
    %c0_i32_0 = arith.constant 0 : i32
    %c0_i32_1 = arith.constant 0 : i32
    return %c0_i32, %c0_i32_0 : i32, i32
  }
  func.func @transform_4(%arg0: i32) -> (i32, i32) {
    %c0_i32 = arith.constant 0 : i32
    %c0_i32_0 = arith.constant 0 : i32
    %c0_i32_1 = arith.constant 0 : i32
    return %c0_i32, %c0_i32_0 : i32, i32
  }
  func.func @transform_5(%arg0: i32) -> (i32, i32) {
    %c0_i32 = arith.constant 0 : i32
    %c0_i32_0 = arith.constant 0 : i32
    %c0_i32_1 = arith.constant 0 : i32
    return %c0_i32, %c0_i32_0 : i32, i32
  }
  func.func @transform_6(%arg0: i32) -> (i32, i32, i32) {
    %c0_i32 = arith.constant 0 : i32
    %c0_i32_0 = arith.constant 0 : i32
    %c0_i32_1 = arith.constant 0 : i32
    %c0_i32_2 = arith.constant 0 : i32
    return %c0_i32, %c0_i32_0, %c0_i32_1 : i32, i32, i32
  }
  func.func @transform_7(%arg0: i32) -> (i32, i32, i32) {
    %c0_i32 = arith.constant 0 : i32
    %c0_i32_0 = arith.constant 0 : i32
    %c0_i32_1 = arith.constant 0 : i32
    %c0_i32_2 = arith.constant 0 : i32
    return %c0_i32, %c0_i32_0, %c0_i32_1 : i32, i32, i32
  }
  func.func @transform_8(%arg0: i32) -> (i32, i32, i32) {
    %c0_i32 = arith.constant 0 : i32
    %c0_i32_0 = arith.constant 0 : i32
    %c0_i32_1 = arith.constant 0 : i32
    %c0_i32_2 = arith.constant 0 : i32
    return %c0_i32, %c0_i32_0, %c0_i32_1 : i32, i32, i32
  }
  func.func @transform_9(%arg0: i32) -> (i32, i32, i32) {
    %c0_i32 = arith.constant 0 : i32
    %c0_i32_0 = arith.constant 0 : i32
    %c0_i32_1 = arith.constant 0 : i32
    %c0_i32_2 = arith.constant 0 : i32
    return %c0_i32, %c0_i32_0, %c0_i32_1 : i32, i32, i32
  }
  func.func @transform_10(%arg0: i32) -> (i32, i32, i32) {
    %c0_i32 = arith.constant 0 : i32
    %c0_i32_0 = arith.constant 0 : i32
    %c0_i32_1 = arith.constant 0 : i32
    %c0_i32_2 = arith.constant 0 : i32
    return %c0_i32, %c0_i32_0, %c0_i32_1 : i32, i32, i32
  }
  func.func @transform_11(%arg0: i32) -> (i32, i32, i32) {
    %c0_i32 = arith.constant 0 : i32
    %c0_i32_0 = arith.constant 0 : i32
    %c0_i32_1 = arith.constant 0 : i32
    %c0_i32_2 = arith.constant 0 : i32
    return %c0_i32, %c0_i32_0, %c0_i32_1 : i32, i32, i32
  }
  func.func @transform_12(%arg0: i32) -> (i32, i32, i32) {
    %c0_i32 = arith.constant 0 : i32
    %c0_i32_0 = arith.constant 0 : i32
    %c0_i32_1 = arith.constant 0 : i32
    %c0_i32_2 = arith.constant 0 : i32
    return %c0_i32, %c0_i32_0, %c0_i32_1 : i32, i32, i32
  }
  func.func @transform_13(%arg0: i32) -> (i32, i32, i32) {
    %c0_i32 = arith.constant 0 : i32
    %c0_i32_0 = arith.constant 0 : i32
    %c0_i32_1 = arith.constant 0 : i32
    %c0_i32_2 = arith.constant 0 : i32
    return %c0_i32, %c0_i32_0, %c0_i32_1 : i32, i32, i32
  }
  func.func @transform_14(%arg0: i32) -> (i32, i32, i32) {
    %c0_i32 = arith.constant 0 : i32
    %c0_i32_0 = arith.constant 0 : i32
    %c0_i32_1 = arith.constant 0 : i32
    %c0_i32_2 = arith.constant 0 : i32
    return %c0_i32, %c0_i32_0, %c0_i32_1 : i32, i32, i32
  }
  func.func @transform_15(%arg0: i32) -> (i32, i32, i32) {
    %c0_i32 = arith.constant 0 : i32
    %c0_i32_0 = arith.constant 0 : i32
    %c0_i32_1 = arith.constant 0 : i32
    %c0_i32_2 = arith.constant 0 : i32
    return %c0_i32, %c0_i32_0, %c0_i32_1 : i32, i32, i32
  }
  func.func @transform_16(%arg0: i32) -> (i32, i32, i32) {
    %c0_i32 = arith.constant 0 : i32
    %c0_i32_0 = arith.constant 0 : i32
    %c0_i32_1 = arith.constant 0 : i32
    %c0_i32_2 = arith.constant 0 : i32
    return %c0_i32, %c0_i32_0, %c0_i32_1 : i32, i32, i32
  }
  func.func @transform_17(%arg0: i32) -> (i32, i32, i32) {
    %c0_i32 = arith.constant 0 : i32
    %c0_i32_0 = arith.constant 0 : i32
    %c0_i32_1 = arith.constant 0 : i32
    %c0_i32_2 = arith.constant 0 : i32
    return %c0_i32, %c0_i32_0, %c0_i32_1 : i32, i32, i32
  }
  func.func @transform_18(%arg0: i32) -> (i32, i32) {
    %c0_i32 = arith.constant 0 : i32
    %c0_i32_0 = arith.constant 0 : i32
    return %c0_i32, %arg0 : i32, i32
  }
}

</mosaic_0001>

<llo_original>
// kernel: tpu_custom_call.1
$region0: #{tpu_custom_call.1}
  #allocation0 [shape = 'u32[]', space=smem, size = 0x4, offset = 0x4, fixed_abs, tag = 'smem constant byte address 0x4 - core index']
  #allocation1 [shape = 'u32[144,128]{1,0:T(1,128)}', space=vmem, size = 0x12000, scoped, tag = 'internal scratch']
  %s0 = inlined_call_operand.vmem [shape: bf16[256,128], index: 0, kind: input, shape index: {}]
  %s1 = inlined_call_operand.vmem [shape: f32[8,1,128], index: 1, kind: input, shape index: {}]
  %s2 = inlined_call_operand.vmem [shape: f32[32,1], index: 2, kind: input, shape index: {}]
  %s3 = inlined_call_operand.vmem [shape: f32[128,32], index: 3, kind: input, shape index: {}]
  %s4 = inlined_call_operand.vmem [shape: f32[128,1], index: 4, kind: input, shape index: {}]
  %s5 = inlined_call_operand.vmem [shape: f32[32,32], index: 5, kind: input, shape index: {}]
  %s6 = inlined_call_operand.vmem [shape: f32[2,32,32], index: 6, kind: input, shape index: {}]
  %s7 = inlined_call_operand.vmem [shape: f32[2,32,1], index: 7, kind: input, shape index: {}]
  %s8 = inlined_call_operand.vmem [shape: f32[2,32,32], index: 8, kind: input, shape index: {}]
  %s9 = inlined_call_operand.vmem [shape: f32[2,32,1], index: 9, kind: input, shape index: {}]
  %s10 = inlined_call_operand.vmem [shape: f32[2,32,1], index: 10, kind: input, shape index: {}]
  %s11 = inlined_call_operand.vmem [shape: f32[2,32,1], index: 11, kind: input, shape index: {}]
  %s12 = inlined_call_operand.vmem [shape: f32[2,64,32], index: 12, kind: input, shape index: {}]
  %s13 = inlined_call_operand.vmem [shape: f32[2,64,1], index: 13, kind: input, shape index: {}]
  %s14 = inlined_call_operand.vmem [shape: f32[2,32,64], index: 14, kind: input, shape index: {}]
  %s15 = inlined_call_operand.vmem [shape: f32[2,32,1], index: 15, kind: input, shape index: {}]
  %s16 = inlined_call_operand.vmem [shape: f32[2,32,1], index: 16, kind: input, shape index: {}]
  %s17 = inlined_call_operand.vmem [shape: f32[2,32,1], index: 17, kind: input, shape index: {}]
  %s18 = inlined_call_operand.hbm [shape: f32[32,128], index: 18, kind: output, shape index: {}]
  %s19 = sld [smem:[#allocation0]]
  $region82: #{tpu_custom_call.1} parent=0
    _
  %s21 = ssub.s32 1, %s19
  %s22 = scalar_select 0, %s21, %s19
  $region1: #{tpu_custom_call.1} parent=0
    #allocation2 [shape = 'u8[16384]{0}', space=vmem, size = 0x4000, scoped, tag = 'output window, operand 0, single buffered']
    #allocation3 [shape = 's32[1]{0}', space=sflag, size = 0x4, scoped, tag = 'scoped memory for tpu_custom_call.1']
    %23 = vsyncpa [#allocation3], 0
    // Predicated region
    $region2: #{tpu_custom_call.1} parent=1 // pred_check
      _
    $region3: #{tpu_custom_call.1} parent=1 // pred_check_branch
      %25 = sbr.rel (0) target = $region5
    $region4: #{tpu_custom_call.1} parent=1 // pred_region
      _
    $region5: #{tpu_custom_call.1} parent=1 // pred_fallthru
      _
    // Predicated region
    $region6: #{tpu_custom_call.1} parent=1 // pred_check
      _
    $region7: #{tpu_custom_call.1} parent=1 // pred_check_branch
      %27 = sbr.rel (0) target = $region9
    $region8: #{tpu_custom_call.1} parent=1 // pred_region
      _
    $region9: #{tpu_custom_call.1} parent=1 // pred_fallthru
      _
    // Predicated region
    $region10: #{tpu_custom_call.1} parent=1 // pred_check
      _
    $region11: #{tpu_custom_call.1} parent=1 // pred_check_branch
      %29 = sbr.rel (0) target = $region13
    $region12: #{tpu_custom_call.1} parent=1 // pred_region
      _
    $region13: #{tpu_custom_call.1} parent=1 // pred_fallthru
      _
    // Predicated region
    $region14: #{tpu_custom_call.1} parent=1 // pred_check
      _
    $region15: #{tpu_custom_call.1} parent=1 // pred_check_branch
      %31 = sbr.rel (0) target = $region17
    $region16: #{tpu_custom_call.1} parent=1 // pred_region
      _
    $region17: #{tpu_custom_call.1} parent=1 // pred_fallthru
      _
    // Predicated region
    $region18: #{tpu_custom_call.1} parent=1 // pred_check
      _
    $region19: #{tpu_custom_call.1} parent=1 // pred_check_branch
      %33 = sbr.rel (0) target = $region21
    $region20: #{tpu_custom_call.1} parent=1 // pred_region
      _
    $region21: #{tpu_custom_call.1} parent=1 // pred_fallthru
      _
    // Predicated region
    $region22: #{tpu_custom_call.1} parent=1 // pred_check
      _
    $region23: #{tpu_custom_call.1} parent=1 // pred_check_branch
      %35 = sbr.rel (0) target = $region25
    $region24: #{tpu_custom_call.1} parent=1 // pred_region
      _
    $region25: #{tpu_custom_call.1} parent=1 // pred_fallthru
      _
    // Predicated region
    $region26: #{tpu_custom_call.1} parent=1 // pred_check
      _
    $region27: #{tpu_custom_call.1} parent=1 // pred_check_branch
      %37 = sbr.rel (0) target = $region29
    $region28: #{tpu_custom_call.1} parent=1 // pred_region
      _
    $region29: #{tpu_custom_call.1} parent=1 // pred_fallthru
      _
    // Predicated region
    $region30: #{tpu_custom_call.1} parent=1 // pred_check
      _
    $region31: #{tpu_custom_call.1} parent=1 // pred_check_branch
      %39 = sbr.rel (0) target = $region33
    $region32: #{tpu_custom_call.1} parent=1 // pred_region
      _
    $region33: #{tpu_custom_call.1} parent=1 // pred_fallthru
      _
    // Predicated region
    $region34: #{tpu_custom_call.1} parent=1 // pred_check
      _
    $region35: #{tpu_custom_call.1} parent=1 // pred_check_branch
      %41 = sbr.rel (0) target = $region37
    $region36: #{tpu_custom_call.1} parent=1 // pred_region
      _
    $region37: #{tpu_custom_call.1} parent=1 // pred_fallthru
      _
    // Predicated region
    $region38: #{tpu_custom_call.1} parent=1 // pred_check
      _
    $region39: #{tpu_custom_call.1} parent=1 // pred_check_branch
      %43 = sbr.rel (0) target = $region41
    $region40: #{tpu_custom_call.1} parent=1 // pred_region
      _
    $region41: #{tpu_custom_call.1} parent=1 // pred_fallthru
      _
    // Predicated region
    $region42: #{tpu_custom_call.1} parent=1 // pred_check
      _
    $region43: #{tpu_custom_call.1} parent=1 // pred_check_branch
      %45 = sbr.rel (0) target = $region45
    $region44: #{tpu_custom_call.1} parent=1 // pred_region
      _
    $region45: #{tpu_custom_call.1} parent=1 // pred_fallthru
      _
    // Predicated region
    $region46: #{tpu_custom_call.1} parent=1 // pred_check
      _
    $region47: #{tpu_custom_call.1} parent=1 // pred_check_branch
      %47 = sbr.rel (0) target = $region49
    $region48: #{tpu_custom_call.1} parent=1 // pred_region
      _
    $region49: #{tpu_custom_call.1} parent=1 // pred_fallthru
      _
    // Predicated region
    $region50: #{tpu_custom_call.1} parent=1 // pred_check
      _
    $region51: #{tpu_custom_call.1} parent=1 // pred_check_branch
      %49 = sbr.rel (0) target = $region53
    $region52: #{tpu_custom_call.1} parent=1 // pred_region
      _
    $region53: #{tpu_custom_call.1} parent=1 // pred_fallthru
      _
    // Predicated region
    $region54: #{tpu_custom_call.1} parent=1 // pred_check
      _
    $region55: #{tpu_custom_call.1} parent=1 // pred_check_branch
      %51 = sbr.rel (0) target = $region57
    $region56: #{tpu_custom_call.1} parent=1 // pred_region
      _
    $region57: #{tpu_custom_call.1} parent=1 // pred_fallthru
      _
    // Predicated region
    $region58: #{tpu_custom_call.1} parent=1 // pred_check
      _
    $region59: #{tpu_custom_call.1} parent=1 // pred_check_branch
      %53 = sbr.rel (0) target = $region61
    $region60: #{tpu_custom_call.1} parent=1 // pred_region
      _
    $region61: #{tpu_custom_call.1} parent=1 // pred_fallthru
      _
    // Predicated region
    $region62: #{tpu_custom_call.1} parent=1 // pred_check
      _
    $region63: #{tpu_custom_call.1} parent=1 // pred_check_branch
      %55 = sbr.rel (0) target = $region65
    $region64: #{tpu_custom_call.1} parent=1 // pred_region
      _
    $region65: #{tpu_custom_call.1} parent=1 // pred_fallthru
      _
    // Predicated region
    $region66: #{tpu_custom_call.1} parent=1 // pred_check
      _
    $region67: #{tpu_custom_call.1} parent=1 // pred_check_branch
      %57 = sbr.rel (0) target = $region69
    $region68: #{tpu_custom_call.1} parent=1 // pred_region
      _
    $region69: #{tpu_custom_call.1} parent=1 // pred_fallthru
      _
    // Predicated region
    $region70: #{tpu_custom_call.1} parent=1 // pred_check
      _
    $region71: #{tpu_custom_call.1} parent=1 // pred_check_branch
      %59 = sbr.rel (0) target = $region73
    $region72: #{tpu_custom_call.1} parent=1 // pred_region
      _
    $region73: #{tpu_custom_call.1} parent=1 // pred_fallthru
      _
    %v60 = vld [vmem:[%s0] sm:$0xf]
    %v61 = vld [vmem:[%s0 + $0x4] sm:$0xf]
    %v62 = vld [vmem:[%s0 + $0x8] sm:$0xf]
    %v63 = vld [vmem:[%s0 + $0xc] sm:$0xf]
    %v64 = vld [vmem:[%s0 + $0x10] sm:$0xf]
    %v65 = vld [vmem:[%s0 + $0x14] sm:$0xf]
    %v66 = vld [vmem:[%s0 + $0x18] sm:$0xf]
    %v67 = vld [vmem:[%s0 + $0x1c] sm:$0xf]
    %v68 = vld [vmem:[%s0 + $0x20] sm:$0xf]
    %v69 = vld [vmem:[%s0 + $0x24] sm:$0xf]
    %v70 = vld [vmem:[%s0 + $0x28] sm:$0xf]
    %v71 = vld [vmem:[%s0 + $0x2c] sm:$0xf]
    %v72 = vld [vmem:[%s0 + $0x30] sm:$0xf]
    %v73 = vld [vmem:[%s0 + $0x34] sm:$0xf]
    %v74 = vld [vmem:[%s0 + $0x38] sm:$0xf]
    %v75 = vld [vmem:[%s0 + $0x3c] sm:$0xf]
    %v76 = vld [vmem:[%s0 + $0x40] sm:$0xf]
    %v77 = vld [vmem:[%s0 + $0x44] sm:$0xf]
    %v78 = vld [vmem:[%s0 + $0x48] sm:$0xf]
    %v79 = vld [vmem:[%s0 + $0x4c] sm:$0xf]
    %v80 = vld [vmem:[%s0 + $0x50] sm:$0xf]
    %v81 = vld [vmem:[%s0 + $0x54] sm:$0xf]
    %v82 = vld [vmem:[%s0 + $0x58] sm:$0xf]
    %v83 = vld [vmem:[%s0 + $0x5c] sm:$0xf]
    %v84 = vld [vmem:[%s0 + $0x60] sm:$0xf]
    %v85 = vld [vmem:[%s0 + $0x64] sm:$0xf]
    %v86 = vld [vmem:[%s0 + $0x68] sm:$0xf]
    %v87 = vld [vmem:[%s0 + $0x6c] sm:$0xf]
    %v88 = vld [vmem:[%s0 + $0x70] sm:$0xf]
    %v89 = vld [vmem:[%s0 + $0x74] sm:$0xf]
    %v90 = vld [vmem:[%s0 + $0x78] sm:$0xf]
    %v91 = vld [vmem:[%s0 + $0x7c] sm:$0xf]
    %v92 = vunpack.c.l.bf16 %v60
    %v93 = vunpack.c.l.bf16 %v61
    %v94 = vunpack.c.l.bf16 %v62
    %v95 = vunpack.c.l.bf16 %v63
    %v96 = vunpack.c.l.bf16 %v64
    %v97 = vunpack.c.l.bf16 %v65
    %v98 = vunpack.c.l.bf16 %v66
    %v99 = vunpack.c.l.bf16 %v67
    %v100 = vunpack.c.l.bf16 %v68
    %v101 = vunpack.c.l.bf16 %v69
    %v102 = vunpack.c.l.bf16 %v70
    %v103 = vunpack.c.l.bf16 %v71
    %v104 = vunpack.c.l.bf16 %v72
    %v105 = vunpack.c.l.bf16 %v73
    %v106 = vunpack.c.l.bf16 %v74
    %v107 = vunpack.c.l.bf16 %v75
    %v108 = vunpack.c.l.bf16 %v76
    %v109 = vunpack.c.l.bf16 %v77
    %v110 = vunpack.c.l.bf16 %v78
    %v111 = vunpack.c.l.bf16 %v79
    %v112 = vunpack.c.l.bf16 %v80
    %v113 = vunpack.c.l.bf16 %v81
    %v114 = vunpack.c.l.bf16 %v82
    %v115 = vunpack.c.l.bf16 %v83
    %v116 = vunpack.c.l.bf16 %v84
    %v117 = vunpack.c.l.bf16 %v85
    %v118 = vunpack.c.l.bf16 %v86
    %v119 = vunpack.c.l.bf16 %v87
    %v120 = vunpack.c.l.bf16 %v88
    %v121 = vunpack.c.l.bf16 %v89
    %v122 = vunpack.c.l.bf16 %v90
    %v123 = vunpack.c.l.bf16 %v91
    %v124 = vld [vmem:[%s3] sm:$0xff]
    %v125 = vld [vmem:[%s3 + $0x8] sm:$0xff]
    %v126 = vld [vmem:[%s3 + $0x10] sm:$0xff]
    %v127 = vld [vmem:[%s3 + $0x18] sm:$0xff]
    %v128 = vld [vmem:[%s3 + $0x20] sm:$0xff]
    %v129 = vld [vmem:[%s3 + $0x28] sm:$0xff]
    %v130 = vld [vmem:[%s3 + $0x30] sm:$0xff]
    %v131 = vld [vmem:[%s3 + $0x38] sm:$0xff]
    %v132 = vld [vmem:[%s3 + $0x40] sm:$0xff]
    %v133 = vld [vmem:[%s3 + $0x48] sm:$0xff]
    %v134 = vld [vmem:[%s3 + $0x50] sm:$0xff]
    %v135 = vld [vmem:[%s3 + $0x58] sm:$0xff]
    %v136 = vld [vmem:[%s3 + $0x60] sm:$0xff]
    %v137 = vld [vmem:[%s3 + $0x68] sm:$0xff]
    %v138 = vld [vmem:[%s3 + $0x70] sm:$0xff]
    %v139 = vld [vmem:[%s3 + $0x78] sm:$0xff]
    %v140 = vld [vmem:[%s4] sm:$0xff]
    %v141 = vld [vmem:[%s4 + $0x8] sm:$0xff]
    %v142 = vld [vmem:[%s4 + $0x10] sm:$0xff]
    %v143 = vld [vmem:[%s4 + $0x18] sm:$0xff]
    %v144 = vld [vmem:[%s4 + $0x20] sm:$0xff]
    %v145 = vld [vmem:[%s4 + $0x28] sm:$0xff]
    %v146 = vld [vmem:[%s4 + $0x30] sm:$0xff]
    %v147 = vld [vmem:[%s4 + $0x38] sm:$0xff]
    %v148 = vld [vmem:[%s4 + $0x40] sm:$0xff]
    %v149 = vld [vmem:[%s4 + $0x48] sm:$0xff]
    %v150 = vld [vmem:[%s4 + $0x50] sm:$0xff]
    %v151 = vld [vmem:[%s4 + $0x58] sm:$0xff]
    %v152 = vld [vmem:[%s4 + $0x60] sm:$0xff]
    %v153 = vld [vmem:[%s4 + $0x68] sm:$0xff]
    %v154 = vld [vmem:[%s4 + $0x70] sm:$0xff]
    %v155 = vld [vmem:[%s4 + $0x78] sm:$0xff]
    %v156 = vld [vmem:[%s5] sm:$0xff]
    %v157 = vld [vmem:[%s5 + $0x8] sm:$0xff]
    %v158 = vld [vmem:[%s5 + $0x10] sm:$0xff]
    %v159 = vld [vmem:[%s5 + $0x18] sm:$0xff]
    %v160 = vld [vmem:[%s1] sm:$0x1]
    %v162 = vlaneseq
    %v163 = vshrl.u32 %v162, 7
    %v164 = vsub.s32 0, %v163
    %v165 = vrot.slane %v160, %v164
    %s167 = scalar_lea.vmem %s1, 1
    %v168 = vld [vmem:[%s167] sm:$0x1]
    %v170 = vlaneseq
    %v171 = vshrl.u32 %v170, 7
    %v172 = vsub.s32 0, %v171
    %v173 = vrot.slane %v168, %v172
    %s175 = scalar_lea.vmem %s1, 2
    %v176 = vld [vmem:[%s175] sm:$0x1]
    %v178 = vlaneseq
    %v179 = vshrl.u32 %v178, 7
    %v180 = vsub.s32 0, %v179
    %v181 = vrot.slane %v176, %v180
    %s183 = scalar_lea.vmem %s1, 3
    %v184 = vld [vmem:[%s183] sm:$0x1]
    %v186 = vlaneseq
    %v187 = vshrl.u32 %v186, 7
    %v188 = vsub.s32 0, %v187
    %v189 = vrot.slane %v184, %v188
    %s191 = scalar_lea.vmem %s1, 4
    %v192 = vld [vmem:[%s191] sm:$0x1]
    %v194 = vlaneseq
    %v195 = vshrl.u32 %v194, 7
    %v196 = vsub.s32 0, %v195
    %v197 = vrot.slane %v192, %v196
    %s199 = scalar_lea.vmem %s1, 5
    %v200 = vld [vmem:[%s199] sm:$0x1]
    %v202 = vlaneseq
    %v203 = vshrl.u32 %v202, 7
    %v204 = vsub.s32 0, %v203
    %v205 = vrot.slane %v200, %v204
    %s207 = scalar_lea.vmem %s1, 6
    %v208 = vld [vmem:[%s207] sm:$0x1]
    %v210 = vlaneseq
    %v211 = vshrl.u32 %v210, 7
    %v212 = vsub.s32 0, %v211
    %v213 = vrot.slane %v208, %v212
    %s215 = scalar_lea.vmem %s1, 7
    %v216 = vld [vmem:[%s215] sm:$0x1]
    %v218 = vlaneseq
    %v219 = vshrl.u32 %v218, 7
    %v220 = vsub.s32 0, %v219
    %v221 = vrot.slane %v216, %v220
    %224 = vset.pattern.permute.xlu0 0
    %225 = vperm.xlu0 %224, %v140
    %v226 = vpop.permute.xlu0 %225
    %229 = vset.pattern.permute.xlu0 0
    %230 = vperm.xlu0 %229, %v141
    %v231 = vpop.permute.xlu0 %230
    %234 = vset.pattern.permute.xlu0 0
    %235 = vperm.xlu0 %234, %v142
    %v236 = vpop.permute.xlu0 %235
    %239 = vset.pattern.permute.xlu0 0
    %240 = vperm.xlu0 %239, %v143
    %v241 = vpop.permute.xlu0 %240
    %244 = vset.pattern.permute.xlu0 0
    %245 = vperm.xlu0 %244, %v144
    %v246 = vpop.permute.xlu0 %245
    %249 = vset.pattern.permute.xlu0 0
    %250 = vperm.xlu0 %249, %v145
    %v251 = vpop.permute.xlu0 %250
    %254 = vset.pattern.permute.xlu0 0
    %255 = vperm.xlu0 %254, %v146
    %v256 = vpop.permute.xlu0 %255
    %259 = vset.pattern.permute.xlu0 0
    %260 = vperm.xlu0 %259, %v147
    %v261 = vpop.permute.xlu0 %260
    %264 = vset.pattern.permute.xlu0 0
    %265 = vperm.xlu0 %264, %v148
    %v266 = vpop.permute.xlu0 %265
    %269 = vset.pattern.permute.xlu0 0
    %270 = vperm.xlu0 %269, %v149
    %v271 = vpop.permute.xlu0 %270
    %274 = vset.pattern.permute.xlu0 0
    %275 = vperm.xlu0 %274, %v150
    %v276 = vpop.permute.xlu0 %275
    %279 = vset.pattern.permute.xlu0 0
    %280 = vperm.xlu0 %279, %v151
    %v281 = vpop.permute.xlu0 %280
    %284 = vset.pattern.permute.xlu0 0
    %285 = vperm.xlu0 %284, %v152
    %v286 = vpop.permute.xlu0 %285
    %289 = vset.pattern.permute.xlu0 0
    %290 = vperm.xlu0 %289, %v153
    %v291 = vpop.permute.xlu0 %290
    %294 = vset.pattern.permute.xlu0 0
    %295 = vperm.xlu0 %294, %v154
    %v296 = vpop.permute.xlu0 %295
    %299 = vset.pattern.permute.xlu0 0
    %300 = vperm.xlu0 %299, %v155
    %v301 = vpop.permute.xlu0 %300
    %vm303 = vcmask 261120
    %v305 = vsel %vm303, %v124, 0
    %v308 = vsel %vm303, %v125, 0
    %v311 = vsel %vm303, %v126, 0
    %v314 = vsel %vm303, %v127, 0
    %v317 = vsel %vm303, %v128, 0
    %v320 = vsel %vm303, %v129, 0
    %v323 = vsel %vm303, %v130, 0
    %v326 = vsel %vm303, %v131, 0
    %v329 = vsel %vm303, %v132, 0
    %v332 = vsel %vm303, %v133, 0
    %v335 = vsel %vm303, %v134, 0
    %v338 = vsel %vm303, %v135, 0
    %v341 = vsel %vm303, %v136, 0
    %v344 = vsel %vm303, %v137, 0
    %v347 = vsel %vm303, %v138, 0
    %v350 = vsel %vm303, %v139, 0
    %352 = vmatprep.subr.mxu0 0.0
    %353 = vmatpush1.msra.mxu0 0.0
    %354 = vmatprep.subr.mxu0 0.0
    %355 = vmatpush1.msra.mxu0 0.0
    %356 = vmatprep.subr.mxu0 0.0
    %357 = vmatpush1.msra.mxu0 0.0
    %358 = vmatprep.subr.mxu0 0.0
    %359 = vmatpush1.msra.mxu0 0.0
    %360 = vmatprep.subr.mxu0 0.0
    %361 = vmatpush1.msra.mxu0 0.0
    %362 = vmatprep.subr.mxu0 0.0
    %363 = vmatpush1.msra.mxu0 0.0
    %364 = vmatprep.subr.mxu0 0.0
    %365 = vmatpush1.msra.mxu0 0.0
    %366 = vmatprep.subr.mxu0 0.0
    %367 = vmatpush1.msra.mxu0 0.0
    %368 = vmatprep.subr.mxu0 0.0
    %369 = vmatpush1.msra.mxu0 0.0
    %370 = vmatprep.subr.mxu0 0.0
    %371 = vmatpush1.msra.mxu0 0.0
    %372 = vmatprep.subr.mxu0 0.0
    %373 = vmatpush1.msra.mxu0 0.0
    %374 = vmatprep.subr.mxu0 0.0
    %375 = vmatpush1.msra.mxu0 0.0
    %376 = vmatprep.subr.mxu0 0.0
    %377 = vmatpush1.msra.mxu0 %v95
    %378 = vmatprep.subr.mxu0 0.0
    %379 = vmatpush1.msra.mxu0 %v94
    %380 = vmatprep.subr.mxu0 0.0
    %381 = vmatpush1.msra.mxu0 %v93
    %382 = vmatprep.subr.mxu0 0.0
    %383 = vmatpush1.msra.mxu0 %v92
    %384 = vmatprep.subr.mxu0 0.0
    %385 = vmatpush2.msra.mxu0 0.0
    %386 = vmatprep.subr.mxu0 0.0
    %387 = vmatpush2.msra.mxu0 0.0
    %388 = vmatprep.subr.mxu0 0.0
    %389 = vmatpush2.msra.mxu0 0.0
    %390 = vmatprep.subr.mxu0 0.0
    %391 = vmatpush2.msra.mxu0 0.0
    %392 = vmatprep.subr.mxu0 0.0
    %393 = vmatpush2.msra.mxu0 0.0
    %394 = vmatprep.subr.mxu0 0.0
    %395 = vmatpush2.msra.mxu0 0.0
    %396 = vmatprep.subr.mxu0 0.0
    %397 = vmatpush2.msra.mxu0 0.0
    %398 = vmatprep.subr.mxu0 0.0
    %399 = vmatpush2.msra.mxu0 0.0
    %400 = vmatprep.subr.mxu0 0.0
    %401 = vmatpush2.msra.mxu0 0.0
    %402 = vmatprep.subr.mxu0 0.0
    %403 = vmatpush2.msra.mxu0 0.0
    %404 = vmatprep.subr.mxu0 0.0
    %405 = vmatpush2.msra.mxu0 0.0
    %406 = vmatprep.subr.mxu0 0.0
    %407 = vmatpush2.msra.mxu0 0.0
    %408 = vmatprep.subr.mxu0 0.0
    %409 = vmatpush2.msra.mxu0 0.0
    %410 = vmatprep.subr.mxu0 0.0
    %411 = vmatpush2.msra.mxu0 0.0
    %412 = vmatprep.subr.mxu0 0.0
    %413 = vmatpush2.msra.mxu0 0.0
    %414 = vmatprep.subr.mxu0 0.0
    %415 = vmatpush2.msra.mxu0 0.0
    %416 = vmatprep.mubr.f32.mxu0 0.0
    %417 = vmatmul.mubr.f32.gmra.mxu0 %v305
    %v418 = vpop.f32.mrf.mxu0
    %v419 = vadd.f32 %v226, %v418
    %v420 = vpop.f32.mrf.mxu0
    %421 = vmatprep.mubr.f32.mxu0 0.0
    %422 = vmatmul.mubr.f32.gmra.mxu0 %v308
    %v423 = vpop.f32.mrf.mxu0
    %v424 = vadd.f32 %v231, %v423
    %v425 = vpop.f32.mrf.mxu0
    %426 = vmatprep.mubr.f32.mxu0 0.0
    %427 = vmatmul.mubr.f32.gmra.mxu0 %v311
    %v428 = vpop.f32.mrf.mxu0
    %v429 = vadd.f32 %v236, %v428
    %v430 = vpop.f32.mrf.mxu0
    %431 = vmatprep.mubr.f32.mxu0 0.0
    %432 = vmatmul.mubr.f32.gmra.mxu0 %v314
    %v433 = vpop.f32.mrf.mxu0
    %v434 = vadd.f32 %v241, %v433
    %v435 = vpop.f32.mrf.mxu0
    %436 = vmatprep.mubr.f32.mxu0 0.0
    %437 = vmatmul.mubr.f32.gmra.mxu0 %v317
    %v438 = vpop.f32.mrf.mxu0
    %v439 = vadd.f32 %v246, %v438
    %v440 = vpop.f32.mrf.mxu0
    %441 = vmatprep.mubr.f32.mxu0 0.0
    %442 = vmatmul.mubr.f32.gmra.mxu0 %v320
    %v443 = vpop.f32.mrf.mxu0
    %v444 = vadd.f32 %v251, %v443
    %v445 = vpop.f32.mrf.mxu0
    %446 = vmatprep.mubr.f32.mxu0 0.0
    %447 = vmatmul.mubr.f32.gmra.mxu0 %v323
    %v448 = vpop.f32.mrf.mxu0
    %v449 = vadd.f32 %v256, %v448
    %v450 = vpop.f32.mrf.mxu0
    %451 = vmatprep.mubr.f32.mxu0 0.0
    %452 = vmatmul.mubr.f32.gmra.mxu0 %v326
    %v453 = vpop.f32.mrf.mxu0
    %v454 = vadd.f32 %v261, %v453
    %v455 = vpop.f32.mrf.mxu0
    %456 = vmatprep.mubr.f32.mxu0 0.0
    %457 = vmatmul.mubr.f32.gmra.mxu0 %v329
    %v458 = vpop.f32.mrf.mxu0
    %v459 = vadd.f32 %v266, %v458
    %v460 = vpop.f32.mrf.mxu0
    %461 = vmatprep.mubr.f32.mxu0 0.0
    %462 = vmatmul.mubr.f32.gmra.mxu0 %v332
    %v463 = vpop.f32.mrf.mxu0
    %v464 = vadd.f32 %v271, %v463
    %v465 = vpop.f32.mrf.mxu0
    %466 = vmatprep.mubr.f32.mxu0 0.0
    %467 = vmatmul.mubr.f32.gmra.mxu0 %v335
    %v468 = vpop.f32.mrf.mxu0
    %v469 = vadd.f32 %v276, %v468
    %v470 = vpop.f32.mrf.mxu0
    %471 = vmatprep.mubr.f32.mxu0 0.0
    %472 = vmatmul.mubr.f32.gmra.mxu0 %v338
    %v473 = vpop.f32.mrf.mxu0
    %v474 = vadd.f32 %v281, %v473
    %v475 = vpop.f32.mrf.mxu0
    %476 = vmatprep.mubr.f32.mxu0 0.0
    %477 = vmatmul.mubr.f32.gmra.mxu0 %v341
    %v478 = vpop.f32.mrf.mxu0
    %v479 = vadd.f32 %v286, %v478
    %v480 = vpop.f32.mrf.mxu0
    %481 = vmatprep.mubr.f32.mxu0 0.0
    %482 = vmatmul.mubr.f32.gmra.mxu0 %v344
    %v483 = vpop.f32.mrf.mxu0
    %v484 = vadd.f32 %v291, %v483
    %v485 = vpop.f32.mrf.mxu0
    %486 = vmatprep.mubr.f32.mxu0 0.0
    %487 = vmatmul.mubr.f32.gmra.mxu0 %v347
    %v488 = vpop.f32.mrf.mxu0
    %v489 = vadd.f32 %v296, %v488
    %v490 = vpop.f32.mrf.mxu0
    %491 = vmatprep.mubr.f32.mxu0 0.0
    %492 = vmatmul.mubr.f32.gmra.mxu0 %v350
    %v493 = vpop.f32.mrf.mxu0
    %v494 = vadd.f32 %v301, %v493
    %v495 = vpop.f32.mrf.mxu0
    %496 = vdwg.mxu0
    %497 = vmatprep.subr.mxu0 0.0
    %498 = vmatpush1.msra.mxu0 0.0
    %499 = vmatprep.subr.mxu0 0.0
    %500 = vmatpush1.msra.mxu0 0.0
    %501 = vmatprep.subr.mxu0 0.0
    %502 = vmatpush1.msra.mxu0 0.0
    %503 = vmatprep.subr.mxu0 0.0
    %504 = vmatpush1.msra.mxu0 0.0
    %505 = vmatprep.subr.mxu0 0.0
    %506 = vmatpush1.msra.mxu0 0.0
    %507 = vmatprep.subr.mxu0 0.0
    %508 = vmatpush1.msra.mxu0 0.0
    %509 = vmatprep.subr.mxu0 0.0
    %510 = vmatpush1.msra.mxu0 0.0
    %511 = vmatprep.subr.mxu0 0.0
    %512 = vmatpush1.msra.mxu0 0.0
    %513 = vmatprep.subr.mxu0 0.0
    %514 = vmatpush1.msra.mxu0 0.0
    %515 = vmatprep.subr.mxu0 0.0
    %516 = vmatpush1.msra.mxu0 0.0
    %517 = vmatprep.subr.mxu0 0.0
    %518 = vmatpush1.msra.mxu0 0.0
    %519 = vmatprep.subr.mxu0 0.0
    %520 = vmatpush1.msra.mxu0 0.0
    %521 = vmatprep.subr.mxu0 0.0
    %522 = vmatpush1.msra.mxu0 %v99
    %523 = vmatprep.subr.mxu0 0.0
    %524 = vmatpush1.msra.mxu0 %v98
    %525 = vmatprep.subr.mxu0 0.0
    %526 = vmatpush1.msra.mxu0 %v97
    %527 = vmatprep.subr.mxu0 0.0
    %528 = vmatpush1.msra.mxu0 %v96
    %529 = vmatprep.subr.mxu0 0.0
    %530 = vmatpush2.msra.mxu0 0.0
    %531 = vmatprep.subr.mxu0 0.0
    %532 = vmatpush2.msra.mxu0 0.0
    %533 = vmatprep.subr.mxu0 0.0
    %534 = vmatpush2.msra.mxu0 0.0
    %535 = vmatprep.subr.mxu0 0.0
    %536 = vmatpush2.msra.mxu0 0.0
    %537 = vmatprep.subr.mxu0 0.0
    %538 = vmatpush2.msra.mxu0 0.0
    %539 = vmatprep.subr.mxu0 0.0
    %540 = vmatpush2.msra.mxu0 0.0
    %541 = vmatprep.subr.mxu0 0.0
    %542 = vmatpush2.msra.mxu0 0.0
    %543 = vmatprep.subr.mxu0 0.0
    %544 = vmatpush2.msra.mxu0 0.0
    %545 = vmatprep.subr.mxu0 0.0
    %546 = vmatpush2.msra.mxu0 0.0
    %547 = vmatprep.subr.mxu0 0.0
    %548 = vmatpush2.msra.mxu0 0.0
    %549 = vmatprep.subr.mxu0 0.0
    %550 = vmatpush2.msra.mxu0 0.0
    %551 = vmatprep.subr.mxu0 0.0
    %552 = vmatpush2.msra.mxu0 0.0
    %553 = vmatprep.subr.mxu0 0.0
    %554 = vmatpush2.msra.mxu0 0.0
    %555 = vmatprep.subr.mxu0 0.0
    %556 = vmatpush2.msra.mxu0 0.0
    %557 = vmatprep.subr.mxu0 0.0
    %558 = vmatpush2.msra.mxu0 0.0
    %559 = vmatprep.subr.mxu0 0.0
    %560 = vmatpush2.msra.mxu0 0.0
    %561 = vmatprep.mubr.f32.mxu0 0.0
    %562 = vmatmul.mubr.f32.gmra.mxu0 %v305
    %v563 = vpop.f32.mrf.mxu0
    %v564 = vadd.f32 %v226, %v563
    %v565 = vpop.f32.mrf.mxu0
    %566 = vmatprep.mubr.f32.mxu0 0.0
    %567 = vmatmul.mubr.f32.gmra.mxu0 %v308
    %v568 = vpop.f32.mrf.mxu0
    %v569 = vadd.f32 %v231, %v568
    %v570 = vpop.f32.mrf.mxu0
    %571 = vmatprep.mubr.f32.mxu0 0.0
    %572 = vmatmul.mubr.f32.gmra.mxu0 %v311
    %v573 = vpop.f32.mrf.mxu0
    %v574 = vadd.f32 %v236, %v573
    %v575 = vpop.f32.mrf.mxu0
    %576 = vmatprep.mubr.f32.mxu0 0.0
    %577 = vmatmul.mubr.f32.gmra.mxu0 %v314
    %v578 = vpop.f32.mrf.mxu0
    %v579 = vadd.f32 %v241, %v578
    %v580 = vpop.f32.mrf.mxu0
    %581 = vmatprep.mubr.f32.mxu0 0.0
    %582 = vmatmul.mubr.f32.gmra.mxu0 %v317
    %v583 = vpop.f32.mrf.mxu0
    %v584 = vadd.f32 %v246, %v583
    %v585 = vpop.f32.mrf.mxu0
    %586 = vmatprep.mubr.f32.mxu0 0.0
    %587 = vmatmul.mubr.f32.gmra.mxu0 %v320
    %v588 = vpop.f32.mrf.mxu0
    %v589 = vadd.f32 %v251, %v588
    %v590 = vpop.f32.mrf.mxu0
    %591 = vmatprep.mubr.f32.mxu0 0.0
    %592 = vmatmul.mubr.f32.gmra.mxu0 %v323
    %v593 = vpop.f32.mrf.mxu0
    %v594 = vadd.f32 %v256, %v593
    %v595 = vpop.f32.mrf.mxu0
    %596 = vmatprep.mubr.f32.mxu0 0.0
    %597 = vmatmul.mubr.f32.gmra.mxu0 %v326
    %v598 = vpop.f32.mrf.mxu0
    %v599 = vadd.f32 %v261, %v598
    %v600 = vpop.f32.mrf.mxu0
    %601 = vmatprep.mubr.f32.mxu0 0.0
    %602 = vmatmul.mubr.f32.gmra.mxu0 %v329
    %v603 = vpop.f32.mrf.mxu0
    %v604 = vadd.f32 %v266, %v603
    %v605 = vpop.f32.mrf.mxu0
    %606 = vmatprep.mubr.f32.mxu0 0.0
    %607 = vmatmul.mubr.f32.gmra.mxu0 %v332
    %v608 = vpop.f32.mrf.mxu0
    %v609 = vadd.f32 %v271, %v608
    %v610 = vpop.f32.mrf.mxu0
    %611 = vmatprep.mubr.f32.mxu0 0.0
    %612 = vmatmul.mubr.f32.gmra.mxu0 %v335
    %v613 = vpop.f32.mrf.mxu0
    %v614 = vadd.f32 %v276, %v613
    %v615 = vpop.f32.mrf.mxu0
    %616 = vmatprep.mubr.f32.mxu0 0.0
    %617 = vmatmul.mubr.f32.gmra.mxu0 %v338
    %v618 = vpop.f32.mrf.mxu0
    %v619 = vadd.f32 %v281, %v618
    %v620 = vpop.f32.mrf.mxu0
    %621 = vmatprep.mubr.f32.mxu0 0.0
    %622 = vmatmul.mubr.f32.gmra.mxu0 %v341
    %v623 = vpop.f32.mrf.mxu0
    %v624 = vadd.f32 %v286, %v623
    %v625 = vpop.f32.mrf.mxu0
    %626 = vmatprep.mubr.f32.mxu0 0.0
    %627 = vmatmul.mubr.f32.gmra.mxu0 %v344
    %v628 = vpop.f32.mrf.mxu0
    %v629 = vadd.f32 %v291, %v628
    %v630 = vpop.f32.mrf.mxu0
    %631 = vmatprep.mubr.f32.mxu0 0.0
    %632 = vmatmul.mubr.f32.gmra.mxu0 %v347
    %v633 = vpop.f32.mrf.mxu0
    %v634 = vadd.f32 %v296, %v633
    %v635 = vpop.f32.mrf.mxu0
    %636 = vmatprep.mubr.f32.mxu0 0.0
    %637 = vmatmul.mubr.f32.gmra.mxu0 %v350
    %v638 = vpop.f32.mrf.mxu0
    %v639 = vadd.f32 %v301, %v638
    %v640 = vpop.f32.mrf.mxu0
    %641 = vdwg.mxu0
    %642 = vmatprep.subr.mxu0 0.0
    %643 = vmatpush1.msra.mxu0 0.0
    %644 = vmatprep.subr.mxu0 0.0
    %645 = vmatpush1.msra.mxu0 0.0
    %646 = vmatprep.subr.mxu0 0.0
    %647 = vmatpush1.msra.mxu0 0.0
    %648 = vmatprep.subr.mxu0 0.0
    %649 = vmatpush1.msra.mxu0 0.0
    %650 = vmatprep.subr.mxu0 0.0
    %651 = vmatpush1.msra.mxu0 0.0
    %652 = vmatprep.subr.mxu0 0.0
    %653 = vmatpush1.msra.mxu0 0.0
    %654 = vmatprep.subr.mxu0 0.0
    %655 = vmatpush1.msra.mxu0 0.0
    %656 = vmatprep.subr.mxu0 0.0
    %657 = vmatpush1.msra.mxu0 0.0
    %658 = vmatprep.subr.mxu0 0.0
    %659 = vmatpush1.msra.mxu0 0.0
    %660 = vmatprep.subr.mxu0 0.0
    %661 = vmatpush1.msra.mxu0 0.0
    %662 = vmatprep.subr.mxu0 0.0
    %663 = vmatpush1.msra.mxu0 0.0
    %664 = vmatprep.subr.mxu0 0.0
    %665 = vmatpush1.msra.mxu0 0.0
    %666 = vmatprep.subr.mxu0 0.0
    %667 = vmatpush1.msra.mxu0 %v103
    %668 = vmatprep.subr.mxu0 0.0
    %669 = vmatpush1.msra.mxu0 %v102
    %670 = vmatprep.subr.mxu0 0.0
    %671 = vmatpush1.msra.mxu0 %v101
    %672 = vmatprep.subr.mxu0 0.0
    %673 = vmatpush1.msra.mxu0 %v100
    %674 = vmatprep.subr.mxu0 0.0
    %675 = vmatpush2.msra.mxu0 0.0
    %676 = vmatprep.subr.mxu0 0.0
    %677 = vmatpush2.msra.mxu0 0.0
    %678 = vmatprep.subr.mxu0 0.0
    %679 = vmatpush2.msra.mxu0 0.0
    %680 = vmatprep.subr.mxu0 0.0
    %681 = vmatpush2.msra.mxu0 0.0
    %682 = vmatprep.subr.mxu0 0.0
    %683 = vmatpush2.msra.mxu0 0.0
    %684 = vmatprep.subr.mxu0 0.0
    %685 = vmatpush2.msra.mxu0 0.0
    %686 = vmatprep.subr.mxu0 0.0
    %687 = vmatpush2.msra.mxu0 0.0
    %688 = vmatprep.subr.mxu0 0.0
    %689 = vmatpush2.msra.mxu0 0.0
    %690 = vmatprep.subr.mxu0 0.0
    %691 = vmatpush2.msra.mxu0 0.0
    %692 = vmatprep.subr.mxu0 0.0
    %693 = vmatpush2.msra.mxu0 0.0
    %694 = vmatprep.subr.mxu0 0.0
    %695 = vmatpush2.msra.mxu0 0.0
    %696 = vmatprep.subr.mxu0 0.0
    %697 = vmatpush2.msra.mxu0 0.0
    %698 = vmatprep.subr.mxu0 0.0
    %699 = vmatpush2.msra.mxu0 0.0
    %700 = vmatprep.subr.mxu0 0.0
    %701 = vmatpush2.msra.mxu0 0.0
    %702 = vmatprep.subr.mxu0 0.0
    %703 = vmatpush2.msra.mxu0 0.0
    %704 = vmatprep.subr.mxu0 0.0
    %705 = vmatpush2.msra.mxu0 0.0
    %706 = vmatprep.mubr.f32.mxu0 0.0
    %707 = vmatmul.mubr.f32.gmra.mxu0 %v305
    %v708 = vpop.f32.mrf.mxu0
    %v709 = vadd.f32 %v226, %v708
    %v710 = vpop.f32.mrf.mxu0
    %711 = vmatprep.mubr.f32.mxu0 0.0
    %712 = vmatmul.mubr.f32.gmra.mxu0 %v308
    %v713 = vpop.f32.mrf.mxu0
    %v714 = vadd.f32 %v231, %v713
    %v715 = vpop.f32.mrf.mxu0
    %716 = vmatprep.mubr.f32.mxu0 0.0
    %717 = vmatmul.mubr.f32.gmra.mxu0 %v311
    %v718 = vpop.f32.mrf.mxu0
    %v719 = vadd.f32 %v236, %v718
    %v720 = vpop.f32.mrf.mxu0
    %721 = vmatprep.mubr.f32.mxu0 0.0
    %722 = vmatmul.mubr.f32.gmra.mxu0 %v314
    %v723 = vpop.f32.mrf.mxu0
    %v724 = vadd.f32 %v241, %v723
    %v725 = vpop.f32.mrf.mxu0
    %726 = vmatprep.mubr.f32.mxu0 0.0
    %727 = vmatmul.mubr.f32.gmra.mxu0 %v317
    %v728 = vpop.f32.mrf.mxu0
    %v729 = vadd.f32 %v246, %v728
    %v730 = vpop.f32.mrf.mxu0
    %731 = vmatprep.mubr.f32.mxu0 0.0
    %732 = vmatmul.mubr.f32.gmra.mxu0 %v320
    %v733 = vpop.f32.mrf.mxu0
    %v734 = vadd.f32 %v251, %v733
    %v735 = vpop.f32.mrf.mxu0
    %736 = vmatprep.mubr.f32.mxu0 0.0
    %737 = vmatmul.mubr.f32.gmra.mxu0 %v323
    %v738 = vpop.f32.mrf.mxu0
    %v739 = vadd.f32 %v256, %v738
    %v740 = vpop.f32.mrf.mxu0
    %741 = vmatprep.mubr.f32.mxu0 0.0
    %742 = vmatmul.mubr.f32.gmra.mxu0 %v326
    %v743 = vpop.f32.mrf.mxu0
    %v744 = vadd.f32 %v261, %v743
    %v745 = vpop.f32.mrf.mxu0
    %746 = vmatprep.mubr.f32.mxu0 0.0
    %747 = vmatmul.mubr.f32.gmra.mxu0 %v329
    %v748 = vpop.f32.mrf.mxu0
    %v749 = vadd.f32 %v266, %v748
    %v750 = vpop.f32.mrf.mxu0
    %751 = vmatprep.mubr.f32.mxu0 0.0
    %752 = vmatmul.mubr.f32.gmra.mxu0 %v332
    %v753 = vpop.f32.mrf.mxu0
    %v754 = vadd.f32 %v271, %v753
    %v755 = vpop.f32.mrf.mxu0
    %756 = vmatprep.mubr.f32.mxu0 0.0
    %757 = vmatmul.mubr.f32.gmra.mxu0 %v335
    %v758 = vpop.f32.mrf.mxu0
    %v759 = vadd.f32 %v276, %v758
    %v760 = vpop.f32.mrf.mxu0
    %761 = vmatprep.mubr.f32.mxu0 0.0
    %762 = vmatmul.mubr.f32.gmra.mxu0 %v338
    %v763 = vpop.f32.mrf.mxu0
    %v764 = vadd.f32 %v281, %v763
    %v765 = vpop.f32.mrf.mxu0
    %766 = vmatprep.mubr.f32.mxu0 0.0
    %767 = vmatmul.mubr.f32.gmra.mxu0 %v341
    %v768 = vpop.f32.mrf.mxu0
    %v769 = vadd.f32 %v286, %v768
    %v770 = vpop.f32.mrf.mxu0
    %771 = vmatprep.mubr.f32.mxu0 0.0
    %772 = vmatmul.mubr.f32.gmra.mxu0 %v344
    %v773 = vpop.f32.mrf.mxu0
    %v774 = vadd.f32 %v291, %v773
    %v775 = vpop.f32.mrf.mxu0
    %776 = vmatprep.mubr.f32.mxu0 0.0
    %777 = vmatmul.mubr.f32.gmra.mxu0 %v347
    %v778 = vpop.f32.mrf.mxu0
    %v779 = vadd.f32 %v296, %v778
    %v780 = vpop.f32.mrf.mxu0
    %781 = vmatprep.mubr.f32.mxu0 0.0
    %782 = vmatmul.mubr.f32.gmra.mxu0 %v350
    %v783 = vpop.f32.mrf.mxu0
    %v784 = vadd.f32 %v301, %v783
    %v785 = vpop.f32.mrf.mxu0
    %786 = vdwg.mxu0
    %787 = vmatprep.subr.mxu0 0.0
    %788 = vmatpush1.msra.mxu0 0.0
    %789 = vmatprep.subr.mxu0 0.0
    %790 = vmatpush1.msra.mxu0 0.0
    %791 = vmatprep.subr.mxu0 0.0
    %792 = vmatpush1.msra.mxu0 0.0
    %793 = vmatprep.subr.mxu0 0.0
    %794 = vmatpush1.msra.mxu0 0.0
    %795 = vmatprep.subr.mxu0 0.0
    %796 = vmatpush1.msra.mxu0 0.0
    %797 = vmatprep.subr.mxu0 0.0
    %798 = vmatpush1.msra.mxu0 0.0
    %799 = vmatprep.subr.mxu0 0.0
    %800 = vmatpush1.msra.mxu0 0.0
    %801 = vmatprep.subr.mxu0 0.0
    %802 = vmatpush1.msra.mxu0 0.0
    %803 = vmatprep.subr.mxu0 0.0
    %804 = vmatpush1.msra.mxu0 0.0
    %805 = vmatprep.subr.mxu0 0.0
    %806 = vmatpush1.msra.mxu0 0.0
    %807 = vmatprep.subr.mxu0 0.0
    %808 = vmatpush1.msra.mxu0 0.0
    %809 = vmatprep.subr.mxu0 0.0
    %810 = vmatpush1.msra.mxu0 0.0
    %811 = vmatprep.subr.mxu0 0.0
    %812 = vmatpush1.msra.mxu0 %v107
    %813 = vmatprep.subr.mxu0 0.0
    %814 = vmatpush1.msra.mxu0 %v106
    %815 = vmatprep.subr.mxu0 0.0
    %816 = vmatpush1.msra.mxu0 %v105
    %817 = vmatprep.subr.mxu0 0.0
    %818 = vmatpush1.msra.mxu0 %v104
    %819 = vmatprep.subr.mxu0 0.0
    %820 = vmatpush2.msra.mxu0 0.0
    %821 = vmatprep.subr.mxu0 0.0
    %822 = vmatpush2.msra.mxu0 0.0
    %823 = vmatprep.subr.mxu0 0.0
    %824 = vmatpush2.msra.mxu0 0.0
    %825 = vmatprep.subr.mxu0 0.0
    %826 = vmatpush2.msra.mxu0 0.0
    %827 = vmatprep.subr.mxu0 0.0
    %828 = vmatpush2.msra.mxu0 0.0
    %829 = vmatprep.subr.mxu0 0.0
    %830 = vmatpush2.msra.mxu0 0.0
    %831 = vmatprep.subr.mxu0 0.0
    %832 = vmatpush2.msra.mxu0 0.0
    %833 = vmatprep.subr.mxu0 0.0
    %834 = vmatpush2.msra.mxu0 0.0
    %835 = vmatprep.subr.mxu0 0.0
    %836 = vmatpush2.msra.mxu0 0.0
    %837 = vmatprep.subr.mxu0 0.0
    %838 = vmatpush2.msra.mxu0 0.0
    %839 = vmatprep.subr.mxu0 0.0
    %840 = vmatpush2.msra.mxu0 0.0
    %841 = vmatprep.subr.mxu0 0.0
    %842 = vmatpush2.msra.mxu0 0.0
    %843 = vmatprep.subr.mxu0 0.0
    %844 = vmatpush2.msra.mxu0 0.0
    %845 = vmatprep.subr.mxu0 0.0
    %846 = vmatpush2.msra.mxu0 0.0
    %847 = vmatprep.subr.mxu0 0.0
    %848 = vmatpush2.msra.mxu0 0.0
    %849 = vmatprep.subr.mxu0 0.0
    %850 = vmatpush2.msra.mxu0 0.0
    %851 = vmatprep.mubr.f32.mxu0 0.0
    %852 = vmatmul.mubr.f32.gmra.mxu0 %v305
    %v853 = vpop.f32.mrf.mxu0
    %v854 = vadd.f32 %v226, %v853
    %v855 = vpop.f32.mrf.mxu0
    %856 = vmatprep.mubr.f32.mxu0 0.0
    %857 = vmatmul.mubr.f32.gmra.mxu0 %v308
    %v858 = vpop.f32.mrf.mxu0
    %v859 = vadd.f32 %v231, %v858
    %v860 = vpop.f32.mrf.mxu0
    %861 = vmatprep.mubr.f32.mxu0 0.0
    %862 = vmatmul.mubr.f32.gmra.mxu0 %v311
    %v863 = vpop.f32.mrf.mxu0
    %v864 = vadd.f32 %v236, %v863
    %v865 = vpop.f32.mrf.mxu0
    %866 = vmatprep.mubr.f32.mxu0 0.0
    %867 = vmatmul.mubr.f32.gmra.mxu0 %v314
    %v868 = vpop.f32.mrf.mxu0
    %v869 = vadd.f32 %v241, %v868
    %v870 = vpop.f32.mrf.mxu0
    %871 = vmatprep.mubr.f32.mxu0 0.0
    %872 = vmatmul.mubr.f32.gmra.mxu0 %v317
    %v873 = vpop.f32.mrf.mxu0
    %v874 = vadd.f32 %v246, %v873
    %v875 = vpop.f32.mrf.mxu0
    %876 = vmatprep.mubr.f32.mxu0 0.0
    %877 = vmatmul.mubr.f32.gmra.mxu0 %v320
    %v878 = vpop.f32.mrf.mxu0
    %v879 = vadd.f32 %v251, %v878
    %v880 = vpop.f32.mrf.mxu0
    %881 = vmatprep.mubr.f32.mxu0 0.0
    %882 = vmatmul.mubr.f32.gmra.mxu0 %v323
    %v883 = vpop.f32.mrf.mxu0
    %v884 = vadd.f32 %v256, %v883
    %v885 = vpop.f32.mrf.mxu0
    %886 = vmatprep.mubr.f32.mxu0 0.0
    %887 = vmatmul.mubr.f32.gmra.mxu0 %v326
    %v888 = vpop.f32.mrf.mxu0
    %v889 = vadd.f32 %v261, %v888
    %v890 = vpop.f32.mrf.mxu0
    %891 = vmatprep.mubr.f32.mxu0 0.0
    %892 = vmatmul.mubr.f32.gmra.mxu0 %v329
    %v893 = vpop.f32.mrf.mxu0
    %v894 = vadd.f32 %v266, %v893
    %v895 = vpop.f32.mrf.mxu0
    %896 = vmatprep.mubr.f32.mxu0 0.0
    %897 = vmatmul.mubr.f32.gmra.mxu0 %v332
    %v898 = vpop.f32.mrf.mxu0
    %v899 = vadd.f32 %v271, %v898
    %v900 = vpop.f32.mrf.mxu0
    %901 = vmatprep.mubr.f32.mxu0 0.0
    %902 = vmatmul.mubr.f32.gmra.mxu0 %v335
    %v903 = vpop.f32.mrf.mxu0
    %v904 = vadd.f32 %v276, %v903
    %v905 = vpop.f32.mrf.mxu0
    %906 = vmatprep.mubr.f32.mxu0 0.0
    %907 = vmatmul.mubr.f32.gmra.mxu0 %v338
    %v908 = vpop.f32.mrf.mxu0
    %v909 = vadd.f32 %v281, %v908
    %v910 = vpop.f32.mrf.mxu0
    %911 = vmatprep.mubr.f32.mxu0 0.0
    %912 = vmatmul.mubr.f32.gmra.mxu0 %v341
    %v913 = vpop.f32.mrf.mxu0
    %v914 = vadd.f32 %v286, %v913
    %v915 = vpop.f32.mrf.mxu0
    %916 = vmatprep.mubr.f32.mxu0 0.0
    %917 = vmatmul.mubr.f32.gmra.mxu0 %v344
    %v918 = vpop.f32.mrf.mxu0
    %v919 = vadd.f32 %v291, %v918
    %v920 = vpop.f32.mrf.mxu0
    %921 = vmatprep.mubr.f32.mxu0 0.0
    %922 = vmatmul.mubr.f32.gmra.mxu0 %v347
    %v923 = vpop.f32.mrf.mxu0
    %v924 = vadd.f32 %v296, %v923
    %v925 = vpop.f32.mrf.mxu0
    %926 = vmatprep.mubr.f32.mxu0 0.0
    %927 = vmatmul.mubr.f32.gmra.mxu0 %v350
    %v928 = vpop.f32.mrf.mxu0
    %v929 = vadd.f32 %v301, %v928
    %v930 = vpop.f32.mrf.mxu0
    %931 = vdwg.mxu0
    %932 = vmatprep.subr.mxu0 0.0
    %933 = vmatpush1.msra.mxu0 0.0
    %934 = vmatprep.subr.mxu0 0.0
    %935 = vmatpush1.msra.mxu0 0.0
    %936 = vmatprep.subr.mxu0 0.0
    %937 = vmatpush1.msra.mxu0 0.0
    %938 = vmatprep.subr.mxu0 0.0
    %939 = vmatpush1.msra.mxu0 0.0
    %940 = vmatprep.subr.mxu0 0.0
    %941 = vmatpush1.msra.mxu0 0.0
    %942 = vmatprep.subr.mxu0 0.0
    %943 = vmatpush1.msra.mxu0 0.0
    %944 = vmatprep.subr.mxu0 0.0
    %945 = vmatpush1.msra.mxu0 0.0
    %946 = vmatprep.subr.mxu0 0.0
    %947 = vmatpush1.msra.mxu0 0.0
    %948 = vmatprep.subr.mxu0 0.0
    %949 = vmatpush1.msra.mxu0 0.0
    %950 = vmatprep.subr.mxu0 0.0
    %951 = vmatpush1.msra.mxu0 0.0
    %952 = vmatprep.subr.mxu0 0.0
    %953 = vmatpush1.msra.mxu0 0.0
    %954 = vmatprep.subr.mxu0 0.0
    %955 = vmatpush1.msra.mxu0 0.0
    %956 = vmatprep.subr.mxu0 0.0
    %957 = vmatpush1.msra.mxu0 %v111
    %958 = vmatprep.subr.mxu0 0.0
    %959 = vmatpush1.msra.mxu0 %v110
    %960 = vmatprep.subr.mxu0 0.0
    %961 = vmatpush1.msra.mxu0 %v109
    %962 = vmatprep.subr.mxu0 0.0
    %963 = vmatpush1.msra.mxu0 %v108
    %964 = vmatprep.subr.mxu0 0.0
    %965 = vmatpush2.msra.mxu0 0.0
    %966 = vmatprep.subr.mxu0 0.0
    %967 = vmatpush2.msra.mxu0 0.0
    %968 = vmatprep.subr.mxu0 0.0
    %969 = vmatpush2.msra.mxu0 0.0
    %970 = vmatprep.subr.mxu0 0.0
    %971 = vmatpush2.msra.mxu0 0.0
    %972 = vmatprep.subr.mxu0 0.0
    %973 = vmatpush2.msra.mxu0 0.0
    %974 = vmatprep.subr.mxu0 0.0
    %975 = vmatpush2.msra.mxu0 0.0
    %976 = vmatprep.subr.mxu0 0.0
    %977 = vmatpush2.msra.mxu0 0.0
    %978 = vmatprep.subr.mxu0 0.0
    %979 = vmatpush2.msra.mxu0 0.0
    %980 = vmatprep.subr.mxu0 0.0
    %981 = vmatpush2.msra.mxu0 0.0
    %982 = vmatprep.subr.mxu0 0.0
    %983 = vmatpush2.msra.mxu0 0.0
    %984 = vmatprep.subr.mxu0 0.0
    %985 = vmatpush2.msra.mxu0 0.0
    %986 = vmatprep.subr.mxu0 0.0
    %987 = vmatpush2.msra.mxu0 0.0
    %988 = vmatprep.subr.mxu0 0.0
    %989 = vmatpush2.msra.mxu0 0.0
    %990 = vmatprep.subr.mxu0 0.0
    %991 = vmatpush2.msra.mxu0 0.0
    %992 = vmatprep.subr.mxu0 0.0
    %993 = vmatpush2.msra.mxu0 0.0
    %994 = vmatprep.subr.mxu0 0.0
    %995 = vmatpush2.msra.mxu0 0.0
    %996 = vmatprep.mubr.f32.mxu0 0.0
    %997 = vmatmul.mubr.f32.gmra.mxu0 %v305
    %v998 = vpop.f32.mrf.mxu0
    %v999 = vadd.f32 %v226, %v998
    %v1000 = vpop.f32.mrf.mxu0
    %1001 = vmatprep.mubr.f32.mxu0 0.0
    %1002 = vmatmul.mubr.f32.gmra.mxu0 %v308
    %v1003 = vpop.f32.mrf.mxu0
    %v1004 = vadd.f32 %v231, %v1003
    %v1005 = vpop.f32.mrf.mxu0
    %1006 = vmatprep.mubr.f32.mxu0 0.0
    %1007 = vmatmul.mubr.f32.gmra.mxu0 %v311
    %v1008 = vpop.f32.mrf.mxu0
    %v1009 = vadd.f32 %v236, %v1008
    %v1010 = vpop.f32.mrf.mxu0
    %1011 = vmatprep.mubr.f32.mxu0 0.0
    %1012 = vmatmul.mubr.f32.gmra.mxu0 %v314
    %v1013 = vpop.f32.mrf.mxu0
    %v1014 = vadd.f32 %v241, %v1013
    %v1015 = vpop.f32.mrf.mxu0
    %1016 = vmatprep.mubr.f32.mxu0 0.0
    %1017 = vmatmul.mubr.f32.gmra.mxu0 %v317
    %v1018 = vpop.f32.mrf.mxu0
    %v1019 = vadd.f32 %v246, %v1018
    %v1020 = vpop.f32.mrf.mxu0
    %1021 = vmatprep.mubr.f32.mxu0 0.0
    %1022 = vmatmul.mubr.f32.gmra.mxu0 %v320
    %v1023 = vpop.f32.mrf.mxu0
    %v1024 = vadd.f32 %v251, %v1023
    %v1025 = vpop.f32.mrf.mxu0
    %1026 = vmatprep.mubr.f32.mxu0 0.0
    %1027 = vmatmul.mubr.f32.gmra.mxu0 %v323
    %v1028 = vpop.f32.mrf.mxu0
    %v1029 = vadd.f32 %v256, %v1028
    %v1030 = vpop.f32.mrf.mxu0
    %1031 = vmatprep.mubr.f32.mxu0 0.0
    %1032 = vmatmul.mubr.f32.gmra.mxu0 %v326
    %v1033 = vpop.f32.mrf.mxu0
    %v1034 = vadd.f32 %v261, %v1033
    %v1035 = vpop.f32.mrf.mxu0
    %1036 = vmatprep.mubr.f32.mxu0 0.0
    %1037 = vmatmul.mubr.f32.gmra.mxu0 %v329
    %v1038 = vpop.f32.mrf.mxu0
    %v1039 = vadd.f32 %v266, %v1038
    %v1040 = vpop.f32.mrf.mxu0
    %1041 = vmatprep.mubr.f32.mxu0 0.0
    %1042 = vmatmul.mubr.f32.gmra.mxu0 %v332
    %v1043 = vpop.f32.mrf.mxu0
    %v1044 = vadd.f32 %v271, %v1043
    %v1045 = vpop.f32.mrf.mxu0
    %1046 = vmatprep.mubr.f32.mxu0 0.0
    %1047 = vmatmul.mubr.f32.gmra.mxu0 %v335
    %v1048 = vpop.f32.mrf.mxu0
    %v1049 = vadd.f32 %v276, %v1048
    %v1050 = vpop.f32.mrf.mxu0
    %1051 = vmatprep.mubr.f32.mxu0 0.0
    %1052 = vmatmul.mubr.f32.gmra.mxu0 %v338
    %v1053 = vpop.f32.mrf.mxu0
    %v1054 = vadd.f32 %v281, %v1053
    %v1055 = vpop.f32.mrf.mxu0
    %1056 = vmatprep.mubr.f32.mxu0 0.0
    %1057 = vmatmul.mubr.f32.gmra.mxu0 %v341
    %v1058 = vpop.f32.mrf.mxu0
    %v1059 = vadd.f32 %v286, %v1058
    %v1060 = vpop.f32.mrf.mxu0
    %1061 = vmatprep.mubr.f32.mxu0 0.0
    %1062 = vmatmul.mubr.f32.gmra.mxu0 %v344
    %v1063 = vpop.f32.mrf.mxu0
    %v1064 = vadd.f32 %v291, %v1063
    %v1065 = vpop.f32.mrf.mxu0
    %1066 = vmatprep.mubr.f32.mxu0 0.0
    %1067 = vmatmul.mubr.f32.gmra.mxu0 %v347
    %v1068 = vpop.f32.mrf.mxu0
    %v1069 = vadd.f32 %v296, %v1068
    %v1070 = vpop.f32.mrf.mxu0
    %1071 = vmatprep.mubr.f32.mxu0 0.0
    %1072 = vmatmul.mubr.f32.gmra.mxu0 %v350
    %v1073 = vpop.f32.mrf.mxu0
    %v1074 = vadd.f32 %v301, %v1073
    %v1075 = vpop.f32.mrf.mxu0
    %1076 = vdwg.mxu0
    %1077 = vmatprep.subr.mxu0 0.0
    %1078 = vmatpush1.msra.mxu0 0.0
    %1079 = vmatprep.subr.mxu0 0.0
    %1080 = vmatpush1.msra.mxu0 0.0
    %1081 = vmatprep.subr.mxu0 0.0
    %1082 = vmatpush1.msra.mxu0 0.0
    %1083 = vmatprep.subr.mxu0 0.0
    %1084 = vmatpush1.msra.mxu0 0.0
    %1085 = vmatprep.subr.mxu0 0.0
    %1086 = vmatpush1.msra.mxu0 0.0
    %1087 = vmatprep.subr.mxu0 0.0
    %1088 = vmatpush1.msra.mxu0 0.0
    %1089 = vmatprep.subr.mxu0 0.0
    %1090 = vmatpush1.msra.mxu0 0.0
    %1091 = vmatprep.subr.mxu0 0.0
    %1092 = vmatpush1.msra.mxu0 0.0
    %1093 = vmatprep.subr.mxu0 0.0
    %1094 = vmatpush1.msra.mxu0 0.0
    %1095 = vmatprep.subr.mxu0 0.0
    %1096 = vmatpush1.msra.mxu0 0.0
    %1097 = vmatprep.subr.mxu0 0.0
    %1098 = vmatpush1.msra.mxu0 0.0
    %1099 = vmatprep.subr.mxu0 0.0
    %1100 = vmatpush1.msra.mxu0 0.0
    %1101 = vmatprep.subr.mxu0 0.0
    %1102 = vmatpush1.msra.mxu0 %v115
    %1103 = vmatprep.subr.mxu0 0.0
    %1104 = vmatpush1.msra.mxu0 %v114
    %1105 = vmatprep.subr.mxu0 0.0
    %1106 = vmatpush1.msra.mxu0 %v113
    %1107 = vmatprep.subr.mxu0 0.0
    %1108 = vmatpush1.msra.mxu0 %v112
    %1109 = vmatprep.subr.mxu0 0.0
    %1110 = vmatpush2.msra.mxu0 0.0
    %1111 = vmatprep.subr.mxu0 0.0
    %1112 = vmatpush2.msra.mxu0 0.0
    %1113 = vmatprep.subr.mxu0 0.0
    %1114 = vmatpush2.msra.mxu0 0.0
    %1115 = vmatprep.subr.mxu0 0.0
    %1116 = vmatpush2.msra.mxu0 0.0
    %1117 = vmatprep.subr.mxu0 0.0
    %1118 = vmatpush2.msra.mxu0 0.0
    %1119 = vmatprep.subr.mxu0 0.0
    %1120 = vmatpush2.msra.mxu0 0.0
    %1121 = vmatprep.subr.mxu0 0.0
    %1122 = vmatpush2.msra.mxu0 0.0
    %1123 = vmatprep.subr.mxu0 0.0
    %1124 = vmatpush2.msra.mxu0 0.0
    %1125 = vmatprep.subr.mxu0 0.0
    %1126 = vmatpush2.msra.mxu0 0.0
    %1127 = vmatprep.subr.mxu0 0.0
    %1128 = vmatpush2.msra.mxu0 0.0
    %1129 = vmatprep.subr.mxu0 0.0
    %1130 = vmatpush2.msra.mxu0 0.0
    %1131 = vmatprep.subr.mxu0 0.0
    %1132 = vmatpush2.msra.mxu0 0.0
    %1133 = vmatprep.subr.mxu0 0.0
    %1134 = vmatpush2.msra.mxu0 0.0
    %1135 = vmatprep.subr.mxu0 0.0
    %1136 = vmatpush2.msra.mxu0 0.0
    %1137 = vmatprep.subr.mxu0 0.0
    %1138 = vmatpush2.msra.mxu0 0.0
    %1139 = vmatprep.subr.mxu0 0.0
    %1140 = vmatpush2.msra.mxu0 0.0
    %1141 = vmatprep.mubr.f32.mxu0 0.0
    %1142 = vmatmul.mubr.f32.gmra.mxu0 %v305
    %v1143 = vpop.f32.mrf.mxu0
    %v1144 = vadd.f32 %v226, %v1143
    %v1145 = vpop.f32.mrf.mxu0
    %1146 = vmatprep.mubr.f32.mxu0 0.0
    %1147 = vmatmul.mubr.f32.gmra.mxu0 %v308
    %v1148 = vpop.f32.mrf.mxu0
    %v1149 = vadd.f32 %v231, %v1148
    %v1150 = vpop.f32.mrf.mxu0
    %1151 = vmatprep.mubr.f32.mxu0 0.0
    %1152 = vmatmul.mubr.f32.gmra.mxu0 %v311
    %v1153 = vpop.f32.mrf.mxu0
    %v1154 = vadd.f32 %v236, %v1153
    %v1155 = vpop.f32.mrf.mxu0
    %1156 = vmatprep.mubr.f32.mxu0 0.0
    %1157 = vmatmul.mubr.f32.gmra.mxu0 %v314
    %v1158 = vpop.f32.mrf.mxu0
    %v1159 = vadd.f32 %v241, %v1158
    %v1160 = vpop.f32.mrf.mxu0
    %1161 = vmatprep.mubr.f32.mxu0 0.0
    %1162 = vmatmul.mubr.f32.gmra.mxu0 %v317
    %v1163 = vpop.f32.mrf.mxu0
    %v1164 = vadd.f32 %v246, %v1163
    %v1165 = vpop.f32.mrf.mxu0
    %1166 = vmatprep.mubr.f32.mxu0 0.0
    %1167 = vmatmul.mubr.f32.gmra.mxu0 %v320
    %v1168 = vpop.f32.mrf.mxu0
    %v1169 = vadd.f32 %v251, %v1168
    %v1170 = vpop.f32.mrf.mxu0
    %1171 = vmatprep.mubr.f32.mxu0 0.0
    %1172 = vmatmul.mubr.f32.gmra.mxu0 %v323
    %v1173 = vpop.f32.mrf.mxu0
    %v1174 = vadd.f32 %v256, %v1173
    %v1175 = vpop.f32.mrf.mxu0
    %1176 = vmatprep.mubr.f32.mxu0 0.0
    %1177 = vmatmul.mubr.f32.gmra.mxu0 %v326
    %v1178 = vpop.f32.mrf.mxu0
    %v1179 = vadd.f32 %v261, %v1178
    %v1180 = vpop.f32.mrf.mxu0
    %1181 = vmatprep.mubr.f32.mxu0 0.0
    %1182 = vmatmul.mubr.f32.gmra.mxu0 %v329
    %v1183 = vpop.f32.mrf.mxu0
    %v1184 = vadd.f32 %v266, %v1183
    %v1185 = vpop.f32.mrf.mxu0
    %1186 = vmatprep.mubr.f32.mxu0 0.0
    %1187 = vmatmul.mubr.f32.gmra.mxu0 %v332
    %v1188 = vpop.f32.mrf.mxu0
    %v1189 = vadd.f32 %v271, %v1188
    %v1190 = vpop.f32.mrf.mxu0
    %1191 = vmatprep.mubr.f32.mxu0 0.0
    %1192 = vmatmul.mubr.f32.gmra.mxu0 %v335
    %v1193 = vpop.f32.mrf.mxu0
    %v1194 = vadd.f32 %v276, %v1193
    %v1195 = vpop.f32.mrf.mxu0
    %1196 = vmatprep.mubr.f32.mxu0 0.0
    %1197 = vmatmul.mubr.f32.gmra.mxu0 %v338
    %v1198 = vpop.f32.mrf.mxu0
    %v1199 = vadd.f32 %v281, %v1198
    %v1200 = vpop.f32.mrf.mxu0
    %1201 = vmatprep.mubr.f32.mxu0 0.0
    %1202 = vmatmul.mubr.f32.gmra.mxu0 %v341
    %v1203 = vpop.f32.mrf.mxu0
    %v1204 = vadd.f32 %v286, %v1203
    %v1205 = vpop.f32.mrf.mxu0
    %1206 = vmatprep.mubr.f32.mxu0 0.0
    %1207 = vmatmul.mubr.f32.gmra.mxu0 %v344
    %v1208 = vpop.f32.mrf.mxu0
    %v1209 = vadd.f32 %v291, %v1208
    %v1210 = vpop.f32.mrf.mxu0
    %1211 = vmatprep.mubr.f32.mxu0 0.0
    %1212 = vmatmul.mubr.f32.gmra.mxu0 %v347
    %v1213 = vpop.f32.mrf.mxu0
    %v1214 = vadd.f32 %v296, %v1213
    %v1215 = vpop.f32.mrf.mxu0
    %1216 = vmatprep.mubr.f32.mxu0 0.0
    %1217 = vmatmul.mubr.f32.gmra.mxu0 %v350
    %v1218 = vpop.f32.mrf.mxu0
    %v1219 = vadd.f32 %v301, %v1218
    %v1220 = vpop.f32.mrf.mxu0
    %1221 = vdwg.mxu0
    %1222 = vmatprep.subr.mxu0 0.0
    %1223 = vmatpush1.msra.mxu0 0.0
    %1224 = vmatprep.subr.mxu0 0.0
    %1225 = vmatpush1.msra.mxu0 0.0
    %1226 = vmatprep.subr.mxu0 0.0
    %1227 = vmatpush1.msra.mxu0 0.0
    %1228 = vmatprep.subr.mxu0 0.0
    %1229 = vmatpush1.msra.mxu0 0.0
    %1230 = vmatprep.subr.mxu0 0.0
    %1231 = vmatpush1.msra.mxu0 0.0
    %1232 = vmatprep.subr.mxu0 0.0
    %1233 = vmatpush1.msra.mxu0 0.0
    %1234 = vmatprep.subr.mxu0 0.0
    %1235 = vmatpush1.msra.mxu0 0.0
    %1236 = vmatprep.subr.mxu0 0.0
    %1237 = vmatpush1.msra.mxu0 0.0
    %1238 = vmatprep.subr.mxu0 0.0
    %1239 = vmatpush1.msra.mxu0 0.0
    %1240 = vmatprep.subr.mxu0 0.0
    %1241 = vmatpush1.msra.mxu0 0.0
    %1242 = vmatprep.subr.mxu0 0.0
    %1243 = vmatpush1.msra.mxu0 0.0
    %1244 = vmatprep.subr.mxu0 0.0
    %1245 = vmatpush1.msra.mxu0 0.0
    %1246 = vmatprep.subr.mxu0 0.0
    %1247 = vmatpush1.msra.mxu0 %v119
    %1248 = vmatprep.subr.mxu0 0.0
    %1249 = vmatpush1.msra.mxu0 %v118
    %1250 = vmatprep.subr.mxu0 0.0
    %1251 = vmatpush1.msra.mxu0 %v117
    %1252 = vmatprep.subr.mxu0 0.0
    %1253 = vmatpush1.msra.mxu0 %v116
    %1254 = vmatprep.subr.mxu0 0.0
    %1255 = vmatpush2.msra.mxu0 0.0
    %1256 = vmatprep.subr.mxu0 0.0
    %1257 = vmatpush2.msra.mxu0 0.0
    %1258 = vmatprep.subr.mxu0 0.0
    %1259 = vmatpush2.msra.mxu0 0.0
    %1260 = vmatprep.subr.mxu0 0.0
    %1261 = vmatpush2.msra.mxu0 0.0
    %1262 = vmatprep.subr.mxu0 0.0
    %1263 = vmatpush2.msra.mxu0 0.0
    %1264 = vmatprep.subr.mxu0 0.0
    %1265 = vmatpush2.msra.mxu0 0.0
    %1266 = vmatprep.subr.mxu0 0.0
    %1267 = vmatpush2.msra.mxu0 0.0
    %1268 = vmatprep.subr.mxu0 0.0
    %1269 = vmatpush2.msra.mxu0 0.0
    %1270 = vmatprep.subr.mxu0 0.0
    %1271 = vmatpush2.msra.mxu0 0.0
    %1272 = vmatprep.subr.mxu0 0.0
    %1273 = vmatpush2.msra.mxu0 0.0
    %1274 = vmatprep.subr.mxu0 0.0
    %1275 = vmatpush2.msra.mxu0 0.0
    %1276 = vmatprep.subr.mxu0 0.0
    %1277 = vmatpush2.msra.mxu0 0.0
    %1278 = vmatprep.subr.mxu0 0.0
    %1279 = vmatpush2.msra.mxu0 0.0
    %1280 = vmatprep.subr.mxu0 0.0
    %1281 = vmatpush2.msra.mxu0 0.0
    %1282 = vmatprep.subr.mxu0 0.0
    %1283 = vmatpush2.msra.mxu0 0.0
    %1284 = vmatprep.subr.mxu0 0.0
    %1285 = vmatpush2.msra.mxu0 0.0
    %1286 = vmatprep.mubr.f32.mxu0 0.0
    %1287 = vmatmul.mubr.f32.gmra.mxu0 %v305
    %v1288 = vpop.f32.mrf.mxu0
    %v1289 = vadd.f32 %v226, %v1288
    %v1290 = vpop.f32.mrf.mxu0
    %1291 = vmatprep.mubr.f32.mxu0 0.0
    %1292 = vmatmul.mubr.f32.gmra.mxu0 %v308
    %v1293 = vpop.f32.mrf.mxu0
    %v1294 = vadd.f32 %v231, %v1293
    %v1295 = vpop.f32.mrf.mxu0
    %1296 = vmatprep.mubr.f32.mxu0 0.0
    %1297 = vmatmul.mubr.f32.gmra.mxu0 %v311
    %v1298 = vpop.f32.mrf.mxu0
    %v1299 = vadd.f32 %v236, %v1298
    %v1300 = vpop.f32.mrf.mxu0
    %1301 = vmatprep.mubr.f32.mxu0 0.0
    %1302 = vmatmul.mubr.f32.gmra.mxu0 %v314
    %v1303 = vpop.f32.mrf.mxu0
    %v1304 = vadd.f32 %v241, %v1303
    %v1305 = vpop.f32.mrf.mxu0
    %1306 = vmatprep.mubr.f32.mxu0 0.0
    %1307 = vmatmul.mubr.f32.gmra.mxu0 %v317
    %v1308 = vpop.f32.mrf.mxu0
    %v1309 = vadd.f32 %v246, %v1308
    %v1310 = vpop.f32.mrf.mxu0
    %1311 = vmatprep.mubr.f32.mxu0 0.0
    %1312 = vmatmul.mubr.f32.gmra.mxu0 %v320
    %v1313 = vpop.f32.mrf.mxu0
    %v1314 = vadd.f32 %v251, %v1313
    %v1315 = vpop.f32.mrf.mxu0
    %1316 = vmatprep.mubr.f32.mxu0 0.0
    %1317 = vmatmul.mubr.f32.gmra.mxu0 %v323
    %v1318 = vpop.f32.mrf.mxu0
    %v1319 = vadd.f32 %v256, %v1318
    %v1320 = vpop.f32.mrf.mxu0
    %1321 = vmatprep.mubr.f32.mxu0 0.0
    %1322 = vmatmul.mubr.f32.gmra.mxu0 %v326
    %v1323 = vpop.f32.mrf.mxu0
    %v1324 = vadd.f32 %v261, %v1323
    %v1325 = vpop.f32.mrf.mxu0
    %1326 = vmatprep.mubr.f32.mxu0 0.0
    %1327 = vmatmul.mubr.f32.gmra.mxu0 %v329
    %v1328 = vpop.f32.mrf.mxu0
    %v1329 = vadd.f32 %v266, %v1328
    %v1330 = vpop.f32.mrf.mxu0
    %1331 = vmatprep.mubr.f32.mxu0 0.0
    %1332 = vmatmul.mubr.f32.gmra.mxu0 %v332
    %v1333 = vpop.f32.mrf.mxu0
    %v1334 = vadd.f32 %v271, %v1333
    %v1335 = vpop.f32.mrf.mxu0
    %1336 = vmatprep.mubr.f32.mxu0 0.0
    %1337 = vmatmul.mubr.f32.gmra.mxu0 %v335
    %v1338 = vpop.f32.mrf.mxu0
    %v1339 = vadd.f32 %v276, %v1338
    %v1340 = vpop.f32.mrf.mxu0
    %1341 = vmatprep.mubr.f32.mxu0 0.0
    %1342 = vmatmul.mubr.f32.gmra.mxu0 %v338
    %v1343 = vpop.f32.mrf.mxu0
    %v1344 = vadd.f32 %v281, %v1343
    %v1345 = vpop.f32.mrf.mxu0
    %1346 = vmatprep.mubr.f32.mxu0 0.0
    %1347 = vmatmul.mubr.f32.gmra.mxu0 %v341
    %v1348 = vpop.f32.mrf.mxu0
    %v1349 = vadd.f32 %v286, %v1348
    %v1350 = vpop.f32.mrf.mxu0
    %1351 = vmatprep.mubr.f32.mxu0 0.0
    %1352 = vmatmul.mubr.f32.gmra.mxu0 %v344
    %v1353 = vpop.f32.mrf.mxu0
    %v1354 = vadd.f32 %v291, %v1353
    %v1355 = vpop.f32.mrf.mxu0
    %1356 = vmatprep.mubr.f32.mxu0 0.0
    %1357 = vmatmul.mubr.f32.gmra.mxu0 %v347
    %v1358 = vpop.f32.mrf.mxu0
    %v1359 = vadd.f32 %v296, %v1358
    %v1360 = vpop.f32.mrf.mxu0
    %1361 = vmatprep.mubr.f32.mxu0 0.0
    %1362 = vmatmul.mubr.f32.gmra.mxu0 %v350
    %v1363 = vpop.f32.mrf.mxu0
    %v1364 = vadd.f32 %v301, %v1363
    %v1365 = vpop.f32.mrf.mxu0
    %1366 = vdwg.mxu0
    %1367 = vmatprep.subr.mxu0 0.0
    %1368 = vmatpush1.msra.mxu0 0.0
    %1369 = vmatprep.subr.mxu0 0.0
    %1370 = vmatpush1.msra.mxu0 0.0
    %1371 = vmatprep.subr.mxu0 0.0
    %1372 = vmatpush1.msra.mxu0 0.0
    %1373 = vmatprep.subr.mxu0 0.0
    %1374 = vmatpush1.msra.mxu0 0.0
    %1375 = vmatprep.subr.mxu0 0.0
    %1376 = vmatpush1.msra.mxu0 0.0
    %1377 = vmatprep.subr.mxu0 0.0
    %1378 = vmatpush1.msra.mxu0 0.0
    %1379 = vmatprep.subr.mxu0 0.0
    %1380 = vmatpush1.msra.mxu0 0.0
    %1381 = vmatprep.subr.mxu0 0.0
    %1382 = vmatpush1.msra.mxu0 0.0
    %1383 = vmatprep.subr.mxu0 0.0
    %1384 = vmatpush1.msra.mxu0 0.0
    %1385 = vmatprep.subr.mxu0 0.0
    %1386 = vmatpush1.msra.mxu0 0.0
    %1387 = vmatprep.subr.mxu0 0.0
    %1388 = vmatpush1.msra.mxu0 0.0
    %1389 = vmatprep.subr.mxu0 0.0
    %1390 = vmatpush1.msra.mxu0 0.0
    %1391 = vmatprep.subr.mxu0 0.0
    %1392 = vmatpush1.msra.mxu0 %v123
    %1393 = vmatprep.subr.mxu0 0.0
    %1394 = vmatpush1.msra.mxu0 %v122
    %1395 = vmatprep.subr.mxu0 0.0
    %1396 = vmatpush1.msra.mxu0 %v121
    %1397 = vmatprep.subr.mxu0 0.0
    %1398 = vmatpush1.msra.mxu0 %v120
    %1399 = vmatprep.subr.mxu0 0.0
    %1400 = vmatpush2.msra.mxu0 0.0
    %1401 = vmatprep.subr.mxu0 0.0
    %1402 = vmatpush2.msra.mxu0 0.0
    %1403 = vmatprep.subr.mxu0 0.0
    %1404 = vmatpush2.msra.mxu0 0.0
    %1405 = vmatprep.subr.mxu0 0.0
    %1406 = vmatpush2.msra.mxu0 0.0
    %1407 = vmatprep.subr.mxu0 0.0
    %1408 = vmatpush2.msra.mxu0 0.0
    %1409 = vmatprep.subr.mxu0 0.0
    %1410 = vmatpush2.msra.mxu0 0.0
    %1411 = vmatprep.subr.mxu0 0.0
    %1412 = vmatpush2.msra.mxu0 0.0
    %1413 = vmatprep.subr.mxu0 0.0
    %1414 = vmatpush2.msra.mxu0 0.0
    %1415 = vmatprep.subr.mxu0 0.0
    %1416 = vmatpush2.msra.mxu0 0.0
    %1417 = vmatprep.subr.mxu0 0.0
    %1418 = vmatpush2.msra.mxu0 0.0
    %1419 = vmatprep.subr.mxu0 0.0
    %1420 = vmatpush2.msra.mxu0 0.0
    %1421 = vmatprep.subr.mxu0 0.0
    %1422 = vmatpush2.msra.mxu0 0.0
    %1423 = vmatprep.subr.mxu0 0.0
    %1424 = vmatpush2.msra.mxu0 0.0
    %1425 = vmatprep.subr.mxu0 0.0
    %1426 = vmatpush2.msra.mxu0 0.0
    %1427 = vmatprep.subr.mxu0 0.0
    %1428 = vmatpush2.msra.mxu0 0.0
    %1429 = vmatprep.subr.mxu0 0.0
    %1430 = vmatpush2.msra.mxu0 0.0
    %1431 = vmatprep.mubr.f32.mxu0 0.0
    %1432 = vmatmul.mubr.f32.gmra.mxu0 %v305
    %v1433 = vpop.f32.mrf.mxu0
    %v1434 = vadd.f32 %v226, %v1433
    %v1435 = vpop.f32.mrf.mxu0
    %1436 = vmatprep.mubr.f32.mxu0 0.0
    %1437 = vmatmul.mubr.f32.gmra.mxu0 %v308
    %v1438 = vpop.f32.mrf.mxu0
    %v1439 = vadd.f32 %v231, %v1438
    %v1440 = vpop.f32.mrf.mxu0
    %1441 = vmatprep.mubr.f32.mxu0 0.0
    %1442 = vmatmul.mubr.f32.gmra.mxu0 %v311
    %v1443 = vpop.f32.mrf.mxu0
    %v1444 = vadd.f32 %v236, %v1443
    %v1445 = vpop.f32.mrf.mxu0
    %1446 = vmatprep.mubr.f32.mxu0 0.0
    %1447 = vmatmul.mubr.f32.gmra.mxu0 %v314
    %v1448 = vpop.f32.mrf.mxu0
    %v1449 = vadd.f32 %v241, %v1448
    %v1450 = vpop.f32.mrf.mxu0
    %1451 = vmatprep.mubr.f32.mxu0 0.0
    %1452 = vmatmul.mubr.f32.gmra.mxu0 %v317
    %v1453 = vpop.f32.mrf.mxu0
    %v1454 = vadd.f32 %v246, %v1453
    %v1455 = vpop.f32.mrf.mxu0
    %1456 = vmatprep.mubr.f32.mxu0 0.0
    %1457 = vmatmul.mubr.f32.gmra.mxu0 %v320
    %v1458 = vpop.f32.mrf.mxu0
    %v1459 = vadd.f32 %v251, %v1458
    %v1460 = vpop.f32.mrf.mxu0
    %1461 = vmatprep.mubr.f32.mxu0 0.0
    %1462 = vmatmul.mubr.f32.gmra.mxu0 %v323
    %v1463 = vpop.f32.mrf.mxu0
    %v1464 = vadd.f32 %v256, %v1463
    %v1465 = vpop.f32.mrf.mxu0
    %1466 = vmatprep.mubr.f32.mxu0 0.0
    %1467 = vmatmul.mubr.f32.gmra.mxu0 %v326
    %v1468 = vpop.f32.mrf.mxu0
    %v1469 = vadd.f32 %v261, %v1468
    %v1470 = vpop.f32.mrf.mxu0
    %1471 = vmatprep.mubr.f32.mxu0 0.0
    %1472 = vmatmul.mubr.f32.gmra.mxu0 %v329
    %v1473 = vpop.f32.mrf.mxu0
    %v1474 = vadd.f32 %v266, %v1473
    %v1475 = vpop.f32.mrf.mxu0
    %1476 = vmatprep.mubr.f32.mxu0 0.0
    %1477 = vmatmul.mubr.f32.gmra.mxu0 %v332
    %v1478 = vpop.f32.mrf.mxu0
    %v1479 = vadd.f32 %v271, %v1478
    %v1480 = vpop.f32.mrf.mxu0
    %1481 = vmatprep.mubr.f32.mxu0 0.0
    %1482 = vmatmul.mubr.f32.gmra.mxu0 %v335
    %v1483 = vpop.f32.mrf.mxu0
    %v1484 = vadd.f32 %v276, %v1483
    %v1485 = vpop.f32.mrf.mxu0
    %1486 = vmatprep.mubr.f32.mxu0 0.0
    %1487 = vmatmul.mubr.f32.gmra.mxu0 %v338
    %v1488 = vpop.f32.mrf.mxu0
    %v1489 = vadd.f32 %v281, %v1488
    %v1490 = vpop.f32.mrf.mxu0
    %1491 = vmatprep.mubr.f32.mxu0 0.0
    %1492 = vmatmul.mubr.f32.gmra.mxu0 %v341
    %v1493 = vpop.f32.mrf.mxu0
    %v1494 = vadd.f32 %v286, %v1493
    %v1495 = vpop.f32.mrf.mxu0
    %1496 = vmatprep.mubr.f32.mxu0 0.0
    %1497 = vmatmul.mubr.f32.gmra.mxu0 %v344
    %v1498 = vpop.f32.mrf.mxu0
    %v1499 = vadd.f32 %v291, %v1498
    %v1500 = vpop.f32.mrf.mxu0
    %1501 = vmatprep.mubr.f32.mxu0 0.0
    %1502 = vmatmul.mubr.f32.gmra.mxu0 %v347
    %v1503 = vpop.f32.mrf.mxu0
    %v1504 = vadd.f32 %v296, %v1503
    %v1505 = vpop.f32.mrf.mxu0
    %1506 = vmatprep.mubr.f32.mxu0 0.0
    %1507 = vmatmul.mubr.f32.gmra.mxu0 %v350
    %v1508 = vpop.f32.mrf.mxu0
    %v1509 = vadd.f32 %v301, %v1508
    %v1510 = vpop.f32.mrf.mxu0
    %1511 = vdwg.mxu0
    %v1512 = vld [vmem:[%s2] sm:$0xff]
    %v1513 = vld [vmem:[%s2 + $0x8] sm:$0xff]
    %v1514 = vld [vmem:[%s2 + $0x10] sm:$0xff]
    %v1515 = vld [vmem:[%s2 + $0x18] sm:$0xff]
    %1517 = vset.pattern.permute.xlu0 0
    %1518 = vperm.xlu0 %1517, %v1512
    %v1519 = vpop.permute.xlu0 %1518
    %1522 = vset.pattern.permute.xlu0 0
    %1523 = vperm.xlu0 %1522, %v1513
    %v1524 = vpop.permute.xlu0 %1523
    %1527 = vset.pattern.permute.xlu0 0
    %1528 = vperm.xlu0 %1527, %v1514
    %v1529 = vpop.permute.xlu0 %1528
    %1532 = vset.pattern.permute.xlu0 0
    %1533 = vperm.xlu0 %1532, %v1515
    %v1534 = vpop.permute.xlu0 %1533
    %v1536 = vld [vmem:[%s6] sm:$0xff]
    %v1537 = vld [vmem:[%s6 + $0x8] sm:$0xff]
    %v1538 = vld [vmem:[%s6 + $0x10] sm:$0xff]
    %v1539 = vld [vmem:[%s6 + $0x18] sm:$0xff]
    %v1540 = vld [vmem:[%s7] sm:$0xff]
    %v1541 = vld [vmem:[%s7 + $0x8] sm:$0xff]
    %v1542 = vld [vmem:[%s7 + $0x10] sm:$0xff]
    %v1543 = vld [vmem:[%s7 + $0x18] sm:$0xff]
    %1545 = vset.pattern.permute.xlu0 0
    %1546 = vperm.xlu0 %1545, %v1540
    %v1547 = vpop.permute.xlu0 %1546
    %1550 = vset.pattern.permute.xlu0 0
    %1551 = vperm.xlu0 %1550, %v1541
    %v1552 = vpop.permute.xlu0 %1551
    %1555 = vset.pattern.permute.xlu0 0
    %1556 = vperm.xlu0 %1555, %v1542
    %v1557 = vpop.permute.xlu0 %1556
    %1560 = vset.pattern.permute.xlu0 0
    %1561 = vperm.xlu0 %1560, %v1543
    %v1562 = vpop.permute.xlu0 %1561
    %v1565 = vsel %vm303, %v1536, 0
    %v1568 = vsel %vm303, %v1537, 0
    %v1571 = vsel %vm303, %v1538, 0
    %v1574 = vsel %vm303, %v1539, 0
    %1576 = vmatprep.subr.mxu0 0.0
    %1577 = vmatpush1.msra.mxu0 0.0
    %1578 = vmatprep.subr.mxu0 0.0
    %1579 = vmatpush1.msra.mxu0 0.0
    %1580 = vmatprep.subr.mxu0 0.0
    %1581 = vmatpush1.msra.mxu0 0.0
    %1582 = vmatprep.subr.mxu0 0.0
    %1583 = vmatpush1.msra.mxu0 0.0
    %1584 = vmatprep.subr.mxu0 0.0
    %1585 = vmatpush1.msra.mxu0 0.0
    %1586 = vmatprep.subr.mxu0 0.0
    %1587 = vmatpush1.msra.mxu0 0.0
    %1588 = vmatprep.subr.mxu0 0.0
    %1589 = vmatpush1.msra.mxu0 0.0
    %1590 = vmatprep.subr.mxu0 0.0
    %1591 = vmatpush1.msra.mxu0 0.0
    %1592 = vmatprep.subr.mxu0 0.0
    %1593 = vmatpush1.msra.mxu0 0.0
    %1594 = vmatprep.subr.mxu0 0.0
    %1595 = vmatpush1.msra.mxu0 0.0
    %1596 = vmatprep.subr.mxu0 0.0
    %1597 = vmatpush1.msra.mxu0 0.0
    %1598 = vmatprep.subr.mxu0 0.0
    %1599 = vmatpush1.msra.mxu0 0.0
    %1600 = vmatprep.subr.mxu0 0.0
    %1601 = vmatpush1.msra.mxu0 %v1534
    %1602 = vmatprep.subr.mxu0 0.0
    %1603 = vmatpush1.msra.mxu0 %v1529
    %1604 = vmatprep.subr.mxu0 0.0
    %1605 = vmatpush1.msra.mxu0 %v1524
    %1606 = vmatprep.subr.mxu0 0.0
    %1607 = vmatpush1.msra.mxu0 %v1519
    %1608 = vmatprep.subr.mxu0 0.0
    %1609 = vmatpush2.msra.mxu0 0.0
    %1610 = vmatprep.subr.mxu0 0.0
    %1611 = vmatpush2.msra.mxu0 0.0
    %1612 = vmatprep.subr.mxu0 0.0
    %1613 = vmatpush2.msra.mxu0 0.0
    %1614 = vmatprep.subr.mxu0 0.0
    %1615 = vmatpush2.msra.mxu0 0.0
    %1616 = vmatprep.subr.mxu0 0.0
    %1617 = vmatpush2.msra.mxu0 0.0
    %1618 = vmatprep.subr.mxu0 0.0
    %1619 = vmatpush2.msra.mxu0 0.0
    %1620 = vmatprep.subr.mxu0 0.0
    %1621 = vmatpush2.msra.mxu0 0.0
    %1622 = vmatprep.subr.mxu0 0.0
    %1623 = vmatpush2.msra.mxu0 0.0
    %1624 = vmatprep.subr.mxu0 0.0
    %1625 = vmatpush2.msra.mxu0 0.0
    %1626 = vmatprep.subr.mxu0 0.0
    %1627 = vmatpush2.msra.mxu0 0.0
    %1628 = vmatprep.subr.mxu0 0.0
    %1629 = vmatpush2.msra.mxu0 0.0
    %1630 = vmatprep.subr.mxu0 0.0
    %1631 = vmatpush2.msra.mxu0 0.0
    %1632 = vmatprep.subr.mxu0 0.0
    %1633 = vmatpush2.msra.mxu0 0.0
    %1634 = vmatprep.subr.mxu0 0.0
    %1635 = vmatpush2.msra.mxu0 0.0
    %1636 = vmatprep.subr.mxu0 0.0
    %1637 = vmatpush2.msra.mxu0 0.0
    %1638 = vmatprep.subr.mxu0 0.0
    %1639 = vmatpush2.msra.mxu0 0.0
    %1640 = vmatprep.mubr.f32.mxu0 0.0
    %1641 = vmatmul.mubr.f32.gmra.mxu0 %v1565
    %v1642 = vpop.f32.mrf.mxu0
    %v1643 = vadd.f32 %v1547, %v1642
    %v1644 = vpop.f32.mrf.mxu0
    %1645 = vmatprep.mubr.f32.mxu0 0.0
    %1646 = vmatmul.mubr.f32.gmra.mxu0 %v1568
    %v1647 = vpop.f32.mrf.mxu0
    %v1648 = vadd.f32 %v1552, %v1647
    %v1649 = vpop.f32.mrf.mxu0
    %1650 = vmatprep.mubr.f32.mxu0 0.0
    %1651 = vmatmul.mubr.f32.gmra.mxu0 %v1571
    %v1652 = vpop.f32.mrf.mxu0
    %v1653 = vadd.f32 %v1557, %v1652
    %v1654 = vpop.f32.mrf.mxu0
    %1655 = vmatprep.mubr.f32.mxu0 0.0
    %1656 = vmatmul.mubr.f32.gmra.mxu0 %v1574
    %v1657 = vpop.f32.mrf.mxu0
    %v1658 = vadd.f32 %v1562, %v1657
    %v1659 = vpop.f32.mrf.mxu0
    %1660 = vdwg.mxu0
    %v1661 = vmul.f32 %v1643, %v419
    %v1662 = vmul.f32 %v1648, %v424
    %v1663 = vmul.f32 %v1653, %v429
    %v1664 = vmul.f32 %v1658, %v434
    %v1666 = vsel %vm303, %v156, 0
    %v1669 = vsel %vm303, %v157, 0
    %v1672 = vsel %vm303, %v158, 0
    %v1675 = vsel %vm303, %v159, 0
    %1677 = vmatprep.subr.mxu0 0.0
    %1678 = vmatpush1.msra.mxu0 0.0
    %1679 = vmatprep.subr.mxu0 0.0
    %1680 = vmatpush1.msra.mxu0 0.0
    %1681 = vmatprep.subr.mxu0 0.0
    %1682 = vmatpush1.msra.mxu0 0.0
    %1683 = vmatprep.subr.mxu0 0.0
    %1684 = vmatpush1.msra.mxu0 0.0
    %1685 = vmatprep.subr.mxu0 0.0
    %1686 = vmatpush1.msra.mxu0 0.0
    %1687 = vmatprep.subr.mxu0 0.0
    %1688 = vmatpush1.msra.mxu0 0.0
    %1689 = vmatprep.subr.mxu0 0.0
    %1690 = vmatpush1.msra.mxu0 0.0
    %1691 = vmatprep.subr.mxu0 0.0
    %1692 = vmatpush1.msra.mxu0 0.0
    %1693 = vmatprep.subr.mxu0 0.0
    %1694 = vmatpush1.msra.mxu0 0.0
    %1695 = vmatprep.subr.mxu0 0.0
    %1696 = vmatpush1.msra.mxu0 0.0
    %1697 = vmatprep.subr.mxu0 0.0
    %1698 = vmatpush1.msra.mxu0 0.0
    %1699 = vmatprep.subr.mxu0 0.0
    %1700 = vmatpush1.msra.mxu0 0.0
    %1701 = vmatprep.subr.mxu0 0.0
    %1702 = vmatpush1.msra.mxu0 %v1664
    %1703 = vmatprep.subr.mxu0 0.0
    %1704 = vmatpush1.msra.mxu0 %v1663
    %1705 = vmatprep.subr.mxu0 0.0
    %1706 = vmatpush1.msra.mxu0 %v1662
    %1707 = vmatprep.subr.mxu0 0.0
    %1708 = vmatpush1.msra.mxu0 %v1661
    %1709 = vmatprep.subr.mxu0 0.0
    %1710 = vmatpush2.msra.mxu0 0.0
    %1711 = vmatprep.subr.mxu0 0.0
    %1712 = vmatpush2.msra.mxu0 0.0
    %1713 = vmatprep.subr.mxu0 0.0
    %1714 = vmatpush2.msra.mxu0 0.0
    %1715 = vmatprep.subr.mxu0 0.0
    %1716 = vmatpush2.msra.mxu0 0.0
    %1717 = vmatprep.subr.mxu0 0.0
    %1718 = vmatpush2.msra.mxu0 0.0
    %1719 = vmatprep.subr.mxu0 0.0
    %1720 = vmatpush2.msra.mxu0 0.0
    %1721 = vmatprep.subr.mxu0 0.0
    %1722 = vmatpush2.msra.mxu0 0.0
    %1723 = vmatprep.subr.mxu0 0.0
    %1724 = vmatpush2.msra.mxu0 0.0
    %1725 = vmatprep.subr.mxu0 0.0
    %1726 = vmatpush2.msra.mxu0 0.0
    %1727 = vmatprep.subr.mxu0 0.0
    %1728 = vmatpush2.msra.mxu0 0.0
    %1729 = vmatprep.subr.mxu0 0.0
    %1730 = vmatpush2.msra.mxu0 0.0
    %1731 = vmatprep.subr.mxu0 0.0
    %1732 = vmatpush2.msra.mxu0 0.0
    %1733 = vmatprep.subr.mxu0 0.0
    %1734 = vmatpush2.msra.mxu0 0.0
    %1735 = vmatprep.subr.mxu0 0.0
    %1736 = vmatpush2.msra.mxu0 0.0
    %1737 = vmatprep.subr.mxu0 0.0
    %1738 = vmatpush2.msra.mxu0 0.0
    %1739 = vmatprep.subr.mxu0 0.0
    %1740 = vmatpush2.msra.mxu0 0.0
    %1741 = vmatprep.mubr.f32.mxu0 0.0
    %1742 = vmatmul.mubr.f32.gmra.mxu0 %v1666
    %v1743 = vpop.f32.mrf.mxu0
    %v1744 = vadd.f32 %v165, %v1743
    %v1745 = vpop.f32.mrf.mxu0
    %1746 = vmatprep.mubr.f32.mxu0 0.0
    %1747 = vmatmul.mubr.f32.gmra.mxu0 %v1669
    %v1748 = vpop.f32.mrf.mxu0
    %v1749 = vadd.f32 %v165, %v1748
    %v1750 = vpop.f32.mrf.mxu0
    %1751 = vmatprep.mubr.f32.mxu0 0.0
    %1752 = vmatmul.mubr.f32.gmra.mxu0 %v1672
    %v1753 = vpop.f32.mrf.mxu0
    %v1754 = vadd.f32 %v165, %v1753
    %v1755 = vpop.f32.mrf.mxu0
    %1756 = vmatprep.mubr.f32.mxu0 0.0
    %1757 = vmatmul.mubr.f32.gmra.mxu0 %v1675
    %v1758 = vpop.f32.mrf.mxu0
    %v1759 = vadd.f32 %v165, %v1758
    %v1760 = vpop.f32.mrf.mxu0
    %1761 = vdwg.mxu0
    %v1762 = vmul.f32 %v1643, %v564
    %v1763 = vmul.f32 %v1648, %v569
    %v1764 = vmul.f32 %v1653, %v574
    %v1765 = vmul.f32 %v1658, %v579
    %1766 = vmatprep.subr.mxu0 0.0
    %1767 = vmatpush1.msra.mxu0 0.0
    %1768 = vmatprep.subr.mxu0 0.0
    %1769 = vmatpush1.msra.mxu0 0.0
    %1770 = vmatprep.subr.mxu0 0.0
    %1771 = vmatpush1.msra.mxu0 0.0
    %1772 = vmatprep.subr.mxu0 0.0
    %1773 = vmatpush1.msra.mxu0 0.0
    %1774 = vmatprep.subr.mxu0 0.0
    %1775 = vmatpush1.msra.mxu0 0.0
    %1776 = vmatprep.subr.mxu0 0.0
    %1777 = vmatpush1.msra.mxu0 0.0
    %1778 = vmatprep.subr.mxu0 0.0
    %1779 = vmatpush1.msra.mxu0 0.0
    %1780 = vmatprep.subr.mxu0 0.0
    %1781 = vmatpush1.msra.mxu0 0.0
    %1782 = vmatprep.subr.mxu0 0.0
    %1783 = vmatpush1.msra.mxu0 0.0
    %1784 = vmatprep.subr.mxu0 0.0
    %1785 = vmatpush1.msra.mxu0 0.0
    %1786 = vmatprep.subr.mxu0 0.0
    %1787 = vmatpush1.msra.mxu0 0.0
    %1788 = vmatprep.subr.mxu0 0.0
    %1789 = vmatpush1.msra.mxu0 0.0
    %1790 = vmatprep.subr.mxu0 0.0
    %1791 = vmatpush1.msra.mxu0 %v1765
    %1792 = vmatprep.subr.mxu0 0.0
    %1793 = vmatpush1.msra.mxu0 %v1764
    %1794 = vmatprep.subr.mxu0 0.0
    %1795 = vmatpush1.msra.mxu0 %v1763
    %1796 = vmatprep.subr.mxu0 0.0
    %1797 = vmatpush1.msra.mxu0 %v1762
    %1798 = vmatprep.subr.mxu0 0.0
    %1799 = vmatpush2.msra.mxu0 0.0
    %1800 = vmatprep.subr.mxu0 0.0
    %1801 = vmatpush2.msra.mxu0 0.0
    %1802 = vmatprep.subr.mxu0 0.0
    %1803 = vmatpush2.msra.mxu0 0.0
    %1804 = vmatprep.subr.mxu0 0.0
    %1805 = vmatpush2.msra.mxu0 0.0
    %1806 = vmatprep.subr.mxu0 0.0
    %1807 = vmatpush2.msra.mxu0 0.0
    %1808 = vmatprep.subr.mxu0 0.0
    %1809 = vmatpush2.msra.mxu0 0.0
    %1810 = vmatprep.subr.mxu0 0.0
    %1811 = vmatpush2.msra.mxu0 0.0
    %1812 = vmatprep.subr.mxu0 0.0
    %1813 = vmatpush2.msra.mxu0 0.0
    %1814 = vmatprep.subr.mxu0 0.0
    %1815 = vmatpush2.msra.mxu0 0.0
    %1816 = vmatprep.subr.mxu0 0.0
    %1817 = vmatpush2.msra.mxu0 0.0
    %1818 = vmatprep.subr.mxu0 0.0
    %1819 = vmatpush2.msra.mxu0 0.0
    %1820 = vmatprep.subr.mxu0 0.0
    %1821 = vmatpush2.msra.mxu0 0.0
    %1822 = vmatprep.subr.mxu0 0.0
    %1823 = vmatpush2.msra.mxu0 0.0
    %1824 = vmatprep.subr.mxu0 0.0
    %1825 = vmatpush2.msra.mxu0 0.0
    %1826 = vmatprep.subr.mxu0 0.0
    %1827 = vmatpush2.msra.mxu0 0.0
    %1828 = vmatprep.subr.mxu0 0.0
    %1829 = vmatpush2.msra.mxu0 0.0
    %1830 = vmatprep.mubr.f32.mxu0 0.0
    %1831 = vmatmul.mubr.f32.gmra.mxu0 %v1666
    %v1832 = vpop.f32.mrf.mxu0
    %v1833 = vadd.f32 %v173, %v1832
    %v1834 = vpop.f32.mrf.mxu0
    %1835 = vmatprep.mubr.f32.mxu0 0.0
    %1836 = vmatmul.mubr.f32.gmra.mxu0 %v1669
    %v1837 = vpop.f32.mrf.mxu0
    %v1838 = vadd.f32 %v173, %v1837
    %v1839 = vpop.f32.mrf.mxu0
    %1840 = vmatprep.mubr.f32.mxu0 0.0
    %1841 = vmatmul.mubr.f32.gmra.mxu0 %v1672
    %v1842 = vpop.f32.mrf.mxu0
    %v1843 = vadd.f32 %v173, %v1842
    %v1844 = vpop.f32.mrf.mxu0
    %1845 = vmatprep.mubr.f32.mxu0 0.0
    %1846 = vmatmul.mubr.f32.gmra.mxu0 %v1675
    %v1847 = vpop.f32.mrf.mxu0
    %v1848 = vadd.f32 %v173, %v1847
    %v1849 = vpop.f32.mrf.mxu0
    %1850 = vdwg.mxu0
    %v1851 = vmul.f32 %v1643, %v709
    %v1852 = vmul.f32 %v1648, %v714
    %v1853 = vmul.f32 %v1653, %v719
    %v1854 = vmul.f32 %v1658, %v724
    %1855 = vmatprep.subr.mxu0 0.0
    %1856 = vmatpush1.msra.mxu0 0.0
    %1857 = vmatprep.subr.mxu0 0.0
    %1858 = vmatpush1.msra.mxu0 0.0
    %1859 = vmatprep.subr.mxu0 0.0
    %1860 = vmatpush1.msra.mxu0 0.0
    %1861 = vmatprep.subr.mxu0 0.0
    %1862 = vmatpush1.msra.mxu0 0.0
    %1863 = vmatprep.subr.mxu0 0.0
    %1864 = vmatpush1.msra.mxu0 0.0
    %1865 = vmatprep.subr.mxu0 0.0
    %1866 = vmatpush1.msra.mxu0 0.0
    %1867 = vmatprep.subr.mxu0 0.0
    %1868 = vmatpush1.msra.mxu0 0.0
    %1869 = vmatprep.subr.mxu0 0.0
    %1870 = vmatpush1.msra.mxu0 0.0
    %1871 = vmatprep.subr.mxu0 0.0
    %1872 = vmatpush1.msra.mxu0 0.0
    %1873 = vmatprep.subr.mxu0 0.0
    %1874 = vmatpush1.msra.mxu0 0.0
    %1875 = vmatprep.subr.mxu0 0.0
    %1876 = vmatpush1.msra.mxu0 0.0
    %1877 = vmatprep.subr.mxu0 0.0
    %1878 = vmatpush1.msra.mxu0 0.0
    %1879 = vmatprep.subr.mxu0 0.0
    %1880 = vmatpush1.msra.mxu0 %v1854
    %1881 = vmatprep.subr.mxu0 0.0
    %1882 = vmatpush1.msra.mxu0 %v1853
    %1883 = vmatprep.subr.mxu0 0.0
    %1884 = vmatpush1.msra.mxu0 %v1852
    %1885 = vmatprep.subr.mxu0 0.0
    %1886 = vmatpush1.msra.mxu0 %v1851
    %1887 = vmatprep.subr.mxu0 0.0
    %1888 = vmatpush2.msra.mxu0 0.0
    %1889 = vmatprep.subr.mxu0 0.0
    %1890 = vmatpush2.msra.mxu0 0.0
    %1891 = vmatprep.subr.mxu0 0.0
    %1892 = vmatpush2.msra.mxu0 0.0
    %1893 = vmatprep.subr.mxu0 0.0
    %1894 = vmatpush2.msra.mxu0 0.0
    %1895 = vmatprep.subr.mxu0 0.0
    %1896 = vmatpush2.msra.mxu0 0.0
    %1897 = vmatprep.subr.mxu0 0.0
    %1898 = vmatpush2.msra.mxu0 0.0
    %1899 = vmatprep.subr.mxu0 0.0
    %1900 = vmatpush2.msra.mxu0 0.0
    %1901 = vmatprep.subr.mxu0 0.0
    %1902 = vmatpush2.msra.mxu0 0.0
    %1903 = vmatprep.subr.mxu0 0.0
    %1904 = vmatpush2.msra.mxu0 0.0
    %1905 = vmatprep.subr.mxu0 0.0
    %1906 = vmatpush2.msra.mxu0 0.0
    %1907 = vmatprep.subr.mxu0 0.0
    %1908 = vmatpush2.msra.mxu0 0.0
    %1909 = vmatprep.subr.mxu0 0.0
    %1910 = vmatpush2.msra.mxu0 0.0
    %1911 = vmatprep.subr.mxu0 0.0
    %1912 = vmatpush2.msra.mxu0 0.0
    %1913 = vmatprep.subr.mxu0 0.0
    %1914 = vmatpush2.msra.mxu0 0.0
    %1915 = vmatprep.subr.mxu0 0.0
    %1916 = vmatpush2.msra.mxu0 0.0
    %1917 = vmatprep.subr.mxu0 0.0
    %1918 = vmatpush2.msra.mxu0 0.0
    %1919 = vmatprep.mubr.f32.mxu0 0.0
    %1920 = vmatmul.mubr.f32.gmra.mxu0 %v1666
    %v1921 = vpop.f32.mrf.mxu0
    %v1922 = vadd.f32 %v181, %v1921
    %v1923 = vpop.f32.mrf.mxu0
    %1924 = vmatprep.mubr.f32.mxu0 0.0
    %1925 = vmatmul.mubr.f32.gmra.mxu0 %v1669
    %v1926 = vpop.f32.mrf.mxu0
    %v1927 = vadd.f32 %v181, %v1926
    %v1928 = vpop.f32.mrf.mxu0
    %1929 = vmatprep.mubr.f32.mxu0 0.0
    %1930 = vmatmul.mubr.f32.gmra.mxu0 %v1672
    %v1931 = vpop.f32.mrf.mxu0
    %v1932 = vadd.f32 %v181, %v1931
    %v1933 = vpop.f32.mrf.mxu0
    %1934 = vmatprep.mubr.f32.mxu0 0.0
    %1935 = vmatmul.mubr.f32.gmra.mxu0 %v1675
    %v1936 = vpop.f32.mrf.mxu0
    %v1937 = vadd.f32 %v181, %v1936
    %v1938 = vpop.f32.mrf.mxu0
    %1939 = vdwg.mxu0
    %v1940 = vmul.f32 %v1643, %v854
    %v1941 = vmul.f32 %v1648, %v859
    %v1942 = vmul.f32 %v1653, %v864
    %v1943 = vmul.f32 %v1658, %v869
    %1944 = vmatprep.subr.mxu0 0.0
    %1945 = vmatpush1.msra.mxu0 0.0
    %1946 = vmatprep.subr.mxu0 0.0
    %1947 = vmatpush1.msra.mxu0 0.0
    %1948 = vmatprep.subr.mxu0 0.0
    %1949 = vmatpush1.msra.mxu0 0.0
    %1950 = vmatprep.subr.mxu0 0.0
    %1951 = vmatpush1.msra.mxu0 0.0
    %1952 = vmatprep.subr.mxu0 0.0
    %1953 = vmatpush1.msra.mxu0 0.0
    %1954 = vmatprep.subr.mxu0 0.0
    %1955 = vmatpush1.msra.mxu0 0.0
    %1956 = vmatprep.subr.mxu0 0.0
    %1957 = vmatpush1.msra.mxu0 0.0
    %1958 = vmatprep.subr.mxu0 0.0
    %1959 = vmatpush1.msra.mxu0 0.0
    %1960 = vmatprep.subr.mxu0 0.0
    %1961 = vmatpush1.msra.mxu0 0.0
    %1962 = vmatprep.subr.mxu0 0.0
    %1963 = vmatpush1.msra.mxu0 0.0
    %1964 = vmatprep.subr.mxu0 0.0
    %1965 = vmatpush1.msra.mxu0 0.0
    %1966 = vmatprep.subr.mxu0 0.0
    %1967 = vmatpush1.msra.mxu0 0.0
    %1968 = vmatprep.subr.mxu0 0.0
    %1969 = vmatpush1.msra.mxu0 %v1943
    %1970 = vmatprep.subr.mxu0 0.0
    %1971 = vmatpush1.msra.mxu0 %v1942
    %1972 = vmatprep.subr.mxu0 0.0
    %1973 = vmatpush1.msra.mxu0 %v1941
    %1974 = vmatprep.subr.mxu0 0.0
    %1975 = vmatpush1.msra.mxu0 %v1940
    %1976 = vmatprep.subr.mxu0 0.0
    %1977 = vmatpush2.msra.mxu0 0.0
    %1978 = vmatprep.subr.mxu0 0.0
    %1979 = vmatpush2.msra.mxu0 0.0
    %1980 = vmatprep.subr.mxu0 0.0
    %1981 = vmatpush2.msra.mxu0 0.0
    %1982 = vmatprep.subr.mxu0 0.0
    %1983 = vmatpush2.msra.mxu0 0.0
    %1984 = vmatprep.subr.mxu0 0.0
    %1985 = vmatpush2.msra.mxu0 0.0
    %1986 = vmatprep.subr.mxu0 0.0
    %1987 = vmatpush2.msra.mxu0 0.0
    %1988 = vmatprep.subr.mxu0 0.0
    %1989 = vmatpush2.msra.mxu0 0.0
    %1990 = vmatprep.subr.mxu0 0.0
    %1991 = vmatpush2.msra.mxu0 0.0
    %1992 = vmatprep.subr.mxu0 0.0
    %1993 = vmatpush2.msra.mxu0 0.0
    %1994 = vmatprep.subr.mxu0 0.0
    %1995 = vmatpush2.msra.mxu0 0.0
    %1996 = vmatprep.subr.mxu0 0.0
    %1997 = vmatpush2.msra.mxu0 0.0
    %1998 = vmatprep.subr.mxu0 0.0
    %1999 = vmatpush2.msra.mxu0 0.0
    %2000 = vmatprep.subr.mxu0 0.0
    %2001 = vmatpush2.msra.mxu0 0.0
    %2002 = vmatprep.subr.mxu0 0.0
    %2003 = vmatpush2.msra.mxu0 0.0
    %2004 = vmatprep.subr.mxu0 0.0
    %2005 = vmatpush2.msra.mxu0 0.0
    %2006 = vmatprep.subr.mxu0 0.0
    %2007 = vmatpush2.msra.mxu0 0.0
    %2008 = vmatprep.mubr.f32.mxu0 0.0
    %2009 = vmatmul.mubr.f32.gmra.mxu0 %v1666
    %v2010 = vpop.f32.mrf.mxu0
    %v2011 = vadd.f32 %v189, %v2010
    %v2012 = vpop.f32.mrf.mxu0
    %2013 = vmatprep.mubr.f32.mxu0 0.0
    %2014 = vmatmul.mubr.f32.gmra.mxu0 %v1669
    %v2015 = vpop.f32.mrf.mxu0
    %v2016 = vadd.f32 %v189, %v2015
    %v2017 = vpop.f32.mrf.mxu0
    %2018 = vmatprep.mubr.f32.mxu0 0.0
    %2019 = vmatmul.mubr.f32.gmra.mxu0 %v1672
    %v2020 = vpop.f32.mrf.mxu0
    %v2021 = vadd.f32 %v189, %v2020
    %v2022 = vpop.f32.mrf.mxu0
    %2023 = vmatprep.mubr.f32.mxu0 0.0
    %2024 = vmatmul.mubr.f32.gmra.mxu0 %v1675
    %v2025 = vpop.f32.mrf.mxu0
    %v2026 = vadd.f32 %v189, %v2025
    %v2027 = vpop.f32.mrf.mxu0
    %2028 = vdwg.mxu0
    %v2029 = vmul.f32 %v1643, %v999
    %v2030 = vmul.f32 %v1648, %v1004
    %v2031 = vmul.f32 %v1653, %v1009
    %v2032 = vmul.f32 %v1658, %v1014
    %2033 = vmatprep.subr.mxu0 0.0
    %2034 = vmatpush1.msra.mxu0 0.0
    %2035 = vmatprep.subr.mxu0 0.0
    %2036 = vmatpush1.msra.mxu0 0.0
    %2037 = vmatprep.subr.mxu0 0.0
    %2038 = vmatpush1.msra.mxu0 0.0
    %2039 = vmatprep.subr.mxu0 0.0
    %2040 = vmatpush1.msra.mxu0 0.0
    %2041 = vmatprep.subr.mxu0 0.0
    %2042 = vmatpush1.msra.mxu0 0.0
    %2043 = vmatprep.subr.mxu0 0.0
    %2044 = vmatpush1.msra.mxu0 0.0
    %2045 = vmatprep.subr.mxu0 0.0
    %2046 = vmatpush1.msra.mxu0 0.0
    %2047 = vmatprep.subr.mxu0 0.0
    %2048 = vmatpush1.msra.mxu0 0.0
    %2049 = vmatprep.subr.mxu0 0.0
    %2050 = vmatpush1.msra.mxu0 0.0
    %2051 = vmatprep.subr.mxu0 0.0
    %2052 = vmatpush1.msra.mxu0 0.0
    %2053 = vmatprep.subr.mxu0 0.0
    %2054 = vmatpush1.msra.mxu0 0.0
    %2055 = vmatprep.subr.mxu0 0.0
    %2056 = vmatpush1.msra.mxu0 0.0
    %2057 = vmatprep.subr.mxu0 0.0
    %2058 = vmatpush1.msra.mxu0 %v2032
    %2059 = vmatprep.subr.mxu0 0.0
    %2060 = vmatpush1.msra.mxu0 %v2031
    %2061 = vmatprep.subr.mxu0 0.0
    %2062 = vmatpush1.msra.mxu0 %v2030
    %2063 = vmatprep.subr.mxu0 0.0
    %2064 = vmatpush1.msra.mxu0 %v2029
    %2065 = vmatprep.subr.mxu0 0.0
    %2066 = vmatpush2.msra.mxu0 0.0
    %2067 = vmatprep.subr.mxu0 0.0
    %2068 = vmatpush2.msra.mxu0 0.0
    %2069 = vmatprep.subr.mxu0 0.0
    %2070 = vmatpush2.msra.mxu0 0.0
    %2071 = vmatprep.subr.mxu0 0.0
    %2072 = vmatpush2.msra.mxu0 0.0
    %2073 = vmatprep.subr.mxu0 0.0
    %2074 = vmatpush2.msra.mxu0 0.0
    %2075 = vmatprep.subr.mxu0 0.0
    %2076 = vmatpush2.msra.mxu0 0.0
    %2077 = vmatprep.subr.mxu0 0.0
    %2078 = vmatpush2.msra.mxu0 0.0
    %2079 = vmatprep.subr.mxu0 0.0
    %2080 = vmatpush2.msra.mxu0 0.0
    %2081 = vmatprep.subr.mxu0 0.0
    %2082 = vmatpush2.msra.mxu0 0.0
    %2083 = vmatprep.subr.mxu0 0.0
    %2084 = vmatpush2.msra.mxu0 0.0
    %2085 = vmatprep.subr.mxu0 0.0
    %2086 = vmatpush2.msra.mxu0 0.0
    %2087 = vmatprep.subr.mxu0 0.0
    %2088 = vmatpush2.msra.mxu0 0.0
    %2089 = vmatprep.subr.mxu0 0.0
    %2090 = vmatpush2.msra.mxu0 0.0
    %2091 = vmatprep.subr.mxu0 0.0
    %2092 = vmatpush2.msra.mxu0 0.0
    %2093 = vmatprep.subr.mxu0 0.0
    %2094 = vmatpush2.msra.mxu0 0.0
    %2095 = vmatprep.subr.mxu0 0.0
    %2096 = vmatpush2.msra.mxu0 0.0
    %2097 = vmatprep.mubr.f32.mxu0 0.0
    %2098 = vmatmul.mubr.f32.gmra.mxu0 %v1666
    %v2099 = vpop.f32.mrf.mxu0
    %v2100 = vadd.f32 %v197, %v2099
    %v2101 = vpop.f32.mrf.mxu0
    %2102 = vmatprep.mubr.f32.mxu0 0.0
    %2103 = vmatmul.mubr.f32.gmra.mxu0 %v1669
    %v2104 = vpop.f32.mrf.mxu0
    %v2105 = vadd.f32 %v197, %v2104
    %v2106 = vpop.f32.mrf.mxu0
    %2107 = vmatprep.mubr.f32.mxu0 0.0
    %2108 = vmatmul.mubr.f32.gmra.mxu0 %v1672
    %v2109 = vpop.f32.mrf.mxu0
    %v2110 = vadd.f32 %v197, %v2109
    %v2111 = vpop.f32.mrf.mxu0
    %2112 = vmatprep.mubr.f32.mxu0 0.0
    %2113 = vmatmul.mubr.f32.gmra.mxu0 %v1675
    %v2114 = vpop.f32.mrf.mxu0
    %v2115 = vadd.f32 %v197, %v2114
    %v2116 = vpop.f32.mrf.mxu0
    %2117 = vdwg.mxu0
    %v2118 = vmul.f32 %v1643, %v1144
    %v2119 = vmul.f32 %v1648, %v1149
    %v2120 = vmul.f32 %v1653, %v1154
    %v2121 = vmul.f32 %v1658, %v1159
    %2122 = vmatprep.subr.mxu0 0.0
    %2123 = vmatpush1.msra.mxu0 0.0
    %2124 = vmatprep.subr.mxu0 0.0
    %2125 = vmatpush1.msra.mxu0 0.0
    %2126 = vmatprep.subr.mxu0 0.0
    %2127 = vmatpush1.msra.mxu0 0.0
    %2128 = vmatprep.subr.mxu0 0.0
    %2129 = vmatpush1.msra.mxu0 0.0
    %2130 = vmatprep.subr.mxu0 0.0
    %2131 = vmatpush1.msra.mxu0 0.0
    %2132 = vmatprep.subr.mxu0 0.0
    %2133 = vmatpush1.msra.mxu0 0.0
    %2134 = vmatprep.subr.mxu0 0.0
    %2135 = vmatpush1.msra.mxu0 0.0
    %2136 = vmatprep.subr.mxu0 0.0
    %2137 = vmatpush1.msra.mxu0 0.0
    %2138 = vmatprep.subr.mxu0 0.0
    %2139 = vmatpush1.msra.mxu0 0.0
    %2140 = vmatprep.subr.mxu0 0.0
    %2141 = vmatpush1.msra.mxu0 0.0
    %2142 = vmatprep.subr.mxu0 0.0
    %2143 = vmatpush1.msra.mxu0 0.0
    %2144 = vmatprep.subr.mxu0 0.0
    %2145 = vmatpush1.msra.mxu0 0.0
    %2146 = vmatprep.subr.mxu0 0.0
    %2147 = vmatpush1.msra.mxu0 %v2121
    %2148 = vmatprep.subr.mxu0 0.0
    %2149 = vmatpush1.msra.mxu0 %v2120
    %2150 = vmatprep.subr.mxu0 0.0
    %2151 = vmatpush1.msra.mxu0 %v2119
    %2152 = vmatprep.subr.mxu0 0.0
    %2153 = vmatpush1.msra.mxu0 %v2118
    %2154 = vmatprep.subr.mxu0 0.0
    %2155 = vmatpush2.msra.mxu0 0.0
    %2156 = vmatprep.subr.mxu0 0.0
    %2157 = vmatpush2.msra.mxu0 0.0
    %2158 = vmatprep.subr.mxu0 0.0
    %2159 = vmatpush2.msra.mxu0 0.0
    %2160 = vmatprep.subr.mxu0 0.0
    %2161 = vmatpush2.msra.mxu0 0.0
    %2162 = vmatprep.subr.mxu0 0.0
    %2163 = vmatpush2.msra.mxu0 0.0
    %2164 = vmatprep.subr.mxu0 0.0
    %2165 = vmatpush2.msra.mxu0 0.0
    %2166 = vmatprep.subr.mxu0 0.0
    %2167 = vmatpush2.msra.mxu0 0.0
    %2168 = vmatprep.subr.mxu0 0.0
    %2169 = vmatpush2.msra.mxu0 0.0
    %2170 = vmatprep.subr.mxu0 0.0
    %2171 = vmatpush2.msra.mxu0 0.0
    %2172 = vmatprep.subr.mxu0 0.0
    %2173 = vmatpush2.msra.mxu0 0.0
    %2174 = vmatprep.subr.mxu0 0.0
    %2175 = vmatpush2.msra.mxu0 0.0
    %2176 = vmatprep.subr.mxu0 0.0
    %2177 = vmatpush2.msra.mxu0 0.0
    %2178 = vmatprep.subr.mxu0 0.0
    %2179 = vmatpush2.msra.mxu0 0.0
    %2180 = vmatprep.subr.mxu0 0.0
    %2181 = vmatpush2.msra.mxu0 0.0
    %2182 = vmatprep.subr.mxu0 0.0
    %2183 = vmatpush2.msra.mxu0 0.0
    %2184 = vmatprep.subr.mxu0 0.0
    %2185 = vmatpush2.msra.mxu0 0.0
    %2186 = vmatprep.mubr.f32.mxu0 0.0
    %2187 = vmatmul.mubr.f32.gmra.mxu0 %v1666
    %v2188 = vpop.f32.mrf.mxu0
    %v2189 = vadd.f32 %v205, %v2188
    %v2190 = vpop.f32.mrf.mxu0
    %2191 = vmatprep.mubr.f32.mxu0 0.0
    %2192 = vmatmul.mubr.f32.gmra.mxu0 %v1669
    %v2193 = vpop.f32.mrf.mxu0
    %v2194 = vadd.f32 %v205, %v2193
    %v2195 = vpop.f32.mrf.mxu0
    %2196 = vmatprep.mubr.f32.mxu0 0.0
    %2197 = vmatmul.mubr.f32.gmra.mxu0 %v1672
    %v2198 = vpop.f32.mrf.mxu0
    %v2199 = vadd.f32 %v205, %v2198
    %v2200 = vpop.f32.mrf.mxu0
    %2201 = vmatprep.mubr.f32.mxu0 0.0
    %2202 = vmatmul.mubr.f32.gmra.mxu0 %v1675
    %v2203 = vpop.f32.mrf.mxu0
    %v2204 = vadd.f32 %v205, %v2203
    %v2205 = vpop.f32.mrf.mxu0
    %2206 = vdwg.mxu0
    %v2207 = vmul.f32 %v1643, %v1289
    %v2208 = vmul.f32 %v1648, %v1294
    %v2209 = vmul.f32 %v1653, %v1299
    %v2210 = vmul.f32 %v1658, %v1304
    %2211 = vmatprep.subr.mxu0 0.0
    %2212 = vmatpush1.msra.mxu0 0.0
    %2213 = vmatprep.subr.mxu0 0.0
    %2214 = vmatpush1.msra.mxu0 0.0
    %2215 = vmatprep.subr.mxu0 0.0
    %2216 = vmatpush1.msra.mxu0 0.0
    %2217 = vmatprep.subr.mxu0 0.0
    %2218 = vmatpush1.msra.mxu0 0.0
    %2219 = vmatprep.subr.mxu0 0.0
    %2220 = vmatpush1.msra.mxu0 0.0
    %2221 = vmatprep.subr.mxu0 0.0
    %2222 = vmatpush1.msra.mxu0 0.0
    %2223 = vmatprep.subr.mxu0 0.0
    %2224 = vmatpush1.msra.mxu0 0.0
    %2225 = vmatprep.subr.mxu0 0.0
    %2226 = vmatpush1.msra.mxu0 0.0
    %2227 = vmatprep.subr.mxu0 0.0
    %2228 = vmatpush1.msra.mxu0 0.0
    %2229 = vmatprep.subr.mxu0 0.0
    %2230 = vmatpush1.msra.mxu0 0.0
    %2231 = vmatprep.subr.mxu0 0.0
    %2232 = vmatpush1.msra.mxu0 0.0
    %2233 = vmatprep.subr.mxu0 0.0
    %2234 = vmatpush1.msra.mxu0 0.0
    %2235 = vmatprep.subr.mxu0 0.0
    %2236 = vmatpush1.msra.mxu0 %v2210
    %2237 = vmatprep.subr.mxu0 0.0
    %2238 = vmatpush1.msra.mxu0 %v2209
    %2239 = vmatprep.subr.mxu0 0.0
    %2240 = vmatpush1.msra.mxu0 %v2208
    %2241 = vmatprep.subr.mxu0 0.0
    %2242 = vmatpush1.msra.mxu0 %v2207
    %2243 = vmatprep.subr.mxu0 0.0
    %2244 = vmatpush2.msra.mxu0 0.0
    %2245 = vmatprep.subr.mxu0 0.0
    %2246 = vmatpush2.msra.mxu0 0.0
    %2247 = vmatprep.subr.mxu0 0.0
    %2248 = vmatpush2.msra.mxu0 0.0
    %2249 = vmatprep.subr.mxu0 0.0
    %2250 = vmatpush2.msra.mxu0 0.0
    %2251 = vmatprep.subr.mxu0 0.0
    %2252 = vmatpush2.msra.mxu0 0.0
    %2253 = vmatprep.subr.mxu0 0.0
    %2254 = vmatpush2.msra.mxu0 0.0
    %2255 = vmatprep.subr.mxu0 0.0
    %2256 = vmatpush2.msra.mxu0 0.0
    %2257 = vmatprep.subr.mxu0 0.0
    %2258 = vmatpush2.msra.mxu0 0.0
    %2259 = vmatprep.subr.mxu0 0.0
    %2260 = vmatpush2.msra.mxu0 0.0
    %2261 = vmatprep.subr.mxu0 0.0
    %2262 = vmatpush2.msra.mxu0 0.0
    %2263 = vmatprep.subr.mxu0 0.0
    %2264 = vmatpush2.msra.mxu0 0.0
    %2265 = vmatprep.subr.mxu0 0.0
    %2266 = vmatpush2.msra.mxu0 0.0
    %2267 = vmatprep.subr.mxu0 0.0
    %2268 = vmatpush2.msra.mxu0 0.0
    %2269 = vmatprep.subr.mxu0 0.0
    %2270 = vmatpush2.msra.mxu0 0.0
    %2271 = vmatprep.subr.mxu0 0.0
    %2272 = vmatpush2.msra.mxu0 0.0
    %2273 = vmatprep.subr.mxu0 0.0
    %2274 = vmatpush2.msra.mxu0 0.0
    %2275 = vmatprep.mubr.f32.mxu0 0.0
    %2276 = vmatmul.mubr.f32.gmra.mxu0 %v1666
    %v2277 = vpop.f32.mrf.mxu0
    %v2278 = vadd.f32 %v213, %v2277
    %v2279 = vpop.f32.mrf.mxu0
    %2280 = vmatprep.mubr.f32.mxu0 0.0
    %2281 = vmatmul.mubr.f32.gmra.mxu0 %v1669
    %v2282 = vpop.f32.mrf.mxu0
    %v2283 = vadd.f32 %v213, %v2282
    %v2284 = vpop.f32.mrf.mxu0
    %2285 = vmatprep.mubr.f32.mxu0 0.0
    %2286 = vmatmul.mubr.f32.gmra.mxu0 %v1672
    %v2287 = vpop.f32.mrf.mxu0
    %v2288 = vadd.f32 %v213, %v2287
    %v2289 = vpop.f32.mrf.mxu0
    %2290 = vmatprep.mubr.f32.mxu0 0.0
    %2291 = vmatmul.mubr.f32.gmra.mxu0 %v1675
    %v2292 = vpop.f32.mrf.mxu0
    %v2293 = vadd.f32 %v213, %v2292
    %v2294 = vpop.f32.mrf.mxu0
    %2295 = vdwg.mxu0
    %v2296 = vmul.f32 %v1643, %v1434
    %v2297 = vmul.f32 %v1648, %v1439
    %v2298 = vmul.f32 %v1653, %v1444
    %v2299 = vmul.f32 %v1658, %v1449
    %2300 = vmatprep.subr.mxu0 0.0
    %2301 = vmatpush1.msra.mxu0 0.0
    %2302 = vmatprep.subr.mxu0 0.0
    %2303 = vmatpush1.msra.mxu0 0.0
    %2304 = vmatprep.subr.mxu0 0.0
    %2305 = vmatpush1.msra.mxu0 0.0
    %2306 = vmatprep.subr.mxu0 0.0
    %2307 = vmatpush1.msra.mxu0 0.0
    %2308 = vmatprep.subr.mxu0 0.0
    %2309 = vmatpush1.msra.mxu0 0.0
    %2310 = vmatprep.subr.mxu0 0.0
    %2311 = vmatpush1.msra.mxu0 0.0
    %2312 = vmatprep.subr.mxu0 0.0
    %2313 = vmatpush1.msra.mxu0 0.0
    %2314 = vmatprep.subr.mxu0 0.0
    %2315 = vmatpush1.msra.mxu0 0.0
    %2316 = vmatprep.subr.mxu0 0.0
    %2317 = vmatpush1.msra.mxu0 0.0
    %2318 = vmatprep.subr.mxu0 0.0
    %2319 = vmatpush1.msra.mxu0 0.0
    %2320 = vmatprep.subr.mxu0 0.0
    %2321 = vmatpush1.msra.mxu0 0.0
    %2322 = vmatprep.subr.mxu0 0.0
    %2323 = vmatpush1.msra.mxu0 0.0
    %2324 = vmatprep.subr.mxu0 0.0
    %2325 = vmatpush1.msra.mxu0 %v2299
    %2326 = vmatprep.subr.mxu0 0.0
    %2327 = vmatpush1.msra.mxu0 %v2298
    %2328 = vmatprep.subr.mxu0 0.0
    %2329 = vmatpush1.msra.mxu0 %v2297
    %2330 = vmatprep.subr.mxu0 0.0
    %2331 = vmatpush1.msra.mxu0 %v2296
    %2332 = vmatprep.subr.mxu0 0.0
    %2333 = vmatpush2.msra.mxu0 0.0
    %2334 = vmatprep.subr.mxu0 0.0
    %2335 = vmatpush2.msra.mxu0 0.0
    %2336 = vmatprep.subr.mxu0 0.0
    %2337 = vmatpush2.msra.mxu0 0.0
    %2338 = vmatprep.subr.mxu0 0.0
    %2339 = vmatpush2.msra.mxu0 0.0
    %2340 = vmatprep.subr.mxu0 0.0
    %2341 = vmatpush2.msra.mxu0 0.0
    %2342 = vmatprep.subr.mxu0 0.0
    %2343 = vmatpush2.msra.mxu0 0.0
    %2344 = vmatprep.subr.mxu0 0.0
    %2345 = vmatpush2.msra.mxu0 0.0
    %2346 = vmatprep.subr.mxu0 0.0
    %2347 = vmatpush2.msra.mxu0 0.0
    %2348 = vmatprep.subr.mxu0 0.0
    %2349 = vmatpush2.msra.mxu0 0.0
    %2350 = vmatprep.subr.mxu0 0.0
    %2351 = vmatpush2.msra.mxu0 0.0
    %2352 = vmatprep.subr.mxu0 0.0
    %2353 = vmatpush2.msra.mxu0 0.0
    %2354 = vmatprep.subr.mxu0 0.0
    %2355 = vmatpush2.msra.mxu0 0.0
    %2356 = vmatprep.subr.mxu0 0.0
    %2357 = vmatpush2.msra.mxu0 0.0
    %2358 = vmatprep.subr.mxu0 0.0
    %2359 = vmatpush2.msra.mxu0 0.0
    %2360 = vmatprep.subr.mxu0 0.0
    %2361 = vmatpush2.msra.mxu0 0.0
    %2362 = vmatprep.subr.mxu0 0.0
    %2363 = vmatpush2.msra.mxu0 0.0
    %2364 = vmatprep.mubr.f32.mxu0 0.0
    %2365 = vmatmul.mubr.f32.gmra.mxu0 %v1666
    %v2366 = vpop.f32.mrf.mxu0
    %v2367 = vadd.f32 %v221, %v2366
    %v2368 = vpop.f32.mrf.mxu0
    %2369 = vmatprep.mubr.f32.mxu0 0.0
    %2370 = vmatmul.mubr.f32.gmra.mxu0 %v1669
    %v2371 = vpop.f32.mrf.mxu0
    %v2372 = vadd.f32 %v221, %v2371
    %v2373 = vpop.f32.mrf.mxu0
    %2374 = vmatprep.mubr.f32.mxu0 0.0
    %2375 = vmatmul.mubr.f32.gmra.mxu0 %v1672
    %v2376 = vpop.f32.mrf.mxu0
    %v2377 = vadd.f32 %v221, %v2376
    %v2378 = vpop.f32.mrf.mxu0
    %2379 = vmatprep.mubr.f32.mxu0 0.0
    %2380 = vmatmul.mubr.f32.gmra.mxu0 %v1675
    %v2381 = vpop.f32.mrf.mxu0
    %v2382 = vadd.f32 %v221, %v2381
    %v2383 = vpop.f32.mrf.mxu0
    %2384 = vdwg.mxu0
    %v2385 = vmax.f32 %v1744, %v1833
    %v2386 = vmax.f32 %v1749, %v1838
    %v2387 = vmax.f32 %v1754, %v1843
    %v2388 = vmax.f32 %v1759, %v1848
    %v2389 = vmax.f32 %v2385, %v1922
    %v2390 = vmax.f32 %v2386, %v1927
    %v2391 = vmax.f32 %v2387, %v1932
    %v2392 = vmax.f32 %v2388, %v1937
    %v2393 = vmax.f32 %v2389, %v2011
    %v2394 = vmax.f32 %v2390, %v2016
    %v2395 = vmax.f32 %v2391, %v2021
    %v2396 = vmax.f32 %v2392, %v2026
    %v2397 = vmax.f32 %v2393, %v2100
    %v2398 = vmax.f32 %v2394, %v2105
    %v2399 = vmax.f32 %v2395, %v2110
    %v2400 = vmax.f32 %v2396, %v2115
    %v2401 = vmax.f32 %v2397, %v2189
    %v2402 = vmax.f32 %v2398, %v2194
    %v2403 = vmax.f32 %v2399, %v2199
    %v2404 = vmax.f32 %v2400, %v2204
    %v2405 = vmax.f32 %v2401, %v2278
    %v2406 = vmax.f32 %v2402, %v2283
    %v2407 = vmax.f32 %v2403, %v2288
    %v2408 = vmax.f32 %v2404, %v2293
    %v2409 = vmax.f32 %v2405, %v2367
    %v2410 = vmax.f32 %v2406, %v2372
    %v2411 = vmax.f32 %v2407, %v2377
    %v2412 = vmax.f32 %v2408, %v2382
    %v2413 = vsub.f32 %v1744, %v2409
    %v2414 = vsub.f32 %v1749, %v2410
    %v2415 = vsub.f32 %v1754, %v2411
    %v2416 = vsub.f32 %v1759, %v2412
    %v2417 = vmul.f32 %v2413, 1.442695
    %v2418 = vpow.pop %v2417
    %v2419 = vmul.f32 %v2414, 1.442695
    %v2420 = vpow.pop %v2419
    %v2421 = vmul.f32 %v2415, 1.442695
    %v2422 = vpow.pop %v2421
    %v2423 = vmul.f32 %v2416, 1.442695
    %v2424 = vpow.pop %v2423
    %v2425 = vsub.f32 %v1833, %v2409
    %v2426 = vsub.f32 %v1838, %v2410
    %v2427 = vsub.f32 %v1843, %v2411
    %v2428 = vsub.f32 %v1848, %v2412
    %v2429 = vmul.f32 %v2425, 1.442695
    %v2430 = vpow.pop %v2429
    %v2431 = vmul.f32 %v2426, 1.442695
    %v2432 = vpow.pop %v2431
    %v2433 = vmul.f32 %v2427, 1.442695
    %v2434 = vpow.pop %v2433
    %v2435 = vmul.f32 %v2428, 1.442695
    %v2436 = vpow.pop %v2435
    %v2437 = vsub.f32 %v1922, %v2409
    %v2438 = vsub.f32 %v1927, %v2410
    %v2439 = vsub.f32 %v1932, %v2411
    %v2440 = vsub.f32 %v1937, %v2412
    %v2441 = vmul.f32 %v2437, 1.442695
    %v2442 = vpow.pop %v2441
    %v2443 = vmul.f32 %v2438, 1.442695
    %v2444 = vpow.pop %v2443
    %v2445 = vmul.f32 %v2439, 1.442695
    %v2446 = vpow.pop %v2445
    %v2447 = vmul.f32 %v2440, 1.442695
    %v2448 = vpow.pop %v2447
    %v2449 = vsub.f32 %v2011, %v2409
    %v2450 = vsub.f32 %v2016, %v2410
    %v2451 = vsub.f32 %v2021, %v2411
    %v2452 = vsub.f32 %v2026, %v2412
    %v2453 = vmul.f32 %v2449, 1.442695
    %v2454 = vpow.pop %v2453
    %v2455 = vmul.f32 %v2450, 1.442695
    %v2456 = vpow.pop %v2455
    %v2457 = vmul.f32 %v2451, 1.442695
    %v2458 = vpow.pop %v2457
    %v2459 = vmul.f32 %v2452, 1.442695
    %v2460 = vpow.pop %v2459
    %v2461 = vsub.f32 %v2100, %v2409
    %v2462 = vsub.f32 %v2105, %v2410
    %v2463 = vsub.f32 %v2110, %v2411
    %v2464 = vsub.f32 %v2115, %v2412
    %v2465 = vmul.f32 %v2461, 1.442695
    %v2466 = vpow.pop %v2465
    %v2467 = vmul.f32 %v2462, 1.442695
    %v2468 = vpow.pop %v2467
    %v2469 = vmul.f32 %v2463, 1.442695
    %v2470 = vpow.pop %v2469
    %v2471 = vmul.f32 %v2464, 1.442695
    %v2472 = vpow.pop %v2471
    %v2473 = vsub.f32 %v2189, %v2409
    %v2474 = vsub.f32 %v2194, %v2410
    %v2475 = vsub.f32 %v2199, %v2411
    %v2476 = vsub.f32 %v2204, %v2412
    %v2477 = vmul.f32 %v2473, 1.442695
    %v2478 = vpow.pop %v2477
    %v2479 = vmul.f32 %v2474, 1.442695
    %v2480 = vpow.pop %v2479
    %v2481 = vmul.f32 %v2475, 1.442695
    %v2482 = vpow.pop %v2481
    %v2483 = vmul.f32 %v2476, 1.442695
    %v2484 = vpow.pop %v2483
    %v2485 = vsub.f32 %v2278, %v2409
    %v2486 = vsub.f32 %v2283, %v2410
    %v2487 = vsub.f32 %v2288, %v2411
    %v2488 = vsub.f32 %v2293, %v2412
    %v2489 = vmul.f32 %v2485, 1.442695
    %v2490 = vpow.pop %v2489
    %v2491 = vmul.f32 %v2486, 1.442695
    %v2492 = vpow.pop %v2491
    %v2493 = vmul.f32 %v2487, 1.442695
    %v2494 = vpow.pop %v2493
    %v2495 = vmul.f32 %v2488, 1.442695
    %v2496 = vpow.pop %v2495
    %v2497 = vsub.f32 %v2367, %v2409
    %v2498 = vsub.f32 %v2372, %v2410
    %v2499 = vsub.f32 %v2377, %v2411
    %v2500 = vsub.f32 %v2382, %v2412
    %v2501 = vmul.f32 %v2497, 1.442695
    %v2502 = vpow.pop %v2501
    %v2503 = vmul.f32 %v2498, 1.442695
    %v2504 = vpow.pop %v2503
    %v2505 = vmul.f32 %v2499, 1.442695
    %v2506 = vpow.pop %v2505
    %v2507 = vmul.f32 %v2500, 1.442695
    %v2508 = vpow.pop %v2507
    %v2509 = vadd.f32 %v2418, %v2430
    %v2510 = vadd.f32 %v2420, %v2432
    %v2511 = vadd.f32 %v2422, %v2434
    %v2512 = vadd.f32 %v2424, %v2436
    %v2513 = vadd.f32 %v2509, %v2442
    %v2514 = vadd.f32 %v2510, %v2444
    %v2515 = vadd.f32 %v2511, %v2446
    %v2516 = vadd.f32 %v2512, %v2448
    %v2517 = vadd.f32 %v2513, %v2454
    %v2518 = vadd.f32 %v2514, %v2456
    %v2519 = vadd.f32 %v2515, %v2458
    %v2520 = vadd.f32 %v2516, %v2460
    %v2521 = vadd.f32 %v2517, %v2466
    %v2522 = vadd.f32 %v2518, %v2468
    %v2523 = vadd.f32 %v2519, %v2470
    %v2524 = vadd.f32 %v2520, %v2472
    %v2525 = vadd.f32 %v2521, %v2478
    %v2526 = vadd.f32 %v2522, %v2480
    %v2527 = vadd.f32 %v2523, %v2482
    %v2528 = vadd.f32 %v2524, %v2484
    %v2529 = vadd.f32 %v2525, %v2490
    %v2530 = vadd.f32 %v2526, %v2492
    %v2531 = vadd.f32 %v2527, %v2494
    %v2532 = vadd.f32 %v2528, %v2496
    %v2533 = vadd.f32 %v2529, %v2502
    %v2534 = vadd.f32 %v2530, %v2504
    %v2535 = vadd.f32 %v2531, %v2506
    %v2536 = vadd.f32 %v2532, %v2508
    %v2537 = vmul.f32 %v2418, %v439
    %v2538 = vmul.f32 %v2420, %v444
    %v2539 = vmul.f32 %v2422, %v449
    %v2540 = vmul.f32 %v2424, %v454
    %v2541 = vmul.f32 %v2430, %v584
    %v2542 = vmul.f32 %v2432, %v589
    %v2543 = vmul.f32 %v2434, %v594
    %v2544 = vmul.f32 %v2436, %v599
    %v2545 = vadd.f32 %v2537, %v2541
    %v2546 = vadd.f32 %v2538, %v2542
    %v2547 = vadd.f32 %v2539, %v2543
    %v2548 = vadd.f32 %v2540, %v2544
    %v2549 = vmul.f32 %v2442, %v729
    %v2550 = vmul.f32 %v2444, %v734
    %v2551 = vmul.f32 %v2446, %v739
    %v2552 = vmul.f32 %v2448, %v744
    %v2553 = vadd.f32 %v2545, %v2549
    %v2554 = vadd.f32 %v2546, %v2550
    %v2555 = vadd.f32 %v2547, %v2551
    %v2556 = vadd.f32 %v2548, %v2552
    %v2557 = vmul.f32 %v2454, %v874
    %v2558 = vmul.f32 %v2456, %v879
    %v2559 = vmul.f32 %v2458, %v884
    %v2560 = vmul.f32 %v2460, %v889
    %v2561 = vadd.f32 %v2553, %v2557
    %v2562 = vadd.f32 %v2554, %v2558
    %v2563 = vadd.f32 %v2555, %v2559
    %v2564 = vadd.f32 %v2556, %v2560
    %v2565 = vmul.f32 %v2466, %v1019
    %v2566 = vmul.f32 %v2468, %v1024
    %v2567 = vmul.f32 %v2470, %v1029
    %v2568 = vmul.f32 %v2472, %v1034
    %v2569 = vadd.f32 %v2561, %v2565
    %v2570 = vadd.f32 %v2562, %v2566
    %v2571 = vadd.f32 %v2563, %v2567
    %v2572 = vadd.f32 %v2564, %v2568
    %v2573 = vmul.f32 %v2478, %v1164
    %v2574 = vmul.f32 %v2480, %v1169
    %v2575 = vmul.f32 %v2482, %v1174
    %v2576 = vmul.f32 %v2484, %v1179
    %v2577 = vadd.f32 %v2569, %v2573
    %v2578 = vadd.f32 %v2570, %v2574
    %v2579 = vadd.f32 %v2571, %v2575
    %v2580 = vadd.f32 %v2572, %v2576
    %v2581 = vmul.f32 %v2490, %v1309
    %v2582 = vmul.f32 %v2492, %v1314
    %v2583 = vmul.f32 %v2494, %v1319
    %v2584 = vmul.f32 %v2496, %v1324
    %v2585 = vadd.f32 %v2577, %v2581
    %v2586 = vadd.f32 %v2578, %v2582
    %v2587 = vadd.f32 %v2579, %v2583
    %v2588 = vadd.f32 %v2580, %v2584
    %v2589 = vmul.f32 %v2502, %v1454
    %v2590 = vmul.f32 %v2504, %v1459
    %v2591 = vmul.f32 %v2506, %v1464
    %v2592 = vmul.f32 %v2508, %v1469
    %v2593 = vadd.f32 %v2585, %v2589
    %v2594 = vadd.f32 %v2586, %v2590
    %v2595 = vadd.f32 %v2587, %v2591
    %v2596 = vadd.f32 %v2588, %v2592
    %v2597 = vrcp.pop %v2533
    %v2598 = vrcp.pop %v2534
    %v2599 = vrcp.pop %v2535
    %v2600 = vrcp.pop %v2536
    %v2601 = vmul.f32 %v2593, %v2597
    %v2602 = vmul.f32 %v2594, %v2598
    %v2603 = vmul.f32 %v2595, %v2599
    %v2604 = vmul.f32 %v2596, %v2600
    %v2605 = vld [vmem:[%s8] sm:$0xff]
    %v2606 = vld [vmem:[%s8 + $0x8] sm:$0xff]
    %v2607 = vld [vmem:[%s8 + $0x10] sm:$0xff]
    %v2608 = vld [vmem:[%s8 + $0x18] sm:$0xff]
    %v2609 = vld [vmem:[%s9] sm:$0xff]
    %v2610 = vld [vmem:[%s9 + $0x8] sm:$0xff]
    %v2611 = vld [vmem:[%s9 + $0x10] sm:$0xff]
    %v2612 = vld [vmem:[%s9 + $0x18] sm:$0xff]
    %2614 = vset.pattern.permute.xlu0 0
    %2615 = vperm.xlu0 %2614, %v2609
    %v2616 = vpop.permute.xlu0 %2615
    %2619 = vset.pattern.permute.xlu0 0
    %2620 = vperm.xlu0 %2619, %v2610
    %v2621 = vpop.permute.xlu0 %2620
    %2624 = vset.pattern.permute.xlu0 0
    %2625 = vperm.xlu0 %2624, %v2611
    %v2626 = vpop.permute.xlu0 %2625
    %2629 = vset.pattern.permute.xlu0 0
    %2630 = vperm.xlu0 %2629, %v2612
    %v2631 = vpop.permute.xlu0 %2630
    %v2634 = vsel %vm303, %v2605, 0
    %v2637 = vsel %vm303, %v2606, 0
    %v2640 = vsel %vm303, %v2607, 0
    %v2643 = vsel %vm303, %v2608, 0
    %2645 = vmatprep.subr.mxu0 0.0
    %2646 = vmatpush1.msra.mxu0 0.0
    %2647 = vmatprep.subr.mxu0 0.0
    %2648 = vmatpush1.msra.mxu0 0.0
    %2649 = vmatprep.subr.mxu0 0.0
    %2650 = vmatpush1.msra.mxu0 0.0
    %2651 = vmatprep.subr.mxu0 0.0
    %2652 = vmatpush1.msra.mxu0 0.0
    %2653 = vmatprep.subr.mxu0 0.0
    %2654 = vmatpush1.msra.mxu0 0.0
    %2655 = vmatprep.subr.mxu0 0.0
    %2656 = vmatpush1.msra.mxu0 0.0
    %2657 = vmatprep.subr.mxu0 0.0
    %2658 = vmatpush1.msra.mxu0 0.0
    %2659 = vmatprep.subr.mxu0 0.0
    %2660 = vmatpush1.msra.mxu0 0.0
    %2661 = vmatprep.subr.mxu0 0.0
    %2662 = vmatpush1.msra.mxu0 0.0
    %2663 = vmatprep.subr.mxu0 0.0
    %2664 = vmatpush1.msra.mxu0 0.0
    %2665 = vmatprep.subr.mxu0 0.0
    %2666 = vmatpush1.msra.mxu0 0.0
    %2667 = vmatprep.subr.mxu0 0.0
    %2668 = vmatpush1.msra.mxu0 0.0
    %2669 = vmatprep.subr.mxu0 0.0
    %2670 = vmatpush1.msra.mxu0 %v2604
    %2671 = vmatprep.subr.mxu0 0.0
    %2672 = vmatpush1.msra.mxu0 %v2603
    %2673 = vmatprep.subr.mxu0 0.0
    %2674 = vmatpush1.msra.mxu0 %v2602
    %2675 = vmatprep.subr.mxu0 0.0
    %2676 = vmatpush1.msra.mxu0 %v2601
    %2677 = vmatprep.subr.mxu0 0.0
    %2678 = vmatpush2.msra.mxu0 0.0
    %2679 = vmatprep.subr.mxu0 0.0
    %2680 = vmatpush2.msra.mxu0 0.0
    %2681 = vmatprep.subr.mxu0 0.0
    %2682 = vmatpush2.msra.mxu0 0.0
    %2683 = vmatprep.subr.mxu0 0.0
    %2684 = vmatpush2.msra.mxu0 0.0
    %2685 = vmatprep.subr.mxu0 0.0
    %2686 = vmatpush2.msra.mxu0 0.0
    %2687 = vmatprep.subr.mxu0 0.0
    %2688 = vmatpush2.msra.mxu0 0.0
    %2689 = vmatprep.subr.mxu0 0.0
    %2690 = vmatpush2.msra.mxu0 0.0
    %2691 = vmatprep.subr.mxu0 0.0
    %2692 = vmatpush2.msra.mxu0 0.0
    %2693 = vmatprep.subr.mxu0 0.0
    %2694 = vmatpush2.msra.mxu0 0.0
    %2695 = vmatprep.subr.mxu0 0.0
    %2696 = vmatpush2.msra.mxu0 0.0
    %2697 = vmatprep.subr.mxu0 0.0
    %2698 = vmatpush2.msra.mxu0 0.0
    %2699 = vmatprep.subr.mxu0 0.0
    %2700 = vmatpush2.msra.mxu0 0.0
    %2701 = vmatprep.subr.mxu0 0.0
    %2702 = vmatpush2.msra.mxu0 0.0
    %2703 = vmatprep.subr.mxu0 0.0
    %2704 = vmatpush2.msra.mxu0 0.0
    %2705 = vmatprep.subr.mxu0 0.0
    %2706 = vmatpush2.msra.mxu0 0.0
    %2707 = vmatprep.subr.mxu0 0.0
    %2708 = vmatpush2.msra.mxu0 0.0
    %2709 = vmatprep.mubr.f32.mxu0 0.0
    %2710 = vmatmul.mubr.f32.gmra.mxu0 %v2634
    %v2711 = vpop.f32.mrf.mxu0
    %v2712 = vadd.f32 %v2616, %v2711
    %v2713 = vpop.f32.mrf.mxu0
    %2714 = vmatprep.mubr.f32.mxu0 0.0
    %2715 = vmatmul.mubr.f32.gmra.mxu0 %v2637
    %v2716 = vpop.f32.mrf.mxu0
    %v2717 = vadd.f32 %v2621, %v2716
    %v2718 = vpop.f32.mrf.mxu0
    %2719 = vmatprep.mubr.f32.mxu0 0.0
    %2720 = vmatmul.mubr.f32.gmra.mxu0 %v2640
    %v2721 = vpop.f32.mrf.mxu0
    %v2722 = vadd.f32 %v2626, %v2721
    %v2723 = vpop.f32.mrf.mxu0
    %2724 = vmatprep.mubr.f32.mxu0 0.0
    %2725 = vmatmul.mubr.f32.gmra.mxu0 %v2643
    %v2726 = vpop.f32.mrf.mxu0
    %v2727 = vadd.f32 %v2631, %v2726
    %v2728 = vpop.f32.mrf.mxu0
    %2729 = vdwg.mxu0
    %v2730 = vadd.f32 %v1519, %v2712
    %v2731 = vadd.f32 %v1524, %v2717
    %v2732 = vadd.f32 %v1529, %v2722
    %v2733 = vadd.f32 %v1534, %v2727
    %v2734 = vld [vmem:[%s10] sm:$0xff]
    %v2735 = vld [vmem:[%s10 + $0x8] sm:$0xff]
    %v2736 = vld [vmem:[%s10 + $0x10] sm:$0xff]
    %v2737 = vld [vmem:[%s10 + $0x18] sm:$0xff]
    %v2738 = vld [vmem:[%s11] sm:$0xff]
    %v2739 = vld [vmem:[%s11 + $0x8] sm:$0xff]
    %v2740 = vld [vmem:[%s11 + $0x10] sm:$0xff]
    %v2741 = vld [vmem:[%s11 + $0x18] sm:$0xff]
    %v2742 = vadd.f32 %v2730, %v2731
    %v2743 = vadd.f32 %v2742, %v2732
    %v2744 = vadd.f32 %v2743, %v2733
    %v2745 = vrot.slane %v2744, 4
    %v2746 = vadd.f32 %v2744, %v2745
    %v2747 = vrot.slane %v2746, 2
    %v2748 = vadd.f32 %v2746, %v2747
    %v2749 = vrot.slane %v2748, 1
    %v2750 = vadd.f32 %v2748, %v2749
    %v2751 = vrcp.pop 32.0
    %v2752 = vmul.f32 %v2750, %v2751
    %v2753 = vsub.f32 %v2730, %v2752
    %v2754 = vsub.f32 %v2731, %v2752
    %v2755 = vsub.f32 %v2732, %v2752
    %v2756 = vsub.f32 %v2733, %v2752
    %v2757 = vmul.f32 %v2753, %v2753
    %v2758 = vmul.f32 %v2754, %v2754
    %v2759 = vmul.f32 %v2755, %v2755
    %v2760 = vmul.f32 %v2756, %v2756
    %v2761 = vadd.f32 %v2757, %v2758
    %v2762 = vadd.f32 %v2761, %v2759
    %v2763 = vadd.f32 %v2762, %v2760
    %v2764 = vrot.slane %v2763, 4
    %v2765 = vadd.f32 %v2763, %v2764
    %v2766 = vrot.slane %v2765, 2
    %v2767 = vadd.f32 %v2765, %v2766
    %v2768 = vrot.slane %v2767, 1
    %v2769 = vadd.f32 %v2767, %v2768
    %v2770 = vmul.f32 %v2769, %v2751
    %v2771 = vadd.f32 %v2770, 1e-05
    %v2772 = vrsqrt.pop %v2771
    %v2773 = vmul.f32 %v2753, %v2772
    %v2774 = vmul.f32 %v2754, %v2772
    %v2775 = vmul.f32 %v2755, %v2772
    %v2776 = vmul.f32 %v2756, %v2772
    %2778 = vset.pattern.permute.xlu0 0
    %2779 = vperm.xlu0 %2778, %v2734
    %v2780 = vpop.permute.xlu0 %2779
    %2783 = vset.pattern.permute.xlu0 0
    %2784 = vperm.xlu0 %2783, %v2735
    %v2785 = vpop.permute.xlu0 %2784
    %2788 = vset.pattern.permute.xlu0 0
    %2789 = vperm.xlu0 %2788, %v2736
    %v2790 = vpop.permute.xlu0 %2789
    %2793 = vset.pattern.permute.xlu0 0
    %2794 = vperm.xlu0 %2793, %v2737
    %v2795 = vpop.permute.xlu0 %2794
    %v2797 = vmul.f32 %v2773, %v2780
    %v2798 = vmul.f32 %v2774, %v2785
    %v2799 = vmul.f32 %v2775, %v2790
    %v2800 = vmul.f32 %v2776, %v2795
    %2802 = vset.pattern.permute.xlu0 0
    %2803 = vperm.xlu0 %2802, %v2738
    %v2804 = vpop.permute.xlu0 %2803
    %2807 = vset.pattern.permute.xlu0 0
    %2808 = vperm.xlu0 %2807, %v2739
    %v2809 = vpop.permute.xlu0 %2808
    %2812 = vset.pattern.permute.xlu0 0
    %2813 = vperm.xlu0 %2812, %v2740
    %v2814 = vpop.permute.xlu0 %2813
    %2817 = vset.pattern.permute.xlu0 0
    %2818 = vperm.xlu0 %2817, %v2741
    %v2819 = vpop.permute.xlu0 %2818
    %v2821 = vadd.f32 %v2797, %v2804
    %v2822 = vadd.f32 %v2798, %v2809
    %v2823 = vadd.f32 %v2799, %v2814
    %v2824 = vadd.f32 %v2800, %v2819
    %v2825 = vld [vmem:[%s12] sm:$0xff]
    %v2826 = vld [vmem:[%s12 + $0x8] sm:$0xff]
    %v2827 = vld [vmem:[%s12 + $0x10] sm:$0xff]
    %v2828 = vld [vmem:[%s12 + $0x18] sm:$0xff]
    %v2829 = vld [vmem:[%s12 + $0x20] sm:$0xff]
    %v2830 = vld [vmem:[%s12 + $0x28] sm:$0xff]
    %v2831 = vld [vmem:[%s12 + $0x30] sm:$0xff]
    %v2832 = vld [vmem:[%s12 + $0x38] sm:$0xff]
    %v2833 = vld [vmem:[%s13] sm:$0xff]
    %v2834 = vld [vmem:[%s13 + $0x8] sm:$0xff]
    %v2835 = vld [vmem:[%s13 + $0x10] sm:$0xff]
    %v2836 = vld [vmem:[%s13 + $0x18] sm:$0xff]
    %v2837 = vld [vmem:[%s13 + $0x20] sm:$0xff]
    %v2838 = vld [vmem:[%s13 + $0x28] sm:$0xff]
    %v2839 = vld [vmem:[%s13 + $0x30] sm:$0xff]
    %v2840 = vld [vmem:[%s13 + $0x38] sm:$0xff]
    %2842 = vset.pattern.permute.xlu0 0
    %2843 = vperm.xlu0 %2842, %v2833
    %v2844 = vpop.permute.xlu0 %2843
    %2847 = vset.pattern.permute.xlu0 0
    %2848 = vperm.xlu0 %2847, %v2834
    %v2849 = vpop.permute.xlu0 %2848
    %2852 = vset.pattern.permute.xlu0 0
    %2853 = vperm.xlu0 %2852, %v2835
    %v2854 = vpop.permute.xlu0 %2853
    %2857 = vset.pattern.permute.xlu0 0
    %2858 = vperm.xlu0 %2857, %v2836
    %v2859 = vpop.permute.xlu0 %2858
    %2862 = vset.pattern.permute.xlu0 0
    %2863 = vperm.xlu0 %2862, %v2837
    %v2864 = vpop.permute.xlu0 %2863
    %2867 = vset.pattern.permute.xlu0 0
    %2868 = vperm.xlu0 %2867, %v2838
    %v2869 = vpop.permute.xlu0 %2868
    %2872 = vset.pattern.permute.xlu0 0
    %2873 = vperm.xlu0 %2872, %v2839
    %v2874 = vpop.permute.xlu0 %2873
    %2877 = vset.pattern.permute.xlu0 0
    %2878 = vperm.xlu0 %2877, %v2840
    %v2879 = vpop.permute.xlu0 %2878
    %v2882 = vsel %vm303, %v2825, 0
    %v2885 = vsel %vm303, %v2826, 0
    %v2888 = vsel %vm303, %v2827, 0
    %v2891 = vsel %vm303, %v2828, 0
    %v2894 = vsel %vm303, %v2829, 0
    %v2897 = vsel %vm303, %v2830, 0
    %v2900 = vsel %vm303, %v2831, 0
    %v2903 = vsel %vm303, %v2832, 0
    %2905 = vmatprep.subr.mxu0 0.0
    %2906 = vmatpush1.msra.mxu0 0.0
    %2907 = vmatprep.subr.mxu0 0.0
    %2908 = vmatpush1.msra.mxu0 0.0
    %2909 = vmatprep.subr.mxu0 0.0
    %2910 = vmatpush1.msra.mxu0 0.0
    %2911 = vmatprep.subr.mxu0 0.0
    %2912 = vmatpush1.msra.mxu0 0.0
    %2913 = vmatprep.subr.mxu0 0.0
    %2914 = vmatpush1.msra.mxu0 0.0
    %2915 = vmatprep.subr.mxu0 0.0
    %2916 = vmatpush1.msra.mxu0 0.0
    %2917 = vmatprep.subr.mxu0 0.0
    %2918 = vmatpush1.msra.mxu0 0.0
    %2919 = vmatprep.subr.mxu0 0.0
    %2920 = vmatpush1.msra.mxu0 0.0
    %2921 = vmatprep.subr.mxu0 0.0
    %2922 = vmatpush1.msra.mxu0 0.0
    %2923 = vmatprep.subr.mxu0 0.0
    %2924 = vmatpush1.msra.mxu0 0.0
    %2925 = vmatprep.subr.mxu0 0.0
    %2926 = vmatpush1.msra.mxu0 0.0
    %2927 = vmatprep.subr.mxu0 0.0
    %2928 = vmatpush1.msra.mxu0 0.0
    %2929 = vmatprep.subr.mxu0 0.0
    %2930 = vmatpush1.msra.mxu0 %v2824
    %2931 = vmatprep.subr.mxu0 0.0
    %2932 = vmatpush1.msra.mxu0 %v2823
    %2933 = vmatprep.subr.mxu0 0.0
    %2934 = vmatpush1.msra.mxu0 %v2822
    %2935 = vmatprep.subr.mxu0 0.0
    %2936 = vmatpush1.msra.mxu0 %v2821
    %2937 = vmatprep.subr.mxu0 0.0
    %2938 = vmatpush2.msra.mxu0 0.0
    %2939 = vmatprep.subr.mxu0 0.0
    %2940 = vmatpush2.msra.mxu0 0.0
    %2941 = vmatprep.subr.mxu0 0.0
    %2942 = vmatpush2.msra.mxu0 0.0
    %2943 = vmatprep.subr.mxu0 0.0
    %2944 = vmatpush2.msra.mxu0 0.0
    %2945 = vmatprep.subr.mxu0 0.0
    %2946 = vmatpush2.msra.mxu0 0.0
    %2947 = vmatprep.subr.mxu0 0.0
    %2948 = vmatpush2.msra.mxu0 0.0
    %2949 = vmatprep.subr.mxu0 0.0
    %2950 = vmatpush2.msra.mxu0 0.0
    %2951 = vmatprep.subr.mxu0 0.0
    %2952 = vmatpush2.msra.mxu0 0.0
    %2953 = vmatprep.subr.mxu0 0.0
    %2954 = vmatpush2.msra.mxu0 0.0
    %2955 = vmatprep.subr.mxu0 0.0
    %2956 = vmatpush2.msra.mxu0 0.0
    %2957 = vmatprep.subr.mxu0 0.0
    %2958 = vmatpush2.msra.mxu0 0.0
    %2959 = vmatprep.subr.mxu0 0.0
    %2960 = vmatpush2.msra.mxu0 0.0
    %2961 = vmatprep.subr.mxu0 0.0
    %2962 = vmatpush2.msra.mxu0 0.0
    %2963 = vmatprep.subr.mxu0 0.0
    %2964 = vmatpush2.msra.mxu0 0.0
    %2965 = vmatprep.subr.mxu0 0.0
    %2966 = vmatpush2.msra.mxu0 0.0
    %2967 = vmatprep.subr.mxu0 0.0
    %2968 = vmatpush2.msra.mxu0 0.0
    %2969 = vmatprep.mubr.f32.mxu0 0.0
    %2970 = vmatmul.mubr.f32.gmra.mxu0 %v2882
    %v2971 = vpop.f32.mrf.mxu0
    %v2972 = vadd.f32 %v2844, %v2971
    %v2973 = vpop.f32.mrf.mxu0
    %2974 = vmatprep.mubr.f32.mxu0 0.0
    %2975 = vmatmul.mubr.f32.gmra.mxu0 %v2885
    %v2976 = vpop.f32.mrf.mxu0
    %v2977 = vadd.f32 %v2849, %v2976
    %v2978 = vpop.f32.mrf.mxu0
    %2979 = vmatprep.mubr.f32.mxu0 0.0
    %2980 = vmatmul.mubr.f32.gmra.mxu0 %v2888
    %v2981 = vpop.f32.mrf.mxu0
    %v2982 = vadd.f32 %v2854, %v2981
    %v2983 = vpop.f32.mrf.mxu0
    %2984 = vmatprep.mubr.f32.mxu0 0.0
    %2985 = vmatmul.mubr.f32.gmra.mxu0 %v2891
    %v2986 = vpop.f32.mrf.mxu0
    %v2987 = vadd.f32 %v2859, %v2986
    %v2988 = vpop.f32.mrf.mxu0
    %2989 = vmatprep.mubr.f32.mxu0 0.0
    %2990 = vmatmul.mubr.f32.gmra.mxu0 %v2894
    %v2991 = vpop.f32.mrf.mxu0
    %v2992 = vadd.f32 %v2864, %v2991
    %v2993 = vpop.f32.mrf.mxu0
    %2994 = vmatprep.mubr.f32.mxu0 0.0
    %2995 = vmatmul.mubr.f32.gmra.mxu0 %v2897
    %v2996 = vpop.f32.mrf.mxu0
    %v2997 = vadd.f32 %v2869, %v2996
    %v2998 = vpop.f32.mrf.mxu0
    %2999 = vmatprep.mubr.f32.mxu0 0.0
    %3000 = vmatmul.mubr.f32.gmra.mxu0 %v2900
    %v3001 = vpop.f32.mrf.mxu0
    %v3002 = vadd.f32 %v2874, %v3001
    %v3003 = vpop.f32.mrf.mxu0
    %3004 = vmatprep.mubr.f32.mxu0 0.0
    %3005 = vmatmul.mubr.f32.gmra.mxu0 %v2903
    %v3006 = vpop.f32.mrf.mxu0
    %v3007 = vadd.f32 %v2879, %v3006
    %v3008 = vpop.f32.mrf.mxu0
    %3009 = vdwg.mxu0
    %v3010 = vmax.f32 %v2972, 0.0
    %v3011 = vmax.f32 %v2977, 0.0
    %v3012 = vmax.f32 %v2982, 0.0
    %v3013 = vmax.f32 %v2987, 0.0
    %v3014 = vmax.f32 %v2992, 0.0
    %v3015 = vmax.f32 %v2997, 0.0
    %v3016 = vmax.f32 %v3002, 0.0
    %v3017 = vmax.f32 %v3007, 0.0
    %v3018 = vld [vmem:[%s14] sm:$0xff]
    %v3019 = vld [vmem:[%s14 + $0x8] sm:$0xff]
    %v3020 = vld [vmem:[%s14 + $0x10] sm:$0xff]
    %v3021 = vld [vmem:[%s14 + $0x18] sm:$0xff]
    %v3022 = vld [vmem:[%s15] sm:$0xff]
    %v3023 = vld [vmem:[%s15 + $0x8] sm:$0xff]
    %v3024 = vld [vmem:[%s15 + $0x10] sm:$0xff]
    %v3025 = vld [vmem:[%s15 + $0x18] sm:$0xff]
    %3027 = vset.pattern.permute.xlu0 0
    %3028 = vperm.xlu0 %3027, %v3022
    %v3029 = vpop.permute.xlu0 %3028
    %3032 = vset.pattern.permute.xlu0 0
    %3033 = vperm.xlu0 %3032, %v3023
    %v3034 = vpop.permute.xlu0 %3033
    %3037 = vset.pattern.permute.xlu0 0
    %3038 = vperm.xlu0 %3037, %v3024
    %v3039 = vpop.permute.xlu0 %3038
    %3042 = vset.pattern.permute.xlu0 0
    %3043 = vperm.xlu0 %3042, %v3025
    %v3044 = vpop.permute.xlu0 %3043
    %vm3046 = vcmask 523264
    %v3048 = vsel %vm3046, %v3018, 0
    %v3051 = vsel %vm3046, %v3019, 0
    %v3054 = vsel %vm3046, %v3020, 0
    %v3057 = vsel %vm3046, %v3021, 0
    %3059 = vmatprep.subr.mxu0 0.0
    %3060 = vmatpush1.msra.mxu0 0.0
    %3061 = vmatprep.subr.mxu0 0.0
    %3062 = vmatpush1.msra.mxu0 0.0
    %3063 = vmatprep.subr.mxu0 0.0
    %3064 = vmatpush1.msra.mxu0 0.0
    %3065 = vmatprep.subr.mxu0 0.0
    %3066 = vmatpush1.msra.mxu0 0.0
    %3067 = vmatprep.subr.mxu0 0.0
    %3068 = vmatpush1.msra.mxu0 0.0
    %3069 = vmatprep.subr.mxu0 0.0
    %3070 = vmatpush1.msra.mxu0 0.0
    %3071 = vmatprep.subr.mxu0 0.0
    %3072 = vmatpush1.msra.mxu0 0.0
    %3073 = vmatprep.subr.mxu0 0.0
    %3074 = vmatpush1.msra.mxu0 0.0
    %3075 = vmatprep.subr.mxu0 0.0
    %3076 = vmatpush1.msra.mxu0 %v3017
    %3077 = vmatprep.subr.mxu0 0.0
    %3078 = vmatpush1.msra.mxu0 %v3016
    %3079 = vmatprep.subr.mxu0 0.0
    %3080 = vmatpush1.msra.mxu0 %v3015
    %3081 = vmatprep.subr.mxu0 0.0
    %3082 = vmatpush1.msra.mxu0 %v3014
    %3083 = vmatprep.subr.mxu0 0.0
    %3084 = vmatpush1.msra.mxu0 %v3013
    %3085 = vmatprep.subr.mxu0 0.0
    %3086 = vmatpush1.msra.mxu0 %v3012
    %3087 = vmatprep.subr.mxu0 0.0
    %3088 = vmatpush1.msra.mxu0 %v3011
    %3089 = vmatprep.subr.mxu0 0.0
    %3090 = vmatpush1.msra.mxu0 %v3010
    %3091 = vmatprep.subr.mxu0 0.0
    %3092 = vmatpush2.msra.mxu0 0.0
    %3093 = vmatprep.subr.mxu0 0.0
    %3094 = vmatpush2.msra.mxu0 0.0
    %3095 = vmatprep.subr.mxu0 0.0
    %3096 = vmatpush2.msra.mxu0 0.0
    %3097 = vmatprep.subr.mxu0 0.0
    %3098 = vmatpush2.msra.mxu0 0.0
    %3099 = vmatprep.subr.mxu0 0.0
    %3100 = vmatpush2.msra.mxu0 0.0
    %3101 = vmatprep.subr.mxu0 0.0
    %3102 = vmatpush2.msra.mxu0 0.0
    %3103 = vmatprep.subr.mxu0 0.0
    %3104 = vmatpush2.msra.mxu0 0.0
    %3105 = vmatprep.subr.mxu0 0.0
    %3106 = vmatpush2.msra.mxu0 0.0
    %3107 = vmatprep.subr.mxu0 0.0
    %3108 = vmatpush2.msra.mxu0 0.0
    %3109 = vmatprep.subr.mxu0 0.0
    %3110 = vmatpush2.msra.mxu0 0.0
    %3111 = vmatprep.subr.mxu0 0.0
    %3112 = vmatpush2.msra.mxu0 0.0
    %3113 = vmatprep.subr.mxu0 0.0
    %3114 = vmatpush2.msra.mxu0 0.0
    %3115 = vmatprep.subr.mxu0 0.0
    %3116 = vmatpush2.msra.mxu0 0.0
    %3117 = vmatprep.subr.mxu0 0.0
    %3118 = vmatpush2.msra.mxu0 0.0
    %3119 = vmatprep.subr.mxu0 0.0
    %3120 = vmatpush2.msra.mxu0 0.0
    %3121 = vmatprep.subr.mxu0 0.0
    %3122 = vmatpush2.msra.mxu0 0.0
    %3123 = vmatprep.mubr.f32.mxu0 0.0
    %3124 = vmatmul.mubr.f32.gmra.mxu0 %v3048
    %v3125 = vpop.f32.mrf.mxu0
    %v3126 = vadd.f32 %v3029, %v3125
    %v3127 = vpop.f32.mrf.mxu0
    %3128 = vmatprep.mubr.f32.mxu0 0.0
    %3129 = vmatmul.mubr.f32.gmra.mxu0 %v3051
    %v3130 = vpop.f32.mrf.mxu0
    %v3131 = vadd.f32 %v3034, %v3130
    %v3132 = vpop.f32.mrf.mxu0
    %3133 = vmatprep.mubr.f32.mxu0 0.0
    %3134 = vmatmul.mubr.f32.gmra.mxu0 %v3054
    %v3135 = vpop.f32.mrf.mxu0
    %v3136 = vadd.f32 %v3039, %v3135
    %v3137 = vpop.f32.mrf.mxu0
    %3138 = vmatprep.mubr.f32.mxu0 0.0
    %3139 = vmatmul.mubr.f32.gmra.mxu0 %v3057
    %v3140 = vpop.f32.mrf.mxu0
    %v3141 = vadd.f32 %v3044, %v3140
    %v3142 = vpop.f32.mrf.mxu0
    %3143 = vdwg.mxu0
    %v3144 = vadd.f32 %v2821, %v3126
    %v3145 = vadd.f32 %v2822, %v3131
    %v3146 = vadd.f32 %v2823, %v3136
    %v3147 = vadd.f32 %v2824, %v3141
    %v3148 = vld [vmem:[%s16] sm:$0xff]
    %v3149 = vld [vmem:[%s16 + $0x8] sm:$0xff]
    %v3150 = vld [vmem:[%s16 + $0x10] sm:$0xff]
    %v3151 = vld [vmem:[%s16 + $0x18] sm:$0xff]
    %v3152 = vld [vmem:[%s17] sm:$0xff]
    %v3153 = vld [vmem:[%s17 + $0x8] sm:$0xff]
    %v3154 = vld [vmem:[%s17 + $0x10] sm:$0xff]
    %v3155 = vld [vmem:[%s17 + $0x18] sm:$0xff]
    %v3156 = vadd.f32 %v3144, %v3145
    %v3157 = vadd.f32 %v3156, %v3146
    %v3158 = vadd.f32 %v3157, %v3147
    %v3159 = vrot.slane %v3158, 4
    %v3160 = vadd.f32 %v3158, %v3159
    %v3161 = vrot.slane %v3160, 2
    %v3162 = vadd.f32 %v3160, %v3161
    %v3163 = vrot.slane %v3162, 1
    %v3164 = vadd.f32 %v3162, %v3163
    %v3165 = vmul.f32 %v3164, %v2751
    %v3166 = vsub.f32 %v3144, %v3165
    %v3167 = vsub.f32 %v3145, %v3165
    %v3168 = vsub.f32 %v3146, %v3165
    %v3169 = vsub.f32 %v3147, %v3165
    %v3170 = vmul.f32 %v3166, %v3166
    %v3171 = vmul.f32 %v3167, %v3167
    %v3172 = vmul.f32 %v3168, %v3168
    %v3173 = vmul.f32 %v3169, %v3169
    %v3174 = vadd.f32 %v3170, %v3171
    %v3175 = vadd.f32 %v3174, %v3172
    %v3176 = vadd.f32 %v3175, %v3173
    %v3177 = vrot.slane %v3176, 4
    %v3178 = vadd.f32 %v3176, %v3177
    %v3179 = vrot.slane %v3178, 2
    %v3180 = vadd.f32 %v3178, %v3179
    %v3181 = vrot.slane %v3180, 1
    %v3182 = vadd.f32 %v3180, %v3181
    %v3183 = vmul.f32 %v3182, %v2751
    %v3184 = vadd.f32 %v3183, 1e-05
    %v3185 = vrsqrt.pop %v3184
    %v3186 = vmul.f32 %v3166, %v3185
    %v3187 = vmul.f32 %v3167, %v3185
    %v3188 = vmul.f32 %v3168, %v3185
    %v3189 = vmul.f32 %v3169, %v3185
    %3191 = vset.pattern.permute.xlu0 0
    %3192 = vperm.xlu0 %3191, %v3148
    %v3193 = vpop.permute.xlu0 %3192
    %3196 = vset.pattern.permute.xlu0 0
    %3197 = vperm.xlu0 %3196, %v3149
    %v3198 = vpop.permute.xlu0 %3197
    %3201 = vset.pattern.permute.xlu0 0
    %3202 = vperm.xlu0 %3201, %v3150
    %v3203 = vpop.permute.xlu0 %3202
    %3206 = vset.pattern.permute.xlu0 0
    %3207 = vperm.xlu0 %3206, %v3151
    %v3208 = vpop.permute.xlu0 %3207
    %v3210 = vmul.f32 %v3186, %v3193
    %v3211 = vmul.f32 %v3187, %v3198
    %v3212 = vmul.f32 %v3188, %v3203
    %v3213 = vmul.f32 %v3189, %v3208
    %3215 = vset.pattern.permute.xlu0 0
    %3216 = vperm.xlu0 %3215, %v3152
    %v3217 = vpop.permute.xlu0 %3216
    %3220 = vset.pattern.permute.xlu0 0
    %3221 = vperm.xlu0 %3220, %v3153
    %v3222 = vpop.permute.xlu0 %3221
    %3225 = vset.pattern.permute.xlu0 0
    %3226 = vperm.xlu0 %3225, %v3154
    %v3227 = vpop.permute.xlu0 %3226
    %3230 = vset.pattern.permute.xlu0 0
    %3231 = vperm.xlu0 %3230, %v3155
    %v3232 = vpop.permute.xlu0 %3231
    %v3234 = vadd.f32 %v3210, %v3217
    %v3235 = vadd.f32 %v3211, %v3222
    %v3236 = vadd.f32 %v3212, %v3227
    %v3237 = vadd.f32 %v3213, %v3232
    %s3238 = scalar_lea.vmem %s6, 32
    %v3239 = vld [vmem:[%s3238] sm:$0xff]
    %v3240 = vld [vmem:[%s3238 + $0x8] sm:$0xff]
    %v3241 = vld [vmem:[%s3238 + $0x10] sm:$0xff]
    %v3242 = vld [vmem:[%s3238 + $0x18] sm:$0xff]
    %s3243 = scalar_lea.vmem %s7, 32
    %v3244 = vld [vmem:[%s3243] sm:$0xff]
    %v3245 = vld [vmem:[%s3243 + $0x8] sm:$0xff]
    %v3246 = vld [vmem:[%s3243 + $0x10] sm:$0xff]
    %v3247 = vld [vmem:[%s3243 + $0x18] sm:$0xff]
    %3249 = vset.pattern.permute.xlu0 0
    %3250 = vperm.xlu0 %3249, %v3244
    %v3251 = vpop.permute.xlu0 %3250
    %3254 = vset.pattern.permute.xlu0 0
    %3255 = vperm.xlu0 %3254, %v3245
    %v3256 = vpop.permute.xlu0 %3255
    %3259 = vset.pattern.permute.xlu0 0
    %3260 = vperm.xlu0 %3259, %v3246
    %v3261 = vpop.permute.xlu0 %3260
    %3264 = vset.pattern.permute.xlu0 0
    %3265 = vperm.xlu0 %3264, %v3247
    %v3266 = vpop.permute.xlu0 %3265
    %v3269 = vsel %vm303, %v3239, 0
    %v3272 = vsel %vm303, %v3240, 0
    %v3275 = vsel %vm303, %v3241, 0
    %v3278 = vsel %vm303, %v3242, 0
    %3280 = vmatprep.subr.mxu0 0.0
    %3281 = vmatpush1.msra.mxu0 0.0
    %3282 = vmatprep.subr.mxu0 0.0
    %3283 = vmatpush1.msra.mxu0 0.0
    %3284 = vmatprep.subr.mxu0 0.0
    %3285 = vmatpush1.msra.mxu0 0.0
    %3286 = vmatprep.subr.mxu0 0.0
    %3287 = vmatpush1.msra.mxu0 0.0
    %3288 = vmatprep.subr.mxu0 0.0
    %3289 = vmatpush1.msra.mxu0 0.0
    %3290 = vmatprep.subr.mxu0 0.0
    %3291 = vmatpush1.msra.mxu0 0.0
    %3292 = vmatprep.subr.mxu0 0.0
    %3293 = vmatpush1.msra.mxu0 0.0
    %3294 = vmatprep.subr.mxu0 0.0
    %3295 = vmatpush1.msra.mxu0 0.0
    %3296 = vmatprep.subr.mxu0 0.0
    %3297 = vmatpush1.msra.mxu0 0.0
    %3298 = vmatprep.subr.mxu0 0.0
    %3299 = vmatpush1.msra.mxu0 0.0
    %3300 = vmatprep.subr.mxu0 0.0
    %3301 = vmatpush1.msra.mxu0 0.0
    %3302 = vmatprep.subr.mxu0 0.0
    %3303 = vmatpush1.msra.mxu0 0.0
    %3304 = vmatprep.subr.mxu0 0.0
    %3305 = vmatpush1.msra.mxu0 %v3237
    %3306 = vmatprep.subr.mxu0 0.0
    %3307 = vmatpush1.msra.mxu0 %v3236
    %3308 = vmatprep.subr.mxu0 0.0
    %3309 = vmatpush1.msra.mxu0 %v3235
    %3310 = vmatprep.subr.mxu0 0.0
    %3311 = vmatpush1.msra.mxu0 %v3234
    %3312 = vmatprep.subr.mxu0 0.0
    %3313 = vmatpush2.msra.mxu0 0.0
    %3314 = vmatprep.subr.mxu0 0.0
    %3315 = vmatpush2.msra.mxu0 0.0
    %3316 = vmatprep.subr.mxu0 0.0
    %3317 = vmatpush2.msra.mxu0 0.0
    %3318 = vmatprep.subr.mxu0 0.0
    %3319 = vmatpush2.msra.mxu0 0.0
    %3320 = vmatprep.subr.mxu0 0.0
    %3321 = vmatpush2.msra.mxu0 0.0
    %3322 = vmatprep.subr.mxu0 0.0
    %3323 = vmatpush2.msra.mxu0 0.0
    %3324 = vmatprep.subr.mxu0 0.0
    %3325 = vmatpush2.msra.mxu0 0.0
    %3326 = vmatprep.subr.mxu0 0.0
    %3327 = vmatpush2.msra.mxu0 0.0
    %3328 = vmatprep.subr.mxu0 0.0
    %3329 = vmatpush2.msra.mxu0 0.0
    %3330 = vmatprep.subr.mxu0 0.0
    %3331 = vmatpush2.msra.mxu0 0.0
    %3332 = vmatprep.subr.mxu0 0.0
    %3333 = vmatpush2.msra.mxu0 0.0
    %3334 = vmatprep.subr.mxu0 0.0
    %3335 = vmatpush2.msra.mxu0 0.0
    %3336 = vmatprep.subr.mxu0 0.0
    %3337 = vmatpush2.msra.mxu0 0.0
    %3338 = vmatprep.subr.mxu0 0.0
    %3339 = vmatpush2.msra.mxu0 0.0
    %3340 = vmatprep.subr.mxu0 0.0
    %3341 = vmatpush2.msra.mxu0 0.0
    %3342 = vmatprep.subr.mxu0 0.0
    %3343 = vmatpush2.msra.mxu0 0.0
    %3344 = vmatprep.mubr.f32.mxu0 0.0
    %3345 = vmatmul.mubr.f32.gmra.mxu0 %v3269
    %v3346 = vpop.f32.mrf.mxu0
    %v3347 = vadd.f32 %v3251, %v3346
    %v3348 = vpop.f32.mrf.mxu0
    %3349 = vmatprep.mubr.f32.mxu0 0.0
    %3350 = vmatmul.mubr.f32.gmra.mxu0 %v3272
    %v3351 = vpop.f32.mrf.mxu0
    %v3352 = vadd.f32 %v3256, %v3351
    %v3353 = vpop.f32.mrf.mxu0
    %3354 = vmatprep.mubr.f32.mxu0 0.0
    %3355 = vmatmul.mubr.f32.gmra.mxu0 %v3275
    %v3356 = vpop.f32.mrf.mxu0
    %v3357 = vadd.f32 %v3261, %v3356
    %v3358 = vpop.f32.mrf.mxu0
    %3359 = vmatprep.mubr.f32.mxu0 0.0
    %3360 = vmatmul.mubr.f32.gmra.mxu0 %v3278
    %v3361 = vpop.f32.mrf.mxu0
    %v3362 = vadd.f32 %v3266, %v3361
    %v3363 = vpop.f32.mrf.mxu0
    %3364 = vdwg.mxu0
    %v3365 = vmul.f32 %v3347, %v459
    %v3366 = vmul.f32 %v3352, %v464
    %v3367 = vmul.f32 %v3357, %v469
    %v3368 = vmul.f32 %v3362, %v474
    %3369 = vmatprep.subr.mxu0 0.0
    %3370 = vmatpush1.msra.mxu0 0.0
    %3371 = vmatprep.subr.mxu0 0.0
    %3372 = vmatpush1.msra.mxu0 0.0
    %3373 = vmatprep.subr.mxu0 0.0
    %3374 = vmatpush1.msra.mxu0 0.0
    %3375 = vmatprep.subr.mxu0 0.0
    %3376 = vmatpush1.msra.mxu0 0.0
    %3377 = vmatprep.subr.mxu0 0.0
    %3378 = vmatpush1.msra.mxu0 0.0
    %3379 = vmatprep.subr.mxu0 0.0
    %3380 = vmatpush1.msra.mxu0 0.0
    %3381 = vmatprep.subr.mxu0 0.0
    %3382 = vmatpush1.msra.mxu0 0.0
    %3383 = vmatprep.subr.mxu0 0.0
    %3384 = vmatpush1.msra.mxu0 0.0
    %3385 = vmatprep.subr.mxu0 0.0
    %3386 = vmatpush1.msra.mxu0 0.0
    %3387 = vmatprep.subr.mxu0 0.0
    %3388 = vmatpush1.msra.mxu0 0.0
    %3389 = vmatprep.subr.mxu0 0.0
    %3390 = vmatpush1.msra.mxu0 0.0
    %3391 = vmatprep.subr.mxu0 0.0
    %3392 = vmatpush1.msra.mxu0 0.0
    %3393 = vmatprep.subr.mxu0 0.0
    %3394 = vmatpush1.msra.mxu0 %v3368
    %3395 = vmatprep.subr.mxu0 0.0
    %3396 = vmatpush1.msra.mxu0 %v3367
    %3397 = vmatprep.subr.mxu0 0.0
    %3398 = vmatpush1.msra.mxu0 %v3366
    %3399 = vmatprep.subr.mxu0 0.0
    %3400 = vmatpush1.msra.mxu0 %v3365
    %3401 = vmatprep.subr.mxu0 0.0
    %3402 = vmatpush2.msra.mxu0 0.0
    %3403 = vmatprep.subr.mxu0 0.0
    %3404 = vmatpush2.msra.mxu0 0.0
    %3405 = vmatprep.subr.mxu0 0.0
    %3406 = vmatpush2.msra.mxu0 0.0
    %3407 = vmatprep.subr.mxu0 0.0
    %3408 = vmatpush2.msra.mxu0 0.0
    %3409 = vmatprep.subr.mxu0 0.0
    %3410 = vmatpush2.msra.mxu0 0.0
    %3411 = vmatprep.subr.mxu0 0.0
    %3412 = vmatpush2.msra.mxu0 0.0
    %3413 = vmatprep.subr.mxu0 0.0
    %3414 = vmatpush2.msra.mxu0 0.0
    %3415 = vmatprep.subr.mxu0 0.0
    %3416 = vmatpush2.msra.mxu0 0.0
    %3417 = vmatprep.subr.mxu0 0.0
    %3418 = vmatpush2.msra.mxu0 0.0
    %3419 = vmatprep.subr.mxu0 0.0
    %3420 = vmatpush2.msra.mxu0 0.0
    %3421 = vmatprep.subr.mxu0 0.0
    %3422 = vmatpush2.msra.mxu0 0.0
    %3423 = vmatprep.subr.mxu0 0.0
    %3424 = vmatpush2.msra.mxu0 0.0
    %3425 = vmatprep.subr.mxu0 0.0
    %3426 = vmatpush2.msra.mxu0 0.0
    %3427 = vmatprep.subr.mxu0 0.0
    %3428 = vmatpush2.msra.mxu0 0.0
    %3429 = vmatprep.subr.mxu0 0.0
    %3430 = vmatpush2.msra.mxu0 0.0
    %3431 = vmatprep.subr.mxu0 0.0
    %3432 = vmatpush2.msra.mxu0 0.0
    %3433 = vmatprep.mubr.f32.mxu0 0.0
    %3434 = vmatmul.mubr.f32.gmra.mxu0 %v1666
    %v3435 = vpop.f32.mrf.mxu0
    %v3436 = vadd.f32 %v165, %v3435
    %v3437 = vpop.f32.mrf.mxu0
    %3438 = vmatprep.mubr.f32.mxu0 0.0
    %3439 = vmatmul.mubr.f32.gmra.mxu0 %v1669
    %v3440 = vpop.f32.mrf.mxu0
    %v3441 = vadd.f32 %v165, %v3440
    %v3442 = vpop.f32.mrf.mxu0
    %3443 = vmatprep.mubr.f32.mxu0 0.0
    %3444 = vmatmul.mubr.f32.gmra.mxu0 %v1672
    %v3445 = vpop.f32.mrf.mxu0
    %v3446 = vadd.f32 %v165, %v3445
    %v3447 = vpop.f32.mrf.mxu0
    %3448 = vmatprep.mubr.f32.mxu0 0.0
    %3449 = vmatmul.mubr.f32.gmra.mxu0 %v1675
    %v3450 = vpop.f32.mrf.mxu0
    %v3451 = vadd.f32 %v165, %v3450
    %v3452 = vpop.f32.mrf.mxu0
    %3453 = vdwg.mxu0
    %v3454 = vmul.f32 %v3347, %v604
    %v3455 = vmul.f32 %v3352, %v609
    %v3456 = vmul.f32 %v3357, %v614
    %v3457 = vmul.f32 %v3362, %v619
    %3458 = vmatprep.subr.mxu0 0.0
    %3459 = vmatpush1.msra.mxu0 0.0
    %3460 = vmatprep.subr.mxu0 0.0
    %3461 = vmatpush1.msra.mxu0 0.0
    %3462 = vmatprep.subr.mxu0 0.0
    %3463 = vmatpush1.msra.mxu0 0.0
    %3464 = vmatprep.subr.mxu0 0.0
    %3465 = vmatpush1.msra.mxu0 0.0
    %3466 = vmatprep.subr.mxu0 0.0
    %3467 = vmatpush1.msra.mxu0 0.0
    %3468 = vmatprep.subr.mxu0 0.0
    %3469 = vmatpush1.msra.mxu0 0.0
    %3470 = vmatprep.subr.mxu0 0.0
    %3471 = vmatpush1.msra.mxu0 0.0
    %3472 = vmatprep.subr.mxu0 0.0
    %3473 = vmatpush1.msra.mxu0 0.0
    %3474 = vmatprep.subr.mxu0 0.0
    %3475 = vmatpush1.msra.mxu0 0.0
    %3476 = vmatprep.subr.mxu0 0.0
    %3477 = vmatpush1.msra.mxu0 0.0
    %3478 = vmatprep.subr.mxu0 0.0
    %3479 = vmatpush1.msra.mxu0 0.0
    %3480 = vmatprep.subr.mxu0 0.0
    %3481 = vmatpush1.msra.mxu0 0.0
    %3482 = vmatprep.subr.mxu0 0.0
    %3483 = vmatpush1.msra.mxu0 %v3457
    %3484 = vmatprep.subr.mxu0 0.0
    %3485 = vmatpush1.msra.mxu0 %v3456
    %3486 = vmatprep.subr.mxu0 0.0
    %3487 = vmatpush1.msra.mxu0 %v3455
    %3488 = vmatprep.subr.mxu0 0.0
    %3489 = vmatpush1.msra.mxu0 %v3454
    %3490 = vmatprep.subr.mxu0 0.0
    %3491 = vmatpush2.msra.mxu0 0.0
    %3492 = vmatprep.subr.mxu0 0.0
    %3493 = vmatpush2.msra.mxu0 0.0
    %3494 = vmatprep.subr.mxu0 0.0
    %3495 = vmatpush2.msra.mxu0 0.0
    %3496 = vmatprep.subr.mxu0 0.0
    %3497 = vmatpush2.msra.mxu0 0.0
    %3498 = vmatprep.subr.mxu0 0.0
    %3499 = vmatpush2.msra.mxu0 0.0
    %3500 = vmatprep.subr.mxu0 0.0
    %3501 = vmatpush2.msra.mxu0 0.0
    %3502 = vmatprep.subr.mxu0 0.0
    %3503 = vmatpush2.msra.mxu0 0.0
    %3504 = vmatprep.subr.mxu0 0.0
    %3505 = vmatpush2.msra.mxu0 0.0
    %3506 = vmatprep.subr.mxu0 0.0
    %3507 = vmatpush2.msra.mxu0 0.0
    %3508 = vmatprep.subr.mxu0 0.0
    %3509 = vmatpush2.msra.mxu0 0.0
    %3510 = vmatprep.subr.mxu0 0.0
    %3511 = vmatpush2.msra.mxu0 0.0
    %3512 = vmatprep.subr.mxu0 0.0
    %3513 = vmatpush2.msra.mxu0 0.0
    %3514 = vmatprep.subr.mxu0 0.0
    %3515 = vmatpush2.msra.mxu0 0.0
    %3516 = vmatprep.subr.mxu0 0.0
    %3517 = vmatpush2.msra.mxu0 0.0
    %3518 = vmatprep.subr.mxu0 0.0
    %3519 = vmatpush2.msra.mxu0 0.0
    %3520 = vmatprep.subr.mxu0 0.0
    %3521 = vmatpush2.msra.mxu0 0.0
    %3522 = vmatprep.mubr.f32.mxu0 0.0
    %3523 = vmatmul.mubr.f32.gmra.mxu0 %v1666
    %v3524 = vpop.f32.mrf.mxu0
    %v3525 = vadd.f32 %v173, %v3524
    %v3526 = vpop.f32.mrf.mxu0
    %3527 = vmatprep.mubr.f32.mxu0 0.0
    %3528 = vmatmul.mubr.f32.gmra.mxu0 %v1669
    %v3529 = vpop.f32.mrf.mxu0
    %v3530 = vadd.f32 %v173, %v3529
    %v3531 = vpop.f32.mrf.mxu0
    %3532 = vmatprep.mubr.f32.mxu0 0.0
    %3533 = vmatmul.mubr.f32.gmra.mxu0 %v1672
    %v3534 = vpop.f32.mrf.mxu0
    %v3535 = vadd.f32 %v173, %v3534
    %v3536 = vpop.f32.mrf.mxu0
    %3537 = vmatprep.mubr.f32.mxu0 0.0
    %3538 = vmatmul.mubr.f32.gmra.mxu0 %v1675
    %v3539 = vpop.f32.mrf.mxu0
    %v3540 = vadd.f32 %v173, %v3539
    %v3541 = vpop.f32.mrf.mxu0
    %3542 = vdwg.mxu0
    %v3543 = vmul.f32 %v3347, %v749
    %v3544 = vmul.f32 %v3352, %v754
    %v3545 = vmul.f32 %v3357, %v759
    %v3546 = vmul.f32 %v3362, %v764
    %3547 = vmatprep.subr.mxu0 0.0
    %3548 = vmatpush1.msra.mxu0 0.0
    %3549 = vmatprep.subr.mxu0 0.0
    %3550 = vmatpush1.msra.mxu0 0.0
    %3551 = vmatprep.subr.mxu0 0.0
    %3552 = vmatpush1.msra.mxu0 0.0
    %3553 = vmatprep.subr.mxu0 0.0
    %3554 = vmatpush1.msra.mxu0 0.0
    %3555 = vmatprep.subr.mxu0 0.0
    %3556 = vmatpush1.msra.mxu0 0.0
    %3557 = vmatprep.subr.mxu0 0.0
    %3558 = vmatpush1.msra.mxu0 0.0
    %3559 = vmatprep.subr.mxu0 0.0
    %3560 = vmatpush1.msra.mxu0 0.0
    %3561 = vmatprep.subr.mxu0 0.0
    %3562 = vmatpush1.msra.mxu0 0.0
    %3563 = vmatprep.subr.mxu0 0.0
    %3564 = vmatpush1.msra.mxu0 0.0
    %3565 = vmatprep.subr.mxu0 0.0
    %3566 = vmatpush1.msra.mxu0 0.0
    %3567 = vmatprep.subr.mxu0 0.0
    %3568 = vmatpush1.msra.mxu0 0.0
    %3569 = vmatprep.subr.mxu0 0.0
    %3570 = vmatpush1.msra.mxu0 0.0
    %3571 = vmatprep.subr.mxu0 0.0
    %3572 = vmatpush1.msra.mxu0 %v3546
    %3573 = vmatprep.subr.mxu0 0.0
    %3574 = vmatpush1.msra.mxu0 %v3545
    %3575 = vmatprep.subr.mxu0 0.0
    %3576 = vmatpush1.msra.mxu0 %v3544
    %3577 = vmatprep.subr.mxu0 0.0
    %3578 = vmatpush1.msra.mxu0 %v3543
    %3579 = vmatprep.subr.mxu0 0.0
    %3580 = vmatpush2.msra.mxu0 0.0
    %3581 = vmatprep.subr.mxu0 0.0
    %3582 = vmatpush2.msra.mxu0 0.0
    %3583 = vmatprep.subr.mxu0 0.0
    %3584 = vmatpush2.msra.mxu0 0.0
    %3585 = vmatprep.subr.mxu0 0.0
    %3586 = vmatpush2.msra.mxu0 0.0
    %3587 = vmatprep.subr.mxu0 0.0
    %3588 = vmatpush2.msra.mxu0 0.0
    %3589 = vmatprep.subr.mxu0 0.0
    %3590 = vmatpush2.msra.mxu0 0.0
    %3591 = vmatprep.subr.mxu0 0.0
    %3592 = vmatpush2.msra.mxu0 0.0
    %3593 = vmatprep.subr.mxu0 0.0
    %3594 = vmatpush2.msra.mxu0 0.0
    %3595 = vmatprep.subr.mxu0 0.0
    %3596 = vmatpush2.msra.mxu0 0.0
    %3597 = vmatprep.subr.mxu0 0.0
    %3598 = vmatpush2.msra.mxu0 0.0
    %3599 = vmatprep.subr.mxu0 0.0
    %3600 = vmatpush2.msra.mxu0 0.0
    %3601 = vmatprep.subr.mxu0 0.0
    %3602 = vmatpush2.msra.mxu0 0.0
    %3603 = vmatprep.subr.mxu0 0.0
    %3604 = vmatpush2.msra.mxu0 0.0
    %3605 = vmatprep.subr.mxu0 0.0
    %3606 = vmatpush2.msra.mxu0 0.0
    %3607 = vmatprep.subr.mxu0 0.0
    %3608 = vmatpush2.msra.mxu0 0.0
    %3609 = vmatprep.subr.mxu0 0.0
    %3610 = vmatpush2.msra.mxu0 0.0
    %3611 = vmatprep.mubr.f32.mxu0 0.0
    %3612 = vmatmul.mubr.f32.gmra.mxu0 %v1666
    %v3613 = vpop.f32.mrf.mxu0
    %v3614 = vadd.f32 %v181, %v3613
    %v3615 = vpop.f32.mrf.mxu0
    %3616 = vmatprep.mubr.f32.mxu0 0.0
    %3617 = vmatmul.mubr.f32.gmra.mxu0 %v1669
    %v3618 = vpop.f32.mrf.mxu0
    %v3619 = vadd.f32 %v181, %v3618
    %v3620 = vpop.f32.mrf.mxu0
    %3621 = vmatprep.mubr.f32.mxu0 0.0
    %3622 = vmatmul.mubr.f32.gmra.mxu0 %v1672
    %v3623 = vpop.f32.mrf.mxu0
    %v3624 = vadd.f32 %v181, %v3623
    %v3625 = vpop.f32.mrf.mxu0
    %3626 = vmatprep.mubr.f32.mxu0 0.0
    %3627 = vmatmul.mubr.f32.gmra.mxu0 %v1675
    %v3628 = vpop.f32.mrf.mxu0
    %v3629 = vadd.f32 %v181, %v3628
    %v3630 = vpop.f32.mrf.mxu0
    %3631 = vdwg.mxu0
    %v3632 = vmul.f32 %v3347, %v894
    %v3633 = vmul.f32 %v3352, %v899
    %v3634 = vmul.f32 %v3357, %v904
    %v3635 = vmul.f32 %v3362, %v909
    %3636 = vmatprep.subr.mxu0 0.0
    %3637 = vmatpush1.msra.mxu0 0.0
    %3638 = vmatprep.subr.mxu0 0.0
    %3639 = vmatpush1.msra.mxu0 0.0
    %3640 = vmatprep.subr.mxu0 0.0
    %3641 = vmatpush1.msra.mxu0 0.0
    %3642 = vmatprep.subr.mxu0 0.0
    %3643 = vmatpush1.msra.mxu0 0.0
    %3644 = vmatprep.subr.mxu0 0.0
    %3645 = vmatpush1.msra.mxu0 0.0
    %3646 = vmatprep.subr.mxu0 0.0
    %3647 = vmatpush1.msra.mxu0 0.0
    %3648 = vmatprep.subr.mxu0 0.0
    %3649 = vmatpush1.msra.mxu0 0.0
    %3650 = vmatprep.subr.mxu0 0.0
    %3651 = vmatpush1.msra.mxu0 0.0
    %3652 = vmatprep.subr.mxu0 0.0
    %3653 = vmatpush1.msra.mxu0 0.0
    %3654 = vmatprep.subr.mxu0 0.0
    %3655 = vmatpush1.msra.mxu0 0.0
    %3656 = vmatprep.subr.mxu0 0.0
    %3657 = vmatpush1.msra.mxu0 0.0
    %3658 = vmatprep.subr.mxu0 0.0
    %3659 = vmatpush1.msra.mxu0 0.0
    %3660 = vmatprep.subr.mxu0 0.0
    %3661 = vmatpush1.msra.mxu0 %v3635
    %3662 = vmatprep.subr.mxu0 0.0
    %3663 = vmatpush1.msra.mxu0 %v3634
    %3664 = vmatprep.subr.mxu0 0.0
    %3665 = vmatpush1.msra.mxu0 %v3633
    %3666 = vmatprep.subr.mxu0 0.0
    %3667 = vmatpush1.msra.mxu0 %v3632
    %3668 = vmatprep.subr.mxu0 0.0
    %3669 = vmatpush2.msra.mxu0 0.0
    %3670 = vmatprep.subr.mxu0 0.0
    %3671 = vmatpush2.msra.mxu0 0.0
    %3672 = vmatprep.subr.mxu0 0.0
    %3673 = vmatpush2.msra.mxu0 0.0
    %3674 = vmatprep.subr.mxu0 0.0
    %3675 = vmatpush2.msra.mxu0 0.0
    %3676 = vmatprep.subr.mxu0 0.0
    %3677 = vmatpush2.msra.mxu0 0.0
    %3678 = vmatprep.subr.mxu0 0.0
    %3679 = vmatpush2.msra.mxu0 0.0
    %3680 = vmatprep.subr.mxu0 0.0
    %3681 = vmatpush2.msra.mxu0 0.0
    %3682 = vmatprep.subr.mxu0 0.0
    %3683 = vmatpush2.msra.mxu0 0.0
    %3684 = vmatprep.subr.mxu0 0.0
    %3685 = vmatpush2.msra.mxu0 0.0
    %3686 = vmatprep.subr.mxu0 0.0
    %3687 = vmatpush2.msra.mxu0 0.0
    %3688 = vmatprep.subr.mxu0 0.0
    %3689 = vmatpush2.msra.mxu0 0.0
    %3690 = vmatprep.subr.mxu0 0.0
    %3691 = vmatpush2.msra.mxu0 0.0
    %3692 = vmatprep.subr.mxu0 0.0
    %3693 = vmatpush2.msra.mxu0 0.0
    %3694 = vmatprep.subr.mxu0 0.0
    %3695 = vmatpush2.msra.mxu0 0.0
    %3696 = vmatprep.subr.mxu0 0.0
    %3697 = vmatpush2.msra.mxu0 0.0
    %3698 = vmatprep.subr.mxu0 0.0
    %3699 = vmatpush2.msra.mxu0 0.0
    %3700 = vmatprep.mubr.f32.mxu0 0.0
    %3701 = vmatmul.mubr.f32.gmra.mxu0 %v1666
    %v3702 = vpop.f32.mrf.mxu0
    %v3703 = vadd.f32 %v189, %v3702
    %v3704 = vpop.f32.mrf.mxu0
    %3705 = vmatprep.mubr.f32.mxu0 0.0
    %3706 = vmatmul.mubr.f32.gmra.mxu0 %v1669
    %v3707 = vpop.f32.mrf.mxu0
    %v3708 = vadd.f32 %v189, %v3707
    %v3709 = vpop.f32.mrf.mxu0
    %3710 = vmatprep.mubr.f32.mxu0 0.0
    %3711 = vmatmul.mubr.f32.gmra.mxu0 %v1672
    %v3712 = vpop.f32.mrf.mxu0
    %v3713 = vadd.f32 %v189, %v3712
    %v3714 = vpop.f32.mrf.mxu0
    %3715 = vmatprep.mubr.f32.mxu0 0.0
    %3716 = vmatmul.mubr.f32.gmra.mxu0 %v1675
    %v3717 = vpop.f32.mrf.mxu0
    %v3718 = vadd.f32 %v189, %v3717
    %v3719 = vpop.f32.mrf.mxu0
    %3720 = vdwg.mxu0
    %v3721 = vmul.f32 %v3347, %v1039
    %v3722 = vmul.f32 %v3352, %v1044
    %v3723 = vmul.f32 %v3357, %v1049
    %v3724 = vmul.f32 %v3362, %v1054
    %3725 = vmatprep.subr.mxu0 0.0
    %3726 = vmatpush1.msra.mxu0 0.0
    %3727 = vmatprep.subr.mxu0 0.0
    %3728 = vmatpush1.msra.mxu0 0.0
    %3729 = vmatprep.subr.mxu0 0.0
    %3730 = vmatpush1.msra.mxu0 0.0
    %3731 = vmatprep.subr.mxu0 0.0
    %3732 = vmatpush1.msra.mxu0 0.0
    %3733 = vmatprep.subr.mxu0 0.0
    %3734 = vmatpush1.msra.mxu0 0.0
    %3735 = vmatprep.subr.mxu0 0.0
    %3736 = vmatpush1.msra.mxu0 0.0
    %3737 = vmatprep.subr.mxu0 0.0
    %3738 = vmatpush1.msra.mxu0 0.0
    %3739 = vmatprep.subr.mxu0 0.0
    %3740 = vmatpush1.msra.mxu0 0.0
    %3741 = vmatprep.subr.mxu0 0.0
    %3742 = vmatpush1.msra.mxu0 0.0
    %3743 = vmatprep.subr.mxu0 0.0
    %3744 = vmatpush1.msra.mxu0 0.0
    %3745 = vmatprep.subr.mxu0 0.0
    %3746 = vmatpush1.msra.mxu0 0.0
    %3747 = vmatprep.subr.mxu0 0.0
    %3748 = vmatpush1.msra.mxu0 0.0
    %3749 = vmatprep.subr.mxu0 0.0
    %3750 = vmatpush1.msra.mxu0 %v3724
    %3751 = vmatprep.subr.mxu0 0.0
    %3752 = vmatpush1.msra.mxu0 %v3723
    %3753 = vmatprep.subr.mxu0 0.0
    %3754 = vmatpush1.msra.mxu0 %v3722
    %3755 = vmatprep.subr.mxu0 0.0
    %3756 = vmatpush1.msra.mxu0 %v3721
    %3757 = vmatprep.subr.mxu0 0.0
    %3758 = vmatpush2.msra.mxu0 0.0
    %3759 = vmatprep.subr.mxu0 0.0
    %3760 = vmatpush2.msra.mxu0 0.0
    %3761 = vmatprep.subr.mxu0 0.0
    %3762 = vmatpush2.msra.mxu0 0.0
    %3763 = vmatprep.subr.mxu0 0.0
    %3764 = vmatpush2.msra.mxu0 0.0
    %3765 = vmatprep.subr.mxu0 0.0
    %3766 = vmatpush2.msra.mxu0 0.0
    %3767 = vmatprep.subr.mxu0 0.0
    %3768 = vmatpush2.msra.mxu0 0.0
    %3769 = vmatprep.subr.mxu0 0.0
    %3770 = vmatpush2.msra.mxu0 0.0
    %3771 = vmatprep.subr.mxu0 0.0
    %3772 = vmatpush2.msra.mxu0 0.0
    %3773 = vmatprep.subr.mxu0 0.0
    %3774 = vmatpush2.msra.mxu0 0.0
    %3775 = vmatprep.subr.mxu0 0.0
    %3776 = vmatpush2.msra.mxu0 0.0
    %3777 = vmatprep.subr.mxu0 0.0
    %3778 = vmatpush2.msra.mxu0 0.0
    %3779 = vmatprep.subr.mxu0 0.0
    %3780 = vmatpush2.msra.mxu0 0.0
    %3781 = vmatprep.subr.mxu0 0.0
    %3782 = vmatpush2.msra.mxu0 0.0
    %3783 = vmatprep.subr.mxu0 0.0
    %3784 = vmatpush2.msra.mxu0 0.0
    %3785 = vmatprep.subr.mxu0 0.0
    %3786 = vmatpush2.msra.mxu0 0.0
    %3787 = vmatprep.subr.mxu0 0.0
    %3788 = vmatpush2.msra.mxu0 0.0
    %3789 = vmatprep.mubr.f32.mxu0 0.0
    %3790 = vmatmul.mubr.f32.gmra.mxu0 %v1666
    %v3791 = vpop.f32.mrf.mxu0
    %v3792 = vadd.f32 %v197, %v3791
    %v3793 = vpop.f32.mrf.mxu0
    %3794 = vmatprep.mubr.f32.mxu0 0.0
    %3795 = vmatmul.mubr.f32.gmra.mxu0 %v1669
    %v3796 = vpop.f32.mrf.mxu0
    %v3797 = vadd.f32 %v197, %v3796
    %v3798 = vpop.f32.mrf.mxu0
    %3799 = vmatprep.mubr.f32.mxu0 0.0
    %3800 = vmatmul.mubr.f32.gmra.mxu0 %v1672
    %v3801 = vpop.f32.mrf.mxu0
    %v3802 = vadd.f32 %v197, %v3801
    %v3803 = vpop.f32.mrf.mxu0
    %3804 = vmatprep.mubr.f32.mxu0 0.0
    %3805 = vmatmul.mubr.f32.gmra.mxu0 %v1675
    %v3806 = vpop.f32.mrf.mxu0
    %v3807 = vadd.f32 %v197, %v3806
    %v3808 = vpop.f32.mrf.mxu0
    %3809 = vdwg.mxu0
    %v3810 = vmul.f32 %v3347, %v1184
    %v3811 = vmul.f32 %v3352, %v1189
    %v3812 = vmul.f32 %v3357, %v1194
    %v3813 = vmul.f32 %v3362, %v1199
    %3814 = vmatprep.subr.mxu0 0.0
    %3815 = vmatpush1.msra.mxu0 0.0
    %3816 = vmatprep.subr.mxu0 0.0
    %3817 = vmatpush1.msra.mxu0 0.0
    %3818 = vmatprep.subr.mxu0 0.0
    %3819 = vmatpush1.msra.mxu0 0.0
    %3820 = vmatprep.subr.mxu0 0.0
    %3821 = vmatpush1.msra.mxu0 0.0
    %3822 = vmatprep.subr.mxu0 0.0
    %3823 = vmatpush1.msra.mxu0 0.0
    %3824 = vmatprep.subr.mxu0 0.0
    %3825 = vmatpush1.msra.mxu0 0.0
    %3826 = vmatprep.subr.mxu0 0.0
    %3827 = vmatpush1.msra.mxu0 0.0
    %3828 = vmatprep.subr.mxu0 0.0
    %3829 = vmatpush1.msra.mxu0 0.0
    %3830 = vmatprep.subr.mxu0 0.0
    %3831 = vmatpush1.msra.mxu0 0.0
    %3832 = vmatprep.subr.mxu0 0.0
    %3833 = vmatpush1.msra.mxu0 0.0
    %3834 = vmatprep.subr.mxu0 0.0
    %3835 = vmatpush1.msra.mxu0 0.0
    %3836 = vmatprep.subr.mxu0 0.0
    %3837 = vmatpush1.msra.mxu0 0.0
    %3838 = vmatprep.subr.mxu0 0.0
    %3839 = vmatpush1.msra.mxu0 %v3813
    %3840 = vmatprep.subr.mxu0 0.0
    %3841 = vmatpush1.msra.mxu0 %v3812
    %3842 = vmatprep.subr.mxu0 0.0
    %3843 = vmatpush1.msra.mxu0 %v3811
    %3844 = vmatprep.subr.mxu0 0.0
    %3845 = vmatpush1.msra.mxu0 %v3810
    %3846 = vmatprep.subr.mxu0 0.0
    %3847 = vmatpush2.msra.mxu0 0.0
    %3848 = vmatprep.subr.mxu0 0.0
    %3849 = vmatpush2.msra.mxu0 0.0
    %3850 = vmatprep.subr.mxu0 0.0
    %3851 = vmatpush2.msra.mxu0 0.0
    %3852 = vmatprep.subr.mxu0 0.0
    %3853 = vmatpush2.msra.mxu0 0.0
    %3854 = vmatprep.subr.mxu0 0.0
    %3855 = vmatpush2.msra.mxu0 0.0
    %3856 = vmatprep.subr.mxu0 0.0
    %3857 = vmatpush2.msra.mxu0 0.0
    %3858 = vmatprep.subr.mxu0 0.0
    %3859 = vmatpush2.msra.mxu0 0.0
    %3860 = vmatprep.subr.mxu0 0.0
    %3861 = vmatpush2.msra.mxu0 0.0
    %3862 = vmatprep.subr.mxu0 0.0
    %3863 = vmatpush2.msra.mxu0 0.0
    %3864 = vmatprep.subr.mxu0 0.0
    %3865 = vmatpush2.msra.mxu0 0.0
    %3866 = vmatprep.subr.mxu0 0.0
    %3867 = vmatpush2.msra.mxu0 0.0
    %3868 = vmatprep.subr.mxu0 0.0
    %3869 = vmatpush2.msra.mxu0 0.0
    %3870 = vmatprep.subr.mxu0 0.0
    %3871 = vmatpush2.msra.mxu0 0.0
    %3872 = vmatprep.subr.mxu0 0.0
    %3873 = vmatpush2.msra.mxu0 0.0
    %3874 = vmatprep.subr.mxu0 0.0
    %3875 = vmatpush2.msra.mxu0 0.0
    %3876 = vmatprep.subr.mxu0 0.0
    %3877 = vmatpush2.msra.mxu0 0.0
    %3878 = vmatprep.mubr.f32.mxu0 0.0
    %3879 = vmatmul.mubr.f32.gmra.mxu0 %v1666
    %v3880 = vpop.f32.mrf.mxu0
    %v3881 = vadd.f32 %v205, %v3880
    %v3882 = vpop.f32.mrf.mxu0
    %3883 = vmatprep.mubr.f32.mxu0 0.0
    %3884 = vmatmul.mubr.f32.gmra.mxu0 %v1669
    %v3885 = vpop.f32.mrf.mxu0
    %v3886 = vadd.f32 %v205, %v3885
    %v3887 = vpop.f32.mrf.mxu0
    %3888 = vmatprep.mubr.f32.mxu0 0.0
    %3889 = vmatmul.mubr.f32.gmra.mxu0 %v1672
    %v3890 = vpop.f32.mrf.mxu0
    %v3891 = vadd.f32 %v205, %v3890
    %v3892 = vpop.f32.mrf.mxu0
    %3893 = vmatprep.mubr.f32.mxu0 0.0
    %3894 = vmatmul.mubr.f32.gmra.mxu0 %v1675
    %v3895 = vpop.f32.mrf.mxu0
    %v3896 = vadd.f32 %v205, %v3895
    %v3897 = vpop.f32.mrf.mxu0
    %3898 = vdwg.mxu0
    %v3899 = vmul.f32 %v3347, %v1329
    %v3900 = vmul.f32 %v3352, %v1334
    %v3901 = vmul.f32 %v3357, %v1339
    %v3902 = vmul.f32 %v3362, %v1344
    %3903 = vmatprep.subr.mxu0 0.0
    %3904 = vmatpush1.msra.mxu0 0.0
    %3905 = vmatprep.subr.mxu0 0.0
    %3906 = vmatpush1.msra.mxu0 0.0
    %3907 = vmatprep.subr.mxu0 0.0
    %3908 = vmatpush1.msra.mxu0 0.0
    %3909 = vmatprep.subr.mxu0 0.0
    %3910 = vmatpush1.msra.mxu0 0.0
    %3911 = vmatprep.subr.mxu0 0.0
    %3912 = vmatpush1.msra.mxu0 0.0
    %3913 = vmatprep.subr.mxu0 0.0
    %3914 = vmatpush1.msra.mxu0 0.0
    %3915 = vmatprep.subr.mxu0 0.0
    %3916 = vmatpush1.msra.mxu0 0.0
    %3917 = vmatprep.subr.mxu0 0.0
    %3918 = vmatpush1.msra.mxu0 0.0
    %3919 = vmatprep.subr.mxu0 0.0
    %3920 = vmatpush1.msra.mxu0 0.0
    %3921 = vmatprep.subr.mxu0 0.0
    %3922 = vmatpush1.msra.mxu0 0.0
    %3923 = vmatprep.subr.mxu0 0.0
    %3924 = vmatpush1.msra.mxu0 0.0
    %3925 = vmatprep.subr.mxu0 0.0
    %3926 = vmatpush1.msra.mxu0 0.0
    %3927 = vmatprep.subr.mxu0 0.0
    %3928 = vmatpush1.msra.mxu0 %v3902
    %3929 = vmatprep.subr.mxu0 0.0
    %3930 = vmatpush1.msra.mxu0 %v3901
    %3931 = vmatprep.subr.mxu0 0.0
    %3932 = vmatpush1.msra.mxu0 %v3900
    %3933 = vmatprep.subr.mxu0 0.0
    %3934 = vmatpush1.msra.mxu0 %v3899
    %3935 = vmatprep.subr.mxu0 0.0
    %3936 = vmatpush2.msra.mxu0 0.0
    %3937 = vmatprep.subr.mxu0 0.0
    %3938 = vmatpush2.msra.mxu0 0.0
    %3939 = vmatprep.subr.mxu0 0.0
    %3940 = vmatpush2.msra.mxu0 0.0
    %3941 = vmatprep.subr.mxu0 0.0
    %3942 = vmatpush2.msra.mxu0 0.0
    %3943 = vmatprep.subr.mxu0 0.0
    %3944 = vmatpush2.msra.mxu0 0.0
    %3945 = vmatprep.subr.mxu0 0.0
    %3946 = vmatpush2.msra.mxu0 0.0
    %3947 = vmatprep.subr.mxu0 0.0
    %3948 = vmatpush2.msra.mxu0 0.0
    %3949 = vmatprep.subr.mxu0 0.0
    %3950 = vmatpush2.msra.mxu0 0.0
    %3951 = vmatprep.subr.mxu0 0.0
    %3952 = vmatpush2.msra.mxu0 0.0
    %3953 = vmatprep.subr.mxu0 0.0
    %3954 = vmatpush2.msra.mxu0 0.0
    %3955 = vmatprep.subr.mxu0 0.0
    %3956 = vmatpush2.msra.mxu0 0.0
    %3957 = vmatprep.subr.mxu0 0.0
    %3958 = vmatpush2.msra.mxu0 0.0
    %3959 = vmatprep.subr.mxu0 0.0
    %3960 = vmatpush2.msra.mxu0 0.0
    %3961 = vmatprep.subr.mxu0 0.0
    %3962 = vmatpush2.msra.mxu0 0.0
    %3963 = vmatprep.subr.mxu0 0.0
    %3964 = vmatpush2.msra.mxu0 0.0
    %3965 = vmatprep.subr.mxu0 0.0
    %3966 = vmatpush2.msra.mxu0 0.0
    %3967 = vmatprep.mubr.f32.mxu0 0.0
    %3968 = vmatmul.mubr.f32.gmra.mxu0 %v1666
    %v3969 = vpop.f32.mrf.mxu0
    %v3970 = vadd.f32 %v213, %v3969
    %v3971 = vpop.f32.mrf.mxu0
    %3972 = vmatprep.mubr.f32.mxu0 0.0
    %3973 = vmatmul.mubr.f32.gmra.mxu0 %v1669
    %v3974 = vpop.f32.mrf.mxu0
    %v3975 = vadd.f32 %v213, %v3974
    %v3976 = vpop.f32.mrf.mxu0
    %3977 = vmatprep.mubr.f32.mxu0 0.0
    %3978 = vmatmul.mubr.f32.gmra.mxu0 %v1672
    %v3979 = vpop.f32.mrf.mxu0
    %v3980 = vadd.f32 %v213, %v3979
    %v3981 = vpop.f32.mrf.mxu0
    %3982 = vmatprep.mubr.f32.mxu0 0.0
    %3983 = vmatmul.mubr.f32.gmra.mxu0 %v1675
    %v3984 = vpop.f32.mrf.mxu0
    %v3985 = vadd.f32 %v213, %v3984
    %v3986 = vpop.f32.mrf.mxu0
    %3987 = vdwg.mxu0
    %v3988 = vmul.f32 %v3347, %v1474
    %v3989 = vmul.f32 %v3352, %v1479
    %v3990 = vmul.f32 %v3357, %v1484
    %v3991 = vmul.f32 %v3362, %v1489
    %3992 = vmatprep.subr.mxu0 0.0
    %3993 = vmatpush1.msra.mxu0 0.0
    %3994 = vmatprep.subr.mxu0 0.0
    %3995 = vmatpush1.msra.mxu0 0.0
    %3996 = vmatprep.subr.mxu0 0.0
    %3997 = vmatpush1.msra.mxu0 0.0
    %3998 = vmatprep.subr.mxu0 0.0
    %3999 = vmatpush1.msra.mxu0 0.0
    %4000 = vmatprep.subr.mxu0 0.0
    %4001 = vmatpush1.msra.mxu0 0.0
    %4002 = vmatprep.subr.mxu0 0.0
    %4003 = vmatpush1.msra.mxu0 0.0
    %4004 = vmatprep.subr.mxu0 0.0
    %4005 = vmatpush1.msra.mxu0 0.0
    %4006 = vmatprep.subr.mxu0 0.0
    %4007 = vmatpush1.msra.mxu0 0.0
    %4008 = vmatprep.subr.mxu0 0.0
    %4009 = vmatpush1.msra.mxu0 0.0
    %4010 = vmatprep.subr.mxu0 0.0
    %4011 = vmatpush1.msra.mxu0 0.0
    %4012 = vmatprep.subr.mxu0 0.0
    %4013 = vmatpush1.msra.mxu0 0.0
    %4014 = vmatprep.subr.mxu0 0.0
    %4015 = vmatpush1.msra.mxu0 0.0
    %4016 = vmatprep.subr.mxu0 0.0
    %4017 = vmatpush1.msra.mxu0 %v3991
    %4018 = vmatprep.subr.mxu0 0.0
    %4019 = vmatpush1.msra.mxu0 %v3990
    %4020 = vmatprep.subr.mxu0 0.0
    %4021 = vmatpush1.msra.mxu0 %v3989
    %4022 = vmatprep.subr.mxu0 0.0
    %4023 = vmatpush1.msra.mxu0 %v3988
    %4024 = vmatprep.subr.mxu0 0.0
    %4025 = vmatpush2.msra.mxu0 0.0
    %4026 = vmatprep.subr.mxu0 0.0
    %4027 = vmatpush2.msra.mxu0 0.0
    %4028 = vmatprep.subr.mxu0 0.0
    %4029 = vmatpush2.msra.mxu0 0.0
    %4030 = vmatprep.subr.mxu0 0.0
    %4031 = vmatpush2.msra.mxu0 0.0
    %4032 = vmatprep.subr.mxu0 0.0
    %4033 = vmatpush2.msra.mxu0 0.0
    %4034 = vmatprep.subr.mxu0 0.0
    %4035 = vmatpush2.msra.mxu0 0.0
    %4036 = vmatprep.subr.mxu0 0.0
    %4037 = vmatpush2.msra.mxu0 0.0
    %4038 = vmatprep.subr.mxu0 0.0
    %4039 = vmatpush2.msra.mxu0 0.0
    %4040 = vmatprep.subr.mxu0 0.0
    %4041 = vmatpush2.msra.mxu0 0.0
    %4042 = vmatprep.subr.mxu0 0.0
    %4043 = vmatpush2.msra.mxu0 0.0
    %4044 = vmatprep.subr.mxu0 0.0
    %4045 = vmatpush2.msra.mxu0 0.0
    %4046 = vmatprep.subr.mxu0 0.0
    %4047 = vmatpush2.msra.mxu0 0.0
    %4048 = vmatprep.subr.mxu0 0.0
    %4049 = vmatpush2.msra.mxu0 0.0
    %4050 = vmatprep.subr.mxu0 0.0
    %4051 = vmatpush2.msra.mxu0 0.0
    %4052 = vmatprep.subr.mxu0 0.0
    %4053 = vmatpush2.msra.mxu0 0.0
    %4054 = vmatprep.subr.mxu0 0.0
    %4055 = vmatpush2.msra.mxu0 0.0
    %4056 = vmatprep.mubr.f32.mxu0 0.0
    %4057 = vmatmul.mubr.f32.gmra.mxu0 %v1666
    %v4058 = vpop.f32.mrf.mxu0
    %v4059 = vadd.f32 %v221, %v4058
    %v4060 = vpop.f32.mrf.mxu0
    %4061 = vmatprep.mubr.f32.mxu0 0.0
    %4062 = vmatmul.mubr.f32.gmra.mxu0 %v1669
    %v4063 = vpop.f32.mrf.mxu0
    %v4064 = vadd.f32 %v221, %v4063
    %v4065 = vpop.f32.mrf.mxu0
    %4066 = vmatprep.mubr.f32.mxu0 0.0
    %4067 = vmatmul.mubr.f32.gmra.mxu0 %v1672
    %v4068 = vpop.f32.mrf.mxu0
    %v4069 = vadd.f32 %v221, %v4068
    %v4070 = vpop.f32.mrf.mxu0
    %4071 = vmatprep.mubr.f32.mxu0 0.0
    %4072 = vmatmul.mubr.f32.gmra.mxu0 %v1675
    %v4073 = vpop.f32.mrf.mxu0
    %v4074 = vadd.f32 %v221, %v4073
    %v4075 = vpop.f32.mrf.mxu0
    %4076 = vdwg.mxu0
    %v4077 = vmax.f32 %v3436, %v3525
    %v4078 = vmax.f32 %v3441, %v3530
    %v4079 = vmax.f32 %v3446, %v3535
    %v4080 = vmax.f32 %v3451, %v3540
    %v4081 = vmax.f32 %v4077, %v3614
    %v4082 = vmax.f32 %v4078, %v3619
    %v4083 = vmax.f32 %v4079, %v3624
    %v4084 = vmax.f32 %v4080, %v3629
    %v4085 = vmax.f32 %v4081, %v3703
    %v4086 = vmax.f32 %v4082, %v3708
    %v4087 = vmax.f32 %v4083, %v3713
    %v4088 = vmax.f32 %v4084, %v3718
    %v4089 = vmax.f32 %v4085, %v3792
    %v4090 = vmax.f32 %v4086, %v3797
    %v4091 = vmax.f32 %v4087, %v3802
    %v4092 = vmax.f32 %v4088, %v3807
    %v4093 = vmax.f32 %v4089, %v3881
    %v4094 = vmax.f32 %v4090, %v3886
    %v4095 = vmax.f32 %v4091, %v3891
    %v4096 = vmax.f32 %v4092, %v3896
    %v4097 = vmax.f32 %v4093, %v3970
    %v4098 = vmax.f32 %v4094, %v3975
    %v4099 = vmax.f32 %v4095, %v3980
    %v4100 = vmax.f32 %v4096, %v3985
    %v4101 = vmax.f32 %v4097, %v4059
    %v4102 = vmax.f32 %v4098, %v4064
    %v4103 = vmax.f32 %v4099, %v4069
    %v4104 = vmax.f32 %v4100, %v4074
    %v4105 = vsub.f32 %v3436, %v4101
    %v4106 = vsub.f32 %v3441, %v4102
    %v4107 = vsub.f32 %v3446, %v4103
    %v4108 = vsub.f32 %v3451, %v4104
    %v4109 = vmul.f32 %v4105, 1.442695
    %v4110 = vpow.pop %v4109
    %v4111 = vmul.f32 %v4106, 1.442695
    %v4112 = vpow.pop %v4111
    %v4113 = vmul.f32 %v4107, 1.442695
    %v4114 = vpow.pop %v4113
    %v4115 = vmul.f32 %v4108, 1.442695
    %v4116 = vpow.pop %v4115
    %v4117 = vsub.f32 %v3525, %v4101
    %v4118 = vsub.f32 %v3530, %v4102
    %v4119 = vsub.f32 %v3535, %v4103
    %v4120 = vsub.f32 %v3540, %v4104
    %v4121 = vmul.f32 %v4117, 1.442695
    %v4122 = vpow.pop %v4121
    %v4123 = vmul.f32 %v4118, 1.442695
    %v4124 = vpow.pop %v4123
    %v4125 = vmul.f32 %v4119, 1.442695
    %v4126 = vpow.pop %v4125
    %v4127 = vmul.f32 %v4120, 1.442695
    %v4128 = vpow.pop %v4127
    %v4129 = vsub.f32 %v3614, %v4101
    %v4130 = vsub.f32 %v3619, %v4102
    %v4131 = vsub.f32 %v3624, %v4103
    %v4132 = vsub.f32 %v3629, %v4104
    %v4133 = vmul.f32 %v4129, 1.442695
    %v4134 = vpow.pop %v4133
    %v4135 = vmul.f32 %v4130, 1.442695
    %v4136 = vpow.pop %v4135
    %v4137 = vmul.f32 %v4131, 1.442695
    %v4138 = vpow.pop %v4137
    %v4139 = vmul.f32 %v4132, 1.442695
    %v4140 = vpow.pop %v4139
    %v4141 = vsub.f32 %v3703, %v4101
    %v4142 = vsub.f32 %v3708, %v4102
    %v4143 = vsub.f32 %v3713, %v4103
    %v4144 = vsub.f32 %v3718, %v4104
    %v4145 = vmul.f32 %v4141, 1.442695
    %v4146 = vpow.pop %v4145
    %v4147 = vmul.f32 %v4142, 1.442695
    %v4148 = vpow.pop %v4147
    %v4149 = vmul.f32 %v4143, 1.442695
    %v4150 = vpow.pop %v4149
    %v4151 = vmul.f32 %v4144, 1.442695
    %v4152 = vpow.pop %v4151
    %v4153 = vsub.f32 %v3792, %v4101
    %v4154 = vsub.f32 %v3797, %v4102
    %v4155 = vsub.f32 %v3802, %v4103
    %v4156 = vsub.f32 %v3807, %v4104
    %v4157 = vmul.f32 %v4153, 1.442695
    %v4158 = vpow.pop %v4157
    %v4159 = vmul.f32 %v4154, 1.442695
    %v4160 = vpow.pop %v4159
    %v4161 = vmul.f32 %v4155, 1.442695
    %v4162 = vpow.pop %v4161
    %v4163 = vmul.f32 %v4156, 1.442695
    %v4164 = vpow.pop %v4163
    %v4165 = vsub.f32 %v3881, %v4101
    %v4166 = vsub.f32 %v3886, %v4102
    %v4167 = vsub.f32 %v3891, %v4103
    %v4168 = vsub.f32 %v3896, %v4104
    %v4169 = vmul.f32 %v4165, 1.442695
    %v4170 = vpow.pop %v4169
    %v4171 = vmul.f32 %v4166, 1.442695
    %v4172 = vpow.pop %v4171
    %v4173 = vmul.f32 %v4167, 1.442695
    %v4174 = vpow.pop %v4173
    %v4175 = vmul.f32 %v4168, 1.442695
    %v4176 = vpow.pop %v4175
    %v4177 = vsub.f32 %v3970, %v4101
    %v4178 = vsub.f32 %v3975, %v4102
    %v4179 = vsub.f32 %v3980, %v4103
    %v4180 = vsub.f32 %v3985, %v4104
    %v4181 = vmul.f32 %v4177, 1.442695
    %v4182 = vpow.pop %v4181
    %v4183 = vmul.f32 %v4178, 1.442695
    %v4184 = vpow.pop %v4183
    %v4185 = vmul.f32 %v4179, 1.442695
    %v4186 = vpow.pop %v4185
    %v4187 = vmul.f32 %v4180, 1.442695
    %v4188 = vpow.pop %v4187
    %v4189 = vsub.f32 %v4059, %v4101
    %v4190 = vsub.f32 %v4064, %v4102
    %v4191 = vsub.f32 %v4069, %v4103
    %v4192 = vsub.f32 %v4074, %v4104
    %v4193 = vmul.f32 %v4189, 1.442695
    %v4194 = vpow.pop %v4193
    %v4195 = vmul.f32 %v4190, 1.442695
    %v4196 = vpow.pop %v4195
    %v4197 = vmul.f32 %v4191, 1.442695
    %v4198 = vpow.pop %v4197
    %v4199 = vmul.f32 %v4192, 1.442695
    %v4200 = vpow.pop %v4199
    %v4201 = vadd.f32 %v4110, %v4122
    %v4202 = vadd.f32 %v4112, %v4124
    %v4203 = vadd.f32 %v4114, %v4126
    %v4204 = vadd.f32 %v4116, %v4128
    %v4205 = vadd.f32 %v4201, %v4134
    %v4206 = vadd.f32 %v4202, %v4136
    %v4207 = vadd.f32 %v4203, %v4138
    %v4208 = vadd.f32 %v4204, %v4140
    %v4209 = vadd.f32 %v4205, %v4146
    %v4210 = vadd.f32 %v4206, %v4148
    %v4211 = vadd.f32 %v4207, %v4150
    %v4212 = vadd.f32 %v4208, %v4152
    %v4213 = vadd.f32 %v4209, %v4158
    %v4214 = vadd.f32 %v4210, %v4160
    %v4215 = vadd.f32 %v4211, %v4162
    %v4216 = vadd.f32 %v4212, %v4164
    %v4217 = vadd.f32 %v4213, %v4170
    %v4218 = vadd.f32 %v4214, %v4172
    %v4219 = vadd.f32 %v4215, %v4174
    %v4220 = vadd.f32 %v4216, %v4176
    %v4221 = vadd.f32 %v4217, %v4182
    %v4222 = vadd.f32 %v4218, %v4184
    %v4223 = vadd.f32 %v4219, %v4186
    %v4224 = vadd.f32 %v4220, %v4188
    %v4225 = vadd.f32 %v4221, %v4194
    %v4226 = vadd.f32 %v4222, %v4196
    %v4227 = vadd.f32 %v4223, %v4198
    %v4228 = vadd.f32 %v4224, %v4200
    %v4229 = vmul.f32 %v4110, %v479
    %v4230 = vmul.f32 %v4112, %v484
    %v4231 = vmul.f32 %v4114, %v489
    %v4232 = vmul.f32 %v4116, %v494
    %v4233 = vmul.f32 %v4122, %v624
    %v4234 = vmul.f32 %v4124, %v629
    %v4235 = vmul.f32 %v4126, %v634
    %v4236 = vmul.f32 %v4128, %v639
    %v4237 = vadd.f32 %v4229, %v4233
    %v4238 = vadd.f32 %v4230, %v4234
    %v4239 = vadd.f32 %v4231, %v4235
    %v4240 = vadd.f32 %v4232, %v4236
    %v4241 = vmul.f32 %v4134, %v769
    %v4242 = vmul.f32 %v4136, %v774
    %v4243 = vmul.f32 %v4138, %v779
    %v4244 = vmul.f32 %v4140, %v784
    %v4245 = vadd.f32 %v4237, %v4241
    %v4246 = vadd.f32 %v4238, %v4242
    %v4247 = vadd.f32 %v4239, %v4243
    %v4248 = vadd.f32 %v4240, %v4244
    %v4249 = vmul.f32 %v4146, %v914
    %v4250 = vmul.f32 %v4148, %v919
    %v4251 = vmul.f32 %v4150, %v924
    %v4252 = vmul.f32 %v4152, %v929
    %v4253 = vadd.f32 %v4245, %v4249
    %v4254 = vadd.f32 %v4246, %v4250
    %v4255 = vadd.f32 %v4247, %v4251
    %v4256 = vadd.f32 %v4248, %v4252
    %v4257 = vmul.f32 %v4158, %v1059
    %v4258 = vmul.f32 %v4160, %v1064
    %v4259 = vmul.f32 %v4162, %v1069
    %v4260 = vmul.f32 %v4164, %v1074
    %v4261 = vadd.f32 %v4253, %v4257
    %v4262 = vadd.f32 %v4254, %v4258
    %v4263 = vadd.f32 %v4255, %v4259
    %v4264 = vadd.f32 %v4256, %v4260
    %v4265 = vmul.f32 %v4170, %v1204
    %v4266 = vmul.f32 %v4172, %v1209
    %v4267 = vmul.f32 %v4174, %v1214
    %v4268 = vmul.f32 %v4176, %v1219
    %v4269 = vadd.f32 %v4261, %v4265
    %v4270 = vadd.f32 %v4262, %v4266
    %v4271 = vadd.f32 %v4263, %v4267
    %v4272 = vadd.f32 %v4264, %v4268
    %v4273 = vmul.f32 %v4182, %v1349
    %v4274 = vmul.f32 %v4184, %v1354
    %v4275 = vmul.f32 %v4186, %v1359
    %v4276 = vmul.f32 %v4188, %v1364
    %v4277 = vadd.f32 %v4269, %v4273
    %v4278 = vadd.f32 %v4270, %v4274
    %v4279 = vadd.f32 %v4271, %v4275
    %v4280 = vadd.f32 %v4272, %v4276
    %v4281 = vmul.f32 %v4194, %v1494
    %v4282 = vmul.f32 %v4196, %v1499
    %v4283 = vmul.f32 %v4198, %v1504
    %v4284 = vmul.f32 %v4200, %v1509
    %v4285 = vadd.f32 %v4277, %v4281
    %v4286 = vadd.f32 %v4278, %v4282
    %v4287 = vadd.f32 %v4279, %v4283
    %v4288 = vadd.f32 %v4280, %v4284
    %v4289 = vrcp.pop %v4225
    %v4290 = vrcp.pop %v4226
    %v4291 = vrcp.pop %v4227
    %v4292 = vrcp.pop %v4228
    %v4293 = vmul.f32 %v4285, %v4289
    %v4294 = vmul.f32 %v4286, %v4290
    %v4295 = vmul.f32 %v4287, %v4291
    %v4296 = vmul.f32 %v4288, %v4292
    %s4297 = scalar_lea.vmem %s8, 32
    %v4298 = vld [vmem:[%s4297] sm:$0xff]
    %v4299 = vld [vmem:[%s4297 + $0x8] sm:$0xff]
    %v4300 = vld [vmem:[%s4297 + $0x10] sm:$0xff]
    %v4301 = vld [vmem:[%s4297 + $0x18] sm:$0xff]
    %s4302 = scalar_lea.vmem %s9, 32
    %v4303 = vld [vmem:[%s4302] sm:$0xff]
    %v4304 = vld [vmem:[%s4302 + $0x8] sm:$0xff]
    %v4305 = vld [vmem:[%s4302 + $0x10] sm:$0xff]
    %v4306 = vld [vmem:[%s4302 + $0x18] sm:$0xff]
    %4308 = vset.pattern.permute.xlu0 0
    %4309 = vperm.xlu0 %4308, %v4303
    %v4310 = vpop.permute.xlu0 %4309
    %4313 = vset.pattern.permute.xlu0 0
    %4314 = vperm.xlu0 %4313, %v4304
    %v4315 = vpop.permute.xlu0 %4314
    %4318 = vset.pattern.permute.xlu0 0
    %4319 = vperm.xlu0 %4318, %v4305
    %v4320 = vpop.permute.xlu0 %4319
    %4323 = vset.pattern.permute.xlu0 0
    %4324 = vperm.xlu0 %4323, %v4306
    %v4325 = vpop.permute.xlu0 %4324
    %v4328 = vsel %vm303, %v4298, 0
    %v4331 = vsel %vm303, %v4299, 0
    %v4334 = vsel %vm303, %v4300, 0
    %v4337 = vsel %vm303, %v4301, 0
    %4339 = vmatprep.subr.mxu0 0.0
    %4340 = vmatpush1.msra.mxu0 0.0
    %4341 = vmatprep.subr.mxu0 0.0
    %4342 = vmatpush1.msra.mxu0 0.0
    %4343 = vmatprep.subr.mxu0 0.0
    %4344 = vmatpush1.msra.mxu0 0.0
    %4345 = vmatprep.subr.mxu0 0.0
    %4346 = vmatpush1.msra.mxu0 0.0
    %4347 = vmatprep.subr.mxu0 0.0
    %4348 = vmatpush1.msra.mxu0 0.0
    %4349 = vmatprep.subr.mxu0 0.0
    %4350 = vmatpush1.msra.mxu0 0.0
    %4351 = vmatprep.subr.mxu0 0.0
    %4352 = vmatpush1.msra.mxu0 0.0
    %4353 = vmatprep.subr.mxu0 0.0
    %4354 = vmatpush1.msra.mxu0 0.0
    %4355 = vmatprep.subr.mxu0 0.0
    %4356 = vmatpush1.msra.mxu0 0.0
    %4357 = vmatprep.subr.mxu0 0.0
    %4358 = vmatpush1.msra.mxu0 0.0
    %4359 = vmatprep.subr.mxu0 0.0
    %4360 = vmatpush1.msra.mxu0 0.0
    %4361 = vmatprep.subr.mxu0 0.0
    %4362 = vmatpush1.msra.mxu0 0.0
    %4363 = vmatprep.subr.mxu0 0.0
    %4364 = vmatpush1.msra.mxu0 %v4296
    %4365 = vmatprep.subr.mxu0 0.0
    %4366 = vmatpush1.msra.mxu0 %v4295
    %4367 = vmatprep.subr.mxu0 0.0
    %4368 = vmatpush1.msra.mxu0 %v4294
    %4369 = vmatprep.subr.mxu0 0.0
    %4370 = vmatpush1.msra.mxu0 %v4293
    %4371 = vmatprep.subr.mxu0 0.0
    %4372 = vmatpush2.msra.mxu0 0.0
    %4373 = vmatprep.subr.mxu0 0.0
    %4374 = vmatpush2.msra.mxu0 0.0
    %4375 = vmatprep.subr.mxu0 0.0
    %4376 = vmatpush2.msra.mxu0 0.0
    %4377 = vmatprep.subr.mxu0 0.0
    %4378 = vmatpush2.msra.mxu0 0.0
    %4379 = vmatprep.subr.mxu0 0.0
    %4380 = vmatpush2.msra.mxu0 0.0
    %4381 = vmatprep.subr.mxu0 0.0
    %4382 = vmatpush2.msra.mxu0 0.0
    %4383 = vmatprep.subr.mxu0 0.0
    %4384 = vmatpush2.msra.mxu0 0.0
    %4385 = vmatprep.subr.mxu0 0.0
    %4386 = vmatpush2.msra.mxu0 0.0
    %4387 = vmatprep.subr.mxu0 0.0
    %4388 = vmatpush2.msra.mxu0 0.0
    %4389 = vmatprep.subr.mxu0 0.0
    %4390 = vmatpush2.msra.mxu0 0.0
    %4391 = vmatprep.subr.mxu0 0.0
    %4392 = vmatpush2.msra.mxu0 0.0
    %4393 = vmatprep.subr.mxu0 0.0
    %4394 = vmatpush2.msra.mxu0 0.0
    %4395 = vmatprep.subr.mxu0 0.0
    %4396 = vmatpush2.msra.mxu0 0.0
    %4397 = vmatprep.subr.mxu0 0.0
    %4398 = vmatpush2.msra.mxu0 0.0
    %4399 = vmatprep.subr.mxu0 0.0
    %4400 = vmatpush2.msra.mxu0 0.0
    %4401 = vmatprep.subr.mxu0 0.0
    %4402 = vmatpush2.msra.mxu0 0.0
    %4403 = vmatprep.mubr.f32.mxu0 0.0
    %4404 = vmatmul.mubr.f32.gmra.mxu0 %v4328
    %v4405 = vpop.f32.mrf.mxu0
    %v4406 = vadd.f32 %v4310, %v4405
    %v4407 = vpop.f32.mrf.mxu0
    %4408 = vmatprep.mubr.f32.mxu0 0.0
    %4409 = vmatmul.mubr.f32.gmra.mxu0 %v4331
    %v4410 = vpop.f32.mrf.mxu0
    %v4411 = vadd.f32 %v4315, %v4410
    %v4412 = vpop.f32.mrf.mxu0
    %4413 = vmatprep.mubr.f32.mxu0 0.0
    %4414 = vmatmul.mubr.f32.gmra.mxu0 %v4334
    %v4415 = vpop.f32.mrf.mxu0
    %v4416 = vadd.f32 %v4320, %v4415
    %v4417 = vpop.f32.mrf.mxu0
    %4418 = vmatprep.mubr.f32.mxu0 0.0
    %4419 = vmatmul.mubr.f32.gmra.mxu0 %v4337
    %v4420 = vpop.f32.mrf.mxu0
    %v4421 = vadd.f32 %v4325, %v4420
    %v4422 = vpop.f32.mrf.mxu0
    %4423 = vdwg.mxu0
    %v4424 = vadd.f32 %v3234, %v4406
    %v4425 = vadd.f32 %v3235, %v4411
    %v4426 = vadd.f32 %v3236, %v4416
    %v4427 = vadd.f32 %v3237, %v4421
    %s4428 = scalar_lea.vmem %s10, 32
    %v4429 = vld [vmem:[%s4428] sm:$0xff]
    %v4430 = vld [vmem:[%s4428 + $0x8] sm:$0xff]
    %v4431 = vld [vmem:[%s4428 + $0x10] sm:$0xff]
    %v4432 = vld [vmem:[%s4428 + $0x18] sm:$0xff]
    %s4433 = scalar_lea.vmem %s11, 32
    %v4434 = vld [vmem:[%s4433] sm:$0xff]
    %v4435 = vld [vmem:[%s4433 + $0x8] sm:$0xff]
    %v4436 = vld [vmem:[%s4433 + $0x10] sm:$0xff]
    %v4437 = vld [vmem:[%s4433 + $0x18] sm:$0xff]
    %v4438 = vadd.f32 %v4424, %v4425
    %v4439 = vadd.f32 %v4438, %v4426
    %v4440 = vadd.f32 %v4439, %v4427
    %v4441 = vrot.slane %v4440, 4
    %v4442 = vadd.f32 %v4440, %v4441
    %v4443 = vrot.slane %v4442, 2
    %v4444 = vadd.f32 %v4442, %v4443
    %v4445 = vrot.slane %v4444, 1
    %v4446 = vadd.f32 %v4444, %v4445
    %v4447 = vmul.f32 %v4446, %v2751
    %v4448 = vsub.f32 %v4424, %v4447
    %v4449 = vsub.f32 %v4425, %v4447
    %v4450 = vsub.f32 %v4426, %v4447
    %v4451 = vsub.f32 %v4427, %v4447
    %v4452 = vmul.f32 %v4448, %v4448
    %v4453 = vmul.f32 %v4449, %v4449
    %v4454 = vmul.f32 %v4450, %v4450
    %v4455 = vmul.f32 %v4451, %v4451
    %v4456 = vadd.f32 %v4452, %v4453
    %v4457 = vadd.f32 %v4456, %v4454
    %v4458 = vadd.f32 %v4457, %v4455
    %v4459 = vrot.slane %v4458, 4
    %v4460 = vadd.f32 %v4458, %v4459
    %v4461 = vrot.slane %v4460, 2
    %v4462 = vadd.f32 %v4460, %v4461
    %v4463 = vrot.slane %v4462, 1
    %v4464 = vadd.f32 %v4462, %v4463
    %v4465 = vmul.f32 %v4464, %v2751
    %v4466 = vadd.f32 %v4465, 1e-05
    %v4467 = vrsqrt.pop %v4466
    %v4468 = vmul.f32 %v4448, %v4467
    %v4469 = vmul.f32 %v4449, %v4467
    %v4470 = vmul.f32 %v4450, %v4467
    %v4471 = vmul.f32 %v4451, %v4467
    %4473 = vset.pattern.permute.xlu0 0
    %4474 = vperm.xlu0 %4473, %v4429
    %v4475 = vpop.permute.xlu0 %4474
    %4478 = vset.pattern.permute.xlu0 0
    %4479 = vperm.xlu0 %4478, %v4430
    %v4480 = vpop.permute.xlu0 %4479
    %4483 = vset.pattern.permute.xlu0 0
    %4484 = vperm.xlu0 %4483, %v4431
    %v4485 = vpop.permute.xlu0 %4484
    %4488 = vset.pattern.permute.xlu0 0
    %4489 = vperm.xlu0 %4488, %v4432
    %v4490 = vpop.permute.xlu0 %4489
    %v4492 = vmul.f32 %v4468, %v4475
    %v4493 = vmul.f32 %v4469, %v4480
    %v4494 = vmul.f32 %v4470, %v4485
    %v4495 = vmul.f32 %v4471, %v4490
    %4497 = vset.pattern.permute.xlu0 0
    %4498 = vperm.xlu0 %4497, %v4434
    %v4499 = vpop.permute.xlu0 %4498
    %4502 = vset.pattern.permute.xlu0 0
    %4503 = vperm.xlu0 %4502, %v4435
    %v4504 = vpop.permute.xlu0 %4503
    %4507 = vset.pattern.permute.xlu0 0
    %4508 = vperm.xlu0 %4507, %v4436
    %v4509 = vpop.permute.xlu0 %4508
    %4512 = vset.pattern.permute.xlu0 0
    %4513 = vperm.xlu0 %4512, %v4437
    %v4514 = vpop.permute.xlu0 %4513
    %v4516 = vadd.f32 %v4492, %v4499
    %v4517 = vadd.f32 %v4493, %v4504
    %v4518 = vadd.f32 %v4494, %v4509
    %v4519 = vadd.f32 %v4495, %v4514
    %s4520 = scalar_lea.vmem %s12, 64
    %v4521 = vld [vmem:[%s4520] sm:$0xff]
    %v4522 = vld [vmem:[%s4520 + $0x8] sm:$0xff]
    %v4523 = vld [vmem:[%s4520 + $0x10] sm:$0xff]
    %v4524 = vld [vmem:[%s4520 + $0x18] sm:$0xff]
    %v4525 = vld [vmem:[%s4520 + $0x20] sm:$0xff]
    %v4526 = vld [vmem:[%s4520 + $0x28] sm:$0xff]
    %v4527 = vld [vmem:[%s4520 + $0x30] sm:$0xff]
    %v4528 = vld [vmem:[%s4520 + $0x38] sm:$0xff]
    %s4529 = scalar_lea.vmem %s13, 64
    %v4530 = vld [vmem:[%s4529] sm:$0xff]
    %v4531 = vld [vmem:[%s4529 + $0x8] sm:$0xff]
    %v4532 = vld [vmem:[%s4529 + $0x10] sm:$0xff]
    %v4533 = vld [vmem:[%s4529 + $0x18] sm:$0xff]
    %v4534 = vld [vmem:[%s4529 + $0x20] sm:$0xff]
    %v4535 = vld [vmem:[%s4529 + $0x28] sm:$0xff]
    %v4536 = vld [vmem:[%s4529 + $0x30] sm:$0xff]
    %v4537 = vld [vmem:[%s4529 + $0x38] sm:$0xff]
    %4539 = vset.pattern.permute.xlu0 0
    %4540 = vperm.xlu0 %4539, %v4530
    %v4541 = vpop.permute.xlu0 %4540
    %4544 = vset.pattern.permute.xlu0 0
    %4545 = vperm.xlu0 %4544, %v4531
    %v4546 = vpop.permute.xlu0 %4545
    %4549 = vset.pattern.permute.xlu0 0
    %4550 = vperm.xlu0 %4549, %v4532
    %v4551 = vpop.permute.xlu0 %4550
    %4554 = vset.pattern.permute.xlu0 0
    %4555 = vperm.xlu0 %4554, %v4533
    %v4556 = vpop.permute.xlu0 %4555
    %4559 = vset.pattern.permute.xlu0 0
    %4560 = vperm.xlu0 %4559, %v4534
    %v4561 = vpop.permute.xlu0 %4560
    %4564 = vset.pattern.permute.xlu0 0
    %4565 = vperm.xlu0 %4564, %v4535
    %v4566 = vpop.permute.xlu0 %4565
    %4569 = vset.pattern.permute.xlu0 0
    %4570 = vperm.xlu0 %4569, %v4536
    %v4571 = vpop.permute.xlu0 %4570
    %4574 = vset.pattern.permute.xlu0 0
    %4575 = vperm.xlu0 %4574, %v4537
    %v4576 = vpop.permute.xlu0 %4575
    %v4579 = vsel %vm303, %v4521, 0
    %v4582 = vsel %vm303, %v4522, 0
    %v4585 = vsel %vm303, %v4523, 0
    %v4588 = vsel %vm303, %v4524, 0
    %v4591 = vsel %vm303, %v4525, 0
    %v4594 = vsel %vm303, %v4526, 0
    %v4597 = vsel %vm303, %v4527, 0
    %v4600 = vsel %vm303, %v4528, 0
    %4602 = vmatprep.subr.mxu0 0.0
    %4603 = vmatpush1.msra.mxu0 0.0
    %4604 = vmatprep.subr.mxu0 0.0
    %4605 = vmatpush1.msra.mxu0 0.0
    %4606 = vmatprep.subr.mxu0 0.0
    %4607 = vmatpush1.msra.mxu0 0.0
    %4608 = vmatprep.subr.mxu0 0.0
    %4609 = vmatpush1.msra.mxu0 0.0
    %4610 = vmatprep.subr.mxu0 0.0
    %4611 = vmatpush1.msra.mxu0 0.0
    %4612 = vmatprep.subr.mxu0 0.0
    %4613 = vmatpush1.msra.mxu0 0.0
    %4614 = vmatprep.subr.mxu0 0.0
    %4615 = vmatpush1.msra.mxu0 0.0
    %4616 = vmatprep.subr.mxu0 0.0
    %4617 = vmatpush1.msra.mxu0 0.0
    %4618 = vmatprep.subr.mxu0 0.0
    %4619 = vmatpush1.msra.mxu0 0.0
    %4620 = vmatprep.subr.mxu0 0.0
    %4621 = vmatpush1.msra.mxu0 0.0
    %4622 = vmatprep.subr.mxu0 0.0
    %4623 = vmatpush1.msra.mxu0 0.0
    %4624 = vmatprep.subr.mxu0 0.0
    %4625 = vmatpush1.msra.mxu0 0.0
    %4626 = vmatprep.subr.mxu0 0.0
    %4627 = vmatpush1.msra.mxu0 %v4519
    %4628 = vmatprep.subr.mxu0 0.0
    %4629 = vmatpush1.msra.mxu0 %v4518
    %4630 = vmatprep.subr.mxu0 0.0
    %4631 = vmatpush1.msra.mxu0 %v4517
    %4632 = vmatprep.subr.mxu0 0.0
    %4633 = vmatpush1.msra.mxu0 %v4516
    %4634 = vmatprep.subr.mxu0 0.0
    %4635 = vmatpush2.msra.mxu0 0.0
    %4636 = vmatprep.subr.mxu0 0.0
    %4637 = vmatpush2.msra.mxu0 0.0
    %4638 = vmatprep.subr.mxu0 0.0
    %4639 = vmatpush2.msra.mxu0 0.0
    %4640 = vmatprep.subr.mxu0 0.0
    %4641 = vmatpush2.msra.mxu0 0.0
    %4642 = vmatprep.subr.mxu0 0.0
    %4643 = vmatpush2.msra.mxu0 0.0
    %4644 = vmatprep.subr.mxu0 0.0
    %4645 = vmatpush2.msra.mxu0 0.0
    %4646 = vmatprep.subr.mxu0 0.0
    %4647 = vmatpush2.msra.mxu0 0.0
    %4648 = vmatprep.subr.mxu0 0.0
    %4649 = vmatpush2.msra.mxu0 0.0
    %4650 = vmatprep.subr.mxu0 0.0
    %4651 = vmatpush2.msra.mxu0 0.0
    %4652 = vmatprep.subr.mxu0 0.0
    %4653 = vmatpush2.msra.mxu0 0.0
    %4654 = vmatprep.subr.mxu0 0.0
    %4655 = vmatpush2.msra.mxu0 0.0
    %4656 = vmatprep.subr.mxu0 0.0
    %4657 = vmatpush2.msra.mxu0 0.0
    %4658 = vmatprep.subr.mxu0 0.0
    %4659 = vmatpush2.msra.mxu0 0.0
    %4660 = vmatprep.subr.mxu0 0.0
    %4661 = vmatpush2.msra.mxu0 0.0
    %4662 = vmatprep.subr.mxu0 0.0
    %4663 = vmatpush2.msra.mxu0 0.0
    %4664 = vmatprep.subr.mxu0 0.0
    %4665 = vmatpush2.msra.mxu0 0.0
    %4666 = vmatprep.mubr.f32.mxu0 0.0
    %4667 = vmatmul.mubr.f32.gmra.mxu0 %v4579
    %v4668 = vpop.f32.mrf.mxu0
    %v4669 = vadd.f32 %v4541, %v4668
    %v4670 = vpop.f32.mrf.mxu0
    %4671 = vmatprep.mubr.f32.mxu0 0.0
    %4672 = vmatmul.mubr.f32.gmra.mxu0 %v4582
    %v4673 = vpop.f32.mrf.mxu0
    %v4674 = vadd.f32 %v4546, %v4673
    %v4675 = vpop.f32.mrf.mxu0
    %4676 = vmatprep.mubr.f32.mxu0 0.0
    %4677 = vmatmul.mubr.f32.gmra.mxu0 %v4585
    %v4678 = vpop.f32.mrf.mxu0
    %v4679 = vadd.f32 %v4551, %v4678
    %v4680 = vpop.f32.mrf.mxu0
    %4681 = vmatprep.mubr.f32.mxu0 0.0
    %4682 = vmatmul.mubr.f32.gmra.mxu0 %v4588
    %v4683 = vpop.f32.mrf.mxu0
    %v4684 = vadd.f32 %v4556, %v4683
    %v4685 = vpop.f32.mrf.mxu0
    %4686 = vmatprep.mubr.f32.mxu0 0.0
    %4687 = vmatmul.mubr.f32.gmra.mxu0 %v4591
    %v4688 = vpop.f32.mrf.mxu0
    %v4689 = vadd.f32 %v4561, %v4688
    %v4690 = vpop.f32.mrf.mxu0
    %4691 = vmatprep.mubr.f32.mxu0 0.0
    %4692 = vmatmul.mubr.f32.gmra.mxu0 %v4594
    %v4693 = vpop.f32.mrf.mxu0
    %v4694 = vadd.f32 %v4566, %v4693
    %v4695 = vpop.f32.mrf.mxu0
    %4696 = vmatprep.mubr.f32.mxu0 0.0
    %4697 = vmatmul.mubr.f32.gmra.mxu0 %v4597
    %v4698 = vpop.f32.mrf.mxu0
    %v4699 = vadd.f32 %v4571, %v4698
    %v4700 = vpop.f32.mrf.mxu0
    %4701 = vmatprep.mubr.f32.mxu0 0.0
    %4702 = vmatmul.mubr.f32.gmra.mxu0 %v4600
    %v4703 = vpop.f32.mrf.mxu0
    %v4704 = vadd.f32 %v4576, %v4703
    %v4705 = vpop.f32.mrf.mxu0
    %4706 = vdwg.mxu0
    %v4707 = vmax.f32 %v4669, 0.0
    %v4708 = vmax.f32 %v4674, 0.0
    %v4709 = vmax.f32 %v4679, 0.0
    %v4710 = vmax.f32 %v4684, 0.0
    %v4711 = vmax.f32 %v4689, 0.0
    %v4712 = vmax.f32 %v4694, 0.0
    %v4713 = vmax.f32 %v4699, 0.0
    %v4714 = vmax.f32 %v4704, 0.0
    %s4715 = scalar_lea.vmem %s14, 32
    %v4716 = vld [vmem:[%s4715] sm:$0xff]
    %v4717 = vld [vmem:[%s4715 + $0x8] sm:$0xff]
    %v4718 = vld [vmem:[%s4715 + $0x10] sm:$0xff]
    %v4719 = vld [vmem:[%s4715 + $0x18] sm:$0xff]
    %s4720 = scalar_lea.vmem %s15, 32
    %v4721 = vld [vmem:[%s4720] sm:$0xff]
    %v4722 = vld [vmem:[%s4720 + $0x8] sm:$0xff]
    %v4723 = vld [vmem:[%s4720 + $0x10] sm:$0xff]
    %v4724 = vld [vmem:[%s4720 + $0x18] sm:$0xff]
    %4726 = vset.pattern.permute.xlu0 0
    %4727 = vperm.xlu0 %4726, %v4721
    %v4728 = vpop.permute.xlu0 %4727
    %4731 = vset.pattern.permute.xlu0 0
    %4732 = vperm.xlu0 %4731, %v4722
    %v4733 = vpop.permute.xlu0 %4732
    %4736 = vset.pattern.permute.xlu0 0
    %4737 = vperm.xlu0 %4736, %v4723
    %v4738 = vpop.permute.xlu0 %4737
    %4741 = vset.pattern.permute.xlu0 0
    %4742 = vperm.xlu0 %4741, %v4724
    %v4743 = vpop.permute.xlu0 %4742
    %v4746 = vsel %vm3046, %v4716, 0
    %v4749 = vsel %vm3046, %v4717, 0
    %v4752 = vsel %vm3046, %v4718, 0
    %v4755 = vsel %vm3046, %v4719, 0
    %4757 = vmatprep.subr.mxu0 0.0
    %4758 = vmatpush1.msra.mxu0 0.0
    %4759 = vmatprep.subr.mxu0 0.0
    %4760 = vmatpush1.msra.mxu0 0.0
    %4761 = vmatprep.subr.mxu0 0.0
    %4762 = vmatpush1.msra.mxu0 0.0
    %4763 = vmatprep.subr.mxu0 0.0
    %4764 = vmatpush1.msra.mxu0 0.0
    %4765 = vmatprep.subr.mxu0 0.0
    %4766 = vmatpush1.msra.mxu0 0.0
    %4767 = vmatprep.subr.mxu0 0.0
    %4768 = vmatpush1.msra.mxu0 0.0
    %4769 = vmatprep.subr.mxu0 0.0
    %4770 = vmatpush1.msra.mxu0 0.0
    %4771 = vmatprep.subr.mxu0 0.0
    %4772 = vmatpush1.msra.mxu0 0.0
    %4773 = vmatprep.subr.mxu0 0.0
    %4774 = vmatpush1.msra.mxu0 %v4714
    %4775 = vmatprep.subr.mxu0 0.0
    %4776 = vmatpush1.msra.mxu0 %v4713
    %4777 = vmatprep.subr.mxu0 0.0
    %4778 = vmatpush1.msra.mxu0 %v4712
    %4779 = vmatprep.subr.mxu0 0.0
    %4780 = vmatpush1.msra.mxu0 %v4711
    %4781 = vmatprep.subr.mxu0 0.0
    %4782 = vmatpush1.msra.mxu0 %v4710
    %4783 = vmatprep.subr.mxu0 0.0
    %4784 = vmatpush1.msra.mxu0 %v4709
    %4785 = vmatprep.subr.mxu0 0.0
    %4786 = vmatpush1.msra.mxu0 %v4708
    %4787 = vmatprep.subr.mxu0 0.0
    %4788 = vmatpush1.msra.mxu0 %v4707
    %4789 = vmatprep.subr.mxu0 0.0
    %4790 = vmatpush2.msra.mxu0 0.0
    %4791 = vmatprep.subr.mxu0 0.0
    %4792 = vmatpush2.msra.mxu0 0.0
    %4793 = vmatprep.subr.mxu0 0.0
    %4794 = vmatpush2.msra.mxu0 0.0
    %4795 = vmatprep.subr.mxu0 0.0
    %4796 = vmatpush2.msra.mxu0 0.0
    %4797 = vmatprep.subr.mxu0 0.0
    %4798 = vmatpush2.msra.mxu0 0.0
    %4799 = vmatprep.subr.mxu0 0.0
    %4800 = vmatpush2.msra.mxu0 0.0
    %4801 = vmatprep.subr.mxu0 0.0
    %4802 = vmatpush2.msra.mxu0 0.0
    %4803 = vmatprep.subr.mxu0 0.0
    %4804 = vmatpush2.msra.mxu0 0.0
    %4805 = vmatprep.subr.mxu0 0.0
    %4806 = vmatpush2.msra.mxu0 0.0
    %4807 = vmatprep.subr.mxu0 0.0
    %4808 = vmatpush2.msra.mxu0 0.0
    %4809 = vmatprep.subr.mxu0 0.0
    %4810 = vmatpush2.msra.mxu0 0.0
    %4811 = vmatprep.subr.mxu0 0.0
    %4812 = vmatpush2.msra.mxu0 0.0
    %4813 = vmatprep.subr.mxu0 0.0
    %4814 = vmatpush2.msra.mxu0 0.0
    %4815 = vmatprep.subr.mxu0 0.0
    %4816 = vmatpush2.msra.mxu0 0.0
    %4817 = vmatprep.subr.mxu0 0.0
    %4818 = vmatpush2.msra.mxu0 0.0
    %4819 = vmatprep.subr.mxu0 0.0
    %4820 = vmatpush2.msra.mxu0 0.0
    %4821 = vmatprep.mubr.f32.mxu0 0.0
    %4822 = vmatmul.mubr.f32.gmra.mxu0 %v4746
    %v4823 = vpop.f32.mrf.mxu0
    %v4824 = vadd.f32 %v4728, %v4823
    %v4825 = vpop.f32.mrf.mxu0
    %4826 = vmatprep.mubr.f32.mxu0 0.0
    %4827 = vmatmul.mubr.f32.gmra.mxu0 %v4749
    %v4828 = vpop.f32.mrf.mxu0
    %v4829 = vadd.f32 %v4733, %v4828
    %v4830 = vpop.f32.mrf.mxu0
    %4831 = vmatprep.mubr.f32.mxu0 0.0
    %4832 = vmatmul.mubr.f32.gmra.mxu0 %v4752
    %v4833 = vpop.f32.mrf.mxu0
    %v4834 = vadd.f32 %v4738, %v4833
    %v4835 = vpop.f32.mrf.mxu0
    %4836 = vmatprep.mubr.f32.mxu0 0.0
    %4837 = vmatmul.mubr.f32.gmra.mxu0 %v4755
    %v4838 = vpop.f32.mrf.mxu0
    %v4839 = vadd.f32 %v4743, %v4838
    %v4840 = vpop.f32.mrf.mxu0
    %4841 = vdwg.mxu0
    %v4842 = vadd.f32 %v4516, %v4824
    %v4843 = vadd.f32 %v4517, %v4829
    %v4844 = vadd.f32 %v4518, %v4834
    %v4845 = vadd.f32 %v4519, %v4839
    %s4846 = scalar_lea.vmem %s16, 32
    %v4847 = vld [vmem:[%s4846] sm:$0xff]
    %v4848 = vld [vmem:[%s4846 + $0x8] sm:$0xff]
    %v4849 = vld [vmem:[%s4846 + $0x10] sm:$0xff]
    %v4850 = vld [vmem:[%s4846 + $0x18] sm:$0xff]
    %s4851 = scalar_lea.vmem %s17, 32
    %v4852 = vld [vmem:[%s4851] sm:$0xff]
    %v4853 = vld [vmem:[%s4851 + $0x8] sm:$0xff]
    %v4854 = vld [vmem:[%s4851 + $0x10] sm:$0xff]
    %v4855 = vld [vmem:[%s4851 + $0x18] sm:$0xff]
    %v4856 = vadd.f32 %v4842, %v4843
    %v4857 = vadd.f32 %v4856, %v4844
    %v4858 = vadd.f32 %v4857, %v4845
    %v4859 = vrot.slane %v4858, 4
    %v4860 = vadd.f32 %v4858, %v4859
    %v4861 = vrot.slane %v4860, 2
    %v4862 = vadd.f32 %v4860, %v4861
    %v4863 = vrot.slane %v4862, 1
    %v4864 = vadd.f32 %v4862, %v4863
    %v4865 = vmul.f32 %v4864, %v2751
    %v4866 = vsub.f32 %v4842, %v4865
    %v4867 = vsub.f32 %v4843, %v4865
    %v4868 = vsub.f32 %v4844, %v4865
    %v4869 = vsub.f32 %v4845, %v4865
    %v4870 = vmul.f32 %v4866, %v4866
    %v4871 = vmul.f32 %v4867, %v4867
    %v4872 = vmul.f32 %v4868, %v4868
    %v4873 = vmul.f32 %v4869, %v4869
    %v4874 = vadd.f32 %v4870, %v4871
    %v4875 = vadd.f32 %v4874, %v4872
    %v4876 = vadd.f32 %v4875, %v4873
    %v4877 = vrot.slane %v4876, 4
    %v4878 = vadd.f32 %v4876, %v4877
    %v4879 = vrot.slane %v4878, 2
    %v4880 = vadd.f32 %v4878, %v4879
    %v4881 = vrot.slane %v4880, 1
    %v4882 = vadd.f32 %v4880, %v4881
    %v4883 = vmul.f32 %v4882, %v2751
    %v4884 = vadd.f32 %v4883, 1e-05
    %v4885 = vrsqrt.pop %v4884
    %v4886 = vmul.f32 %v4866, %v4885
    %v4887 = vmul.f32 %v4867, %v4885
    %v4888 = vmul.f32 %v4868, %v4885
    %v4889 = vmul.f32 %v4869, %v4885
    %4891 = vset.pattern.permute.xlu0 0
    %4892 = vperm.xlu0 %4891, %v4847
    %v4893 = vpop.permute.xlu0 %4892
    %4896 = vset.pattern.permute.xlu0 0
    %4897 = vperm.xlu0 %4896, %v4848
    %v4898 = vpop.permute.xlu0 %4897
    %4901 = vset.pattern.permute.xlu0 0
    %4902 = vperm.xlu0 %4901, %v4849
    %v4903 = vpop.permute.xlu0 %4902
    %4906 = vset.pattern.permute.xlu0 0
    %4907 = vperm.xlu0 %4906, %v4850
    %v4908 = vpop.permute.xlu0 %4907
    %v4910 = vmul.f32 %v4886, %v4893
    %v4911 = vmul.f32 %v4887, %v4898
    %v4912 = vmul.f32 %v4888, %v4903
    %v4913 = vmul.f32 %v4889, %v4908
    %4915 = vset.pattern.permute.xlu0 0
    %4916 = vperm.xlu0 %4915, %v4852
    %v4917 = vpop.permute.xlu0 %4916
    %4920 = vset.pattern.permute.xlu0 0
    %4921 = vperm.xlu0 %4920, %v4853
    %v4922 = vpop.permute.xlu0 %4921
    %4925 = vset.pattern.permute.xlu0 0
    %4926 = vperm.xlu0 %4925, %v4854
    %v4927 = vpop.permute.xlu0 %4926
    %4930 = vset.pattern.permute.xlu0 0
    %4931 = vperm.xlu0 %4930, %v4855
    %v4932 = vpop.permute.xlu0 %4931
    %v4934 = vadd.f32 %v4910, %v4917
    %v4935 = vadd.f32 %v4911, %v4922
    %v4936 = vadd.f32 %v4912, %v4927
    %v4937 = vadd.f32 %v4913, %v4932
    %4938 = vst [vmem:[#allocation2] sm:$0xff] %v4934
    %4939 = vst [vmem:[#allocation2 + $0x8] sm:$0xff] %v4935
    %4940 = vst [vmem:[#allocation2 + $0x10] sm:$0xff] %v4936
    %4941 = vst [vmem:[#allocation2 + $0x18] sm:$0xff] %v4937
    // Predicated region
    $region74: #{tpu_custom_call.1} parent=1 // pred_check
      _
    $region75: #{tpu_custom_call.1} parent=1 // pred_check_branch
      %4943 = sbr.rel (0) target = $region77
    $region76: #{tpu_custom_call.1} parent=1 // pred_region
      %s4945 = ssub.s32 512, 512
      %4946 = vsyncadd [#allocation3], %s4945
      %s4947 = sshll.u32 [#allocation2], 4
      %s4948 = int_to_ptr.vmem [resolvable:$true] %s4947
      %4953 = dma.vmem_to_hbm [thread:$0]  %s4948, 512, %s18, [#allocation3], 128, 128, 8
    $region77: #{tpu_custom_call.1} parent=1 // pred_fallthru
      _
    // Predicated region
    $region78: #{tpu_custom_call.1} parent=1 // pred_check
      _
    $region79: #{tpu_custom_call.1} parent=1 // pred_check_branch
      %4955 = sbr.rel (0) target = $region81
    $region80: #{tpu_custom_call.1} parent=1 // pred_region
      %4956 = dma.done [#allocation3], 512
    $region81: #{tpu_custom_call.1} parent=1 // pred_fallthru
      _
    %4957 = vsyncpa [#allocation3], 1

</llo_original>
